<compile_context>
chip_gen: v7x
topology: tpu7x:2x2x1
jax: 0.10.0
libtpu: 0.0.40
codegen_flags: <defaults>
</compile_context>

<pallas_src>
import math

import jax
import jax.numpy as jnp
from jax import lax
from jax.experimental import pallas as pl
from jax.experimental.pallas import tpu as pltpu

# ----------------------------- configuration --------------------------------
T = 8            # sequence length
B = 2            # batch size
VOCAB = 16       # input_dim (num_embeddings / categorical classes)
E = 8            # embedding_dim
L = 4            # latent_features
H_ENC = 32       # encoder_hidden_size
H_DEC = 32       # decoder_hidden_size
DEPTH = 2        # flow_depth
HF = 16          # flow_hidden_features
C = 4            # flow_context_features

LOG_2PI = math.log(2.0 * math.pi)
ENC_OUT = 2 * L + C

_VMEM = pltpu.MemorySpace.VMEM


def _vmem_specs(n):
    return [pl.BlockSpec(memory_space=_VMEM) for _ in range(n)]


# ------------------------------- fused kernel --------------------------------
def fused_vrae_kernel(ids_ref, emb_tbl_ref,
                      enc_w_ih_ref, enc_w_hh_ref, enc_b_ref,
                      enc_w_out_ref, enc_b_out_ref,
                      eps_ref,
                      mWz_ref, mWh_ref, mb1_ref, mWo_ref, mbo_ref,
                      sWz_ref, sWh_ref, sb1_ref, sWo_ref, sbo_ref,
                      dec_w_ih_ref, dec_w_hh_ref, dec_b_ref,
                      dec_w_out_ref, dec_b_out_ref,
                      logits_ref, z_ref, lz_ref):
    f32 = jnp.float32

    # ---- embedding lookup: one-hot matmul, fully on-chip (no XLA gather) ----
    ids = ids_ref[...]                                                 # (T*B, 1) int32
    onehot = (ids == lax.broadcasted_iota(jnp.int32, (T * B, VOCAB), 1)).astype(f32)
    emb = jnp.dot(onehot, emb_tbl_ref[...], preferred_element_type=f32)  # (T*B, E)

    # ---- encoder LSTM (gate layout [i | f | o | g]) -------------------------
    He = H_ENC
    # loop-invariant input projection, batched over all T steps (hoisted)
    xproj = (jnp.dot(emb, enc_w_ih_ref[...], preferred_element_type=f32)
             + enc_b_ref[...])                                          # (T*B, 4*He)
    w_hh_e = enc_w_hh_ref[...]
    h = jnp.zeros((B, He), f32)
    c = jnp.zeros((B, He), f32)
    for t in range(T):                                   # fully unrolled (T static)
        gates = xproj[t * B:(t + 1) * B, :] + jnp.dot(h, w_hh_e,
                                                      preferred_element_type=f32)
        sig = jax.nn.sigmoid(gates[:, :3 * He])          # one EUP slab for i, f, o
        g = jnp.tanh(gates[:, 3 * He:])
        i_g, f_g, o_g = sig[:, :He], sig[:, He:2 * He], sig[:, 2 * He:]
        c = f_g * c + i_g * g
        h = o_g * jnp.tanh(c)
    hx = (jnp.dot(h, enc_w_out_ref[...], preferred_element_type=f32)
          + enc_b_out_ref[...])                                         # (B, 2L + C)

    mu = hx[:, :L]
    log_sigma = hx[:, L:2 * L]
    hc = hx[:, 2 * L:]                                                  # context

    # ---- IAF: reparameterization + flow steps -------------------------------
    eps = eps_ref[...]
    z = jnp.exp(log_sigma) * eps + mu
    l = -jnp.sum(log_sigma + 0.5 * eps * eps + 0.5 * LOG_2PI)

    def arnn(z_in, Wz, Wh, b1, Wo, bo):
        hid = jnp.maximum(
            jnp.dot(z_in, Wz, preferred_element_type=f32)
            + jnp.dot(hc, Wh, preferred_element_type=f32) + b1, 0.0)
        return jnp.dot(hid, Wo, preferred_element_type=f32) + bo

    for d in range(DEPTH):                                # unrolled (DEPTH static)
        m = arnn(z, mWz_ref[d], mWh_ref[d], mb1_ref[d], mWo_ref[d], mbo_ref[d])
        s = arnn(z, sWz_ref[d], sWh_ref[d], sb1_ref[d], sWo_ref[d], sbo_ref[d]) + 1.5
        sig = jax.nn.sigmoid(s)
        z = sig * z + (1.0 - sig) * m
        # keep the original module's log(sigma + 1e-6) semantics
        l = l - jnp.sum(jnp.log(sig + 1e-6))

    z_ref[...] = z
    lz_ref[...] = jnp.zeros((1, 1), f32) + l

    # ---- decoder LSTM (z fed at every step, gate layout [i | f | o | g]) ----
    Hd = H_DEC
    # z is time-invariant -> input projection hoisted out of the recurrence
    zproj = (jnp.dot(z, dec_w_ih_ref[...], preferred_element_type=f32)
             + dec_b_ref[...])                                          # (B, 4*Hd)
    w_hh_d = dec_w_hh_ref[...]
    h = jnp.zeros((B, Hd), f32)
    c = jnp.zeros((B, Hd), f32)
    hs = []
    for t in range(T):                                   # fully unrolled (T static)
        gates = zproj + jnp.dot(h, w_hh_d, preferred_element_type=f32)
        sig = jax.nn.sigmoid(gates[:, :3 * Hd])
        g = jnp.tanh(gates[:, 3 * Hd:])
        i_g, f_g, o_g = sig[:, :Hd], sig[:, Hd:2 * Hd], sig[:, 2 * Hd:]
        c = f_g * c + i_g * g
        h = o_g * jnp.tanh(c)
        hs.append(h)
    h_all = jnp.concatenate(hs, axis=0)                                 # (T*B, Hd)
    # single batched output projection + one dense store (off the serial chain)
    logits_ref[...] = (jnp.dot(h_all, dec_w_out_ref[...],
                               preferred_element_type=f32)
                       + dec_b_out_ref[...])                            # (T*B, VOCAB)


# ------------------------------ call wrapper ---------------------------------
def fused_call(x_ids, eps, p):
    ids_flat = x_ids.reshape(T * B, 1).astype(jnp.int32)
    logits_flat, z, lz = pl.pallas_call(
        fused_vrae_kernel,
        out_shape=(jax.ShapeDtypeStruct((T * B, VOCAB), jnp.float32),
                   jax.ShapeDtypeStruct((B, L), jnp.float32),
                   jax.ShapeDtypeStruct((1, 1), jnp.float32)),
        in_specs=_vmem_specs(23),
        out_specs=(pl.BlockSpec(memory_space=_VMEM),
                   pl.BlockSpec(memory_space=_VMEM),
                   pl.BlockSpec(memory_space=_VMEM)),
        compiler_params=pltpu.CompilerParams(vmem_limit_bytes=32 * 1024 * 1024),
    )(ids_flat, p['emb_table'],
      p['enc_w_ih'], p['enc_w_hh'], p['enc_b'], p['enc_w_out'], p['enc_b_out'],
      eps,
      p['mWz'], p['mWh'], p['mb1'], p['mWo'], p['mbo'],
      p['sWz'], p['sWh'], p['sb1'], p['sWo'], p['sbo'],
      p['dec_w_ih'], p['dec_w_hh'], p['dec_b'], p['dec_w_out'], p['dec_b_out'])
    return logits_flat.reshape(T, B, VOCAB), z, lz[0, 0]


# ------------------------------ parameter init -------------------------------
def _made_masks(n_in, n_hidden):
    in_deg = jnp.arange(1, n_in + 1)
    hid_deg = (jnp.arange(n_hidden) % max(1, n_in - 1)) + 1
    out_deg = jnp.arange(1, n_in + 1)
    mask1 = (hid_deg[None, :] >= in_deg[:, None]).astype(jnp.float32)   # (n_in, H)
    mask2 = (out_deg[None, :] > hid_deg[:, None]).astype(jnp.float32)   # (H, n_in)
    return mask1, mask2


def init_params(key):
    ks = jax.random.split(key, 16)

    def w(k, shape, scale=0.1):
        return (scale * jax.random.normal(k, shape)).astype(jnp.float32)

    p = {}
    p['emb_table'] = w(ks[0], (VOCAB, E), 1.0)

    # LSTM weights use gate-column layout [i | f | o | g] (kernel convention).
    p['enc_w_ih'] = w(ks[1], (E, 4 * H_ENC))
    p['enc_w_hh'] = w(ks[2], (H_ENC, 4 * H_ENC))
    p['enc_b'] = jnp.zeros((1, 4 * H_ENC), jnp.float32)
    p['enc_w_out'] = w(ks[3], (H_ENC, ENC_OUT))
    p['enc_b_out'] = jnp.zeros((1, ENC_OUT), jnp.float32)

    mask1, mask2 = _made_masks(L, HF)

    def arnn_params(k):
        k1, k2, k3 = jax.random.split(k, 3)
        Wz = w(k1, (L, HF)) * mask1            # masked input->hidden
        Wh = w(k2, (C, HF))                    # context->hidden
        b1 = jnp.zeros((1, HF), jnp.float32)
        Wo = w(k3, (HF, L)) * mask2            # masked hidden->output
        bo = jnp.zeros((1, L), jnp.float32)
        return Wz, Wh, b1, Wo, bo

    m_list = [arnn_params(ks[4 + d]) for d in range(DEPTH)]
    s_list = [arnn_params(ks[6 + d]) for d in range(DEPTH)]
    stack = lambda lst, i: jnp.stack([t[i] for t in lst])
    p['mWz'], p['mWh'], p['mb1'], p['mWo'], p['mbo'] = [stack(m_list, i) for i in range(5)]
    p['sWz'], p['sWh'], p['sb1'], p['sWo'], p['sbo'] = [stack(s_list, i) for i in range(5)]

    p['dec_w_ih'] = w(ks[8], (L, 4 * H_DEC))
    p['dec_w_hh'] = w(ks[9], (H_DEC, 4 * H_DEC))
    p['dec_b'] = jnp.zeros((1, 4 * H_DEC), jnp.float32)
    p['dec_w_out'] = w(ks[10], (H_DEC, VOCAB))
    p['dec_b_out'] = jnp.zeros((1, VOCAB), jnp.float32)
    return p


# -------------------------------- forward ------------------------------------
@jax.jit
def vrae_iaf_with_embedder_forward(params, x_ids, eps):
    """x_ids: (T, B) int32 token ids; eps: (B, L) standard-normal noise."""
    # single fused kernel: embedding lookup + encoder + IAF + decoder
    px_logits, z, lz = fused_call(x_ids, eps, params)

    # prior p(z) = N(0, I)  (ReparameterizedDiagonalGaussian params)
    prior_mu = jnp.zeros((B, L), jnp.float32)
    prior_log_sigma = jnp.zeros((B, L), jnp.float32)

    return {'px': px_logits, 'pz': (prior_mu, prior_log_sigma), 'z': z, 'lz': lz}


# ---------------------------------- main --------------------------------------
if __name__ == "__main__":
    key = jax.random.PRNGKey(0)
    k_params, k_x, k_eps = jax.random.split(key, 3)

    params = init_params(k_params)
    x_ids = jax.random.randint(k_x, (T, B), 0, VOCAB, dtype=jnp.int32)
    eps = jax.random.normal(k_eps, (B, L), dtype=jnp.float32)

    out = vrae_iaf_with_embedder_forward(params, x_ids, eps)
    out = jax.block_until_ready(out)

    assert out['px'].shape == (T, B, VOCAB)
    assert out['z'].shape == (B, L)
    assert out['lz'].shape == ()
    assert bool(jnp.all(jnp.isfinite(out['px'])))
    print("KERNEL_OK")
</pallas_src>

<mosaic_0001>
module attributes {stable_mosaic.version = 11 : i64} {
  func.func @fused_vrae_kernel(%arg0: memref<16x1xi32, #tpu.memory_space<vmem>>, %arg1: memref<16x8xf32, #tpu.memory_space<vmem>>, %arg2: memref<8x128xf32, #tpu.memory_space<vmem>>, %arg3: memref<32x128xf32, #tpu.memory_space<vmem>>, %arg4: memref<1x128xf32, #tpu.memory_space<vmem>>, %arg5: memref<32x12xf32, #tpu.memory_space<vmem>>, %arg6: memref<1x12xf32, #tpu.memory_space<vmem>>, %arg7: memref<2x4xf32, #tpu.memory_space<vmem>>, %arg8: memref<2x4x16xf32, #tpu.memory_space<vmem>>, %arg9: memref<2x4x16xf32, #tpu.memory_space<vmem>>, %arg10: memref<2x1x16xf32, #tpu.memory_space<vmem>>, %arg11: memref<2x16x4xf32, #tpu.memory_space<vmem>>, %arg12: memref<2x1x4xf32, #tpu.memory_space<vmem>>, %arg13: memref<2x4x16xf32, #tpu.memory_space<vmem>>, %arg14: memref<2x4x16xf32, #tpu.memory_space<vmem>>, %arg15: memref<2x1x16xf32, #tpu.memory_space<vmem>>, %arg16: memref<2x16x4xf32, #tpu.memory_space<vmem>>, %arg17: memref<2x1x4xf32, #tpu.memory_space<vmem>>, %arg18: memref<4x128xf32, #tpu.memory_space<vmem>>, %arg19: memref<32x128xf32, #tpu.memory_space<vmem>>, %arg20: memref<1x128xf32, #tpu.memory_space<vmem>>, %arg21: memref<32x16xf32, #tpu.memory_space<vmem>>, %arg22: memref<1x16xf32, #tpu.memory_space<vmem>>, %arg23: memref<16x16xf32, #tpu.memory_space<vmem>>, %arg24: memref<2x4xf32, #tpu.memory_space<vmem>>, %arg25: memref<1x1xf32, #tpu.memory_space<vmem>>) attributes {dimension_semantics = [], scalar_prefetch = 0 : i64, scratch_operands = 0 : i64, tpu.core_type = #tpu.core_type<tc>} {
    %c0 = arith.constant 0 : index
    %c0_0 = arith.constant 0 : index
    %0 = vector.load %arg0[%c0, %c0_0] : memref<16x1xi32, #tpu.memory_space<vmem>>, vector<16x1xi32>
    %1 = tpu.iota {dimensions = array<i32: 1>} : vector<16x16xi32>
    %2 = vector.broadcast %0 : vector<16x1xi32> to vector<16x16xi32>
    %3 = arith.cmpi eq, %2, %1 : vector<16x16xi32>
    %4 = arith.extui %3 : vector<16x16xi1> to vector<16x16xi32>
    %5 = arith.sitofp %4 : vector<16x16xi32> to vector<16x16xf32>
    %c0_1 = arith.constant 0 : index
    %c0_2 = arith.constant 0 : index
    %6 = vector.load %arg1[%c0_1, %c0_2] : memref<16x8xf32, #tpu.memory_space<vmem>>, vector<16x8xf32>
    %cst = arith.constant dense<0.000000e+00> : vector<16x8xf32>
    %7 = tpu.matmul %5, %6, %cst {dimension_numbers = #tpu.dot_dimension_numbers<[1], [0], [0], [1], [0, 0, 1, 1], [], []>} : vector<16x16xf32>, vector<16x8xf32>, vector<16x8xf32> -> vector<16x8xf32>
    %c0_3 = arith.constant 0 : index
    %c0_4 = arith.constant 0 : index
    %8 = vector.load %arg2[%c0_3, %c0_4] : memref<8x128xf32, #tpu.memory_space<vmem>>, vector<8x128xf32>
    %cst_5 = arith.constant dense<0.000000e+00> : vector<16x128xf32>
    %9 = tpu.matmul %7, %8, %cst_5 {dimension_numbers = #tpu.dot_dimension_numbers<[1], [0], [0], [1], [0, 0, 1, 1], [], []>} : vector<16x8xf32>, vector<8x128xf32>, vector<16x128xf32> -> vector<16x128xf32>
    %c0_6 = arith.constant 0 : index
    %c0_7 = arith.constant 0 : index
    %10 = vector.load %arg4[%c0_6, %c0_7] : memref<1x128xf32, #tpu.memory_space<vmem>>, vector<1x128xf32>
    %11 = vector.broadcast %10 : vector<1x128xf32> to vector<16x128xf32>
    %12 = arith.addf %9, %11 : vector<16x128xf32>
    %c0_8 = arith.constant 0 : index
    %c0_9 = arith.constant 0 : index
    %13 = vector.load %arg3[%c0_8, %c0_9] : memref<32x128xf32, #tpu.memory_space<vmem>>, vector<32x128xf32>
    %cst_10 = arith.constant 0.000000e+00 : f32
    %14 = vector.broadcast %cst_10 : f32 to vector<2x32xf32>
    %cst_11 = arith.constant 0.000000e+00 : f32
    %15 = vector.broadcast %cst_11 : f32 to vector<2x32xf32>
    %16 = vector.extract_strided_slice %12 {offsets = [0, 0], sizes = [2, 128], strides = [1, 1]} : vector<16x128xf32> to vector<2x128xf32>
    %cst_12 = arith.constant dense<0.000000e+00> : vector<2x128xf32>
    %17 = tpu.matmul %14, %13, %cst_12 {dimension_numbers = #tpu.dot_dimension_numbers<[1], [0], [0], [1], [0, 0, 1, 1], [], []>} : vector<2x32xf32>, vector<32x128xf32>, vector<2x128xf32> -> vector<2x128xf32>
    %18 = arith.addf %16, %17 : vector<2x128xf32>
    %19 = vector.extract_strided_slice %18 {offsets = [0, 0], sizes = [2, 96], strides = [1, 1]} : vector<2x128xf32> to vector<2x96xf32>
    %20 = arith.negf %19 : vector<2x96xf32>
    %21 = math.exp %20 : vector<2x96xf32>
    %cst_13 = arith.constant 1.000000e+00 : f32
    %22 = vector.broadcast %cst_13 : f32 to vector<2x96xf32>
    %23 = arith.addf %22, %21 : vector<2x96xf32>
    %24 = arith.divf %22, %23 : vector<2x96xf32>
    %25 = vector.extract_strided_slice %18 {offsets = [0, 96], sizes = [2, 32], strides = [1, 1]} : vector<2x128xf32> to vector<2x32xf32>
    %26 = math.tanh %25 : vector<2x32xf32>
    %27 = vector.extract_strided_slice %24 {offsets = [0, 0], sizes = [2, 32], strides = [1, 1]} : vector<2x96xf32> to vector<2x32xf32>
    %28 = vector.extract_strided_slice %24 {offsets = [0, 32], sizes = [2, 32], strides = [1, 1]} : vector<2x96xf32> to vector<2x32xf32>
    %29 = vector.extract_strided_slice %24 {offsets = [0, 64], sizes = [2, 32], strides = [1, 1]} : vector<2x96xf32> to vector<2x32xf32>
    %30 = arith.mulf %28, %15 : vector<2x32xf32>
    %31 = arith.mulf %27, %26 : vector<2x32xf32>
    %32 = arith.addf %30, %31 : vector<2x32xf32>
    %33 = math.tanh %32 : vector<2x32xf32>
    %34 = arith.mulf %29, %33 : vector<2x32xf32>
    %35 = vector.extract_strided_slice %12 {offsets = [2, 0], sizes = [2, 128], strides = [1, 1]} : vector<16x128xf32> to vector<2x128xf32>
    %cst_14 = arith.constant dense<0.000000e+00> : vector<2x128xf32>
    %36 = tpu.matmul %34, %13, %cst_14 {dimension_numbers = #tpu.dot_dimension_numbers<[1], [0], [0], [1], [0, 0, 1, 1], [], []>} : vector<2x32xf32>, vector<32x128xf32>, vector<2x128xf32> -> vector<2x128xf32>
    %37 = arith.addf %35, %36 : vector<2x128xf32>
    %38 = vector.extract_strided_slice %37 {offsets = [0, 0], sizes = [2, 96], strides = [1, 1]} : vector<2x128xf32> to vector<2x96xf32>
    %39 = arith.negf %38 : vector<2x96xf32>
    %40 = math.exp %39 : vector<2x96xf32>
    %cst_15 = arith.constant 1.000000e+00 : f32
    %41 = vector.broadcast %cst_15 : f32 to vector<2x96xf32>
    %42 = arith.addf %41, %40 : vector<2x96xf32>
    %43 = arith.divf %41, %42 : vector<2x96xf32>
    %44 = vector.extract_strided_slice %37 {offsets = [0, 96], sizes = [2, 32], strides = [1, 1]} : vector<2x128xf32> to vector<2x32xf32>
    %45 = math.tanh %44 : vector<2x32xf32>
    %46 = vector.extract_strided_slice %43 {offsets = [0, 0], sizes = [2, 32], strides = [1, 1]} : vector<2x96xf32> to vector<2x32xf32>
    %47 = vector.extract_strided_slice %43 {offsets = [0, 32], sizes = [2, 32], strides = [1, 1]} : vector<2x96xf32> to vector<2x32xf32>
    %48 = vector.extract_strided_slice %43 {offsets = [0, 64], sizes = [2, 32], strides = [1, 1]} : vector<2x96xf32> to vector<2x32xf32>
    %49 = arith.mulf %47, %32 : vector<2x32xf32>
    %50 = arith.mulf %46, %45 : vector<2x32xf32>
    %51 = arith.addf %49, %50 : vector<2x32xf32>
    %52 = math.tanh %51 : vector<2x32xf32>
    %53 = arith.mulf %48, %52 : vector<2x32xf32>
    %54 = vector.extract_strided_slice %12 {offsets = [4, 0], sizes = [2, 128], strides = [1, 1]} : vector<16x128xf32> to vector<2x128xf32>
    %cst_16 = arith.constant dense<0.000000e+00> : vector<2x128xf32>
    %55 = tpu.matmul %53, %13, %cst_16 {dimension_numbers = #tpu.dot_dimension_numbers<[1], [0], [0], [1], [0, 0, 1, 1], [], []>} : vector<2x32xf32>, vector<32x128xf32>, vector<2x128xf32> -> vector<2x128xf32>
    %56 = arith.addf %54, %55 : vector<2x128xf32>
    %57 = vector.extract_strided_slice %56 {offsets = [0, 0], sizes = [2, 96], strides = [1, 1]} : vector<2x128xf32> to vector<2x96xf32>
    %58 = arith.negf %57 : vector<2x96xf32>
    %59 = math.exp %58 : vector<2x96xf32>
    %cst_17 = arith.constant 1.000000e+00 : f32
    %60 = vector.broadcast %cst_17 : f32 to vector<2x96xf32>
    %61 = arith.addf %60, %59 : vector<2x96xf32>
    %62 = arith.divf %60, %61 : vector<2x96xf32>
    %63 = vector.extract_strided_slice %56 {offsets = [0, 96], sizes = [2, 32], strides = [1, 1]} : vector<2x128xf32> to vector<2x32xf32>
    %64 = math.tanh %63 : vector<2x32xf32>
    %65 = vector.extract_strided_slice %62 {offsets = [0, 0], sizes = [2, 32], strides = [1, 1]} : vector<2x96xf32> to vector<2x32xf32>
    %66 = vector.extract_strided_slice %62 {offsets = [0, 32], sizes = [2, 32], strides = [1, 1]} : vector<2x96xf32> to vector<2x32xf32>
    %67 = vector.extract_strided_slice %62 {offsets = [0, 64], sizes = [2, 32], strides = [1, 1]} : vector<2x96xf32> to vector<2x32xf32>
    %68 = arith.mulf %66, %51 : vector<2x32xf32>
    %69 = arith.mulf %65, %64 : vector<2x32xf32>
    %70 = arith.addf %68, %69 : vector<2x32xf32>
    %71 = math.tanh %70 : vector<2x32xf32>
    %72 = arith.mulf %67, %71 : vector<2x32xf32>
    %73 = vector.extract_strided_slice %12 {offsets = [6, 0], sizes = [2, 128], strides = [1, 1]} : vector<16x128xf32> to vector<2x128xf32>
    %cst_18 = arith.constant dense<0.000000e+00> : vector<2x128xf32>
    %74 = tpu.matmul %72, %13, %cst_18 {dimension_numbers = #tpu.dot_dimension_numbers<[1], [0], [0], [1], [0, 0, 1, 1], [], []>} : vector<2x32xf32>, vector<32x128xf32>, vector<2x128xf32> -> vector<2x128xf32>
    %75 = arith.addf %73, %74 : vector<2x128xf32>
    %76 = vector.extract_strided_slice %75 {offsets = [0, 0], sizes = [2, 96], strides = [1, 1]} : vector<2x128xf32> to vector<2x96xf32>
    %77 = arith.negf %76 : vector<2x96xf32>
    %78 = math.exp %77 : vector<2x96xf32>
    %cst_19 = arith.constant 1.000000e+00 : f32
    %79 = vector.broadcast %cst_19 : f32 to vector<2x96xf32>
    %80 = arith.addf %79, %78 : vector<2x96xf32>
    %81 = arith.divf %79, %80 : vector<2x96xf32>
    %82 = vector.extract_strided_slice %75 {offsets = [0, 96], sizes = [2, 32], strides = [1, 1]} : vector<2x128xf32> to vector<2x32xf32>
    %83 = math.tanh %82 : vector<2x32xf32>
    %84 = vector.extract_strided_slice %81 {offsets = [0, 0], sizes = [2, 32], strides = [1, 1]} : vector<2x96xf32> to vector<2x32xf32>
    %85 = vector.extract_strided_slice %81 {offsets = [0, 32], sizes = [2, 32], strides = [1, 1]} : vector<2x96xf32> to vector<2x32xf32>
    %86 = vector.extract_strided_slice %81 {offsets = [0, 64], sizes = [2, 32], strides = [1, 1]} : vector<2x96xf32> to vector<2x32xf32>
    %87 = arith.mulf %85, %70 : vector<2x32xf32>
    %88 = arith.mulf %84, %83 : vector<2x32xf32>
    %89 = arith.addf %87, %88 : vector<2x32xf32>
    %90 = math.tanh %89 : vector<2x32xf32>
    %91 = arith.mulf %86, %90 : vector<2x32xf32>
    %92 = vector.extract_strided_slice %12 {offsets = [8, 0], sizes = [2, 128], strides = [1, 1]} : vector<16x128xf32> to vector<2x128xf32>
    %cst_20 = arith.constant dense<0.000000e+00> : vector<2x128xf32>
    %93 = tpu.matmul %91, %13, %cst_20 {dimension_numbers = #tpu.dot_dimension_numbers<[1], [0], [0], [1], [0, 0, 1, 1], [], []>} : vector<2x32xf32>, vector<32x128xf32>, vector<2x128xf32> -> vector<2x128xf32>
    %94 = arith.addf %92, %93 : vector<2x128xf32>
    %95 = vector.extract_strided_slice %94 {offsets = [0, 0], sizes = [2, 96], strides = [1, 1]} : vector<2x128xf32> to vector<2x96xf32>
    %96 = arith.negf %95 : vector<2x96xf32>
    %97 = math.exp %96 : vector<2x96xf32>
    %cst_21 = arith.constant 1.000000e+00 : f32
    %98 = vector.broadcast %cst_21 : f32 to vector<2x96xf32>
    %99 = arith.addf %98, %97 : vector<2x96xf32>
    %100 = arith.divf %98, %99 : vector<2x96xf32>
    %101 = vector.extract_strided_slice %94 {offsets = [0, 96], sizes = [2, 32], strides = [1, 1]} : vector<2x128xf32> to vector<2x32xf32>
    %102 = math.tanh %101 : vector<2x32xf32>
    %103 = vector.extract_strided_slice %100 {offsets = [0, 0], sizes = [2, 32], strides = [1, 1]} : vector<2x96xf32> to vector<2x32xf32>
    %104 = vector.extract_strided_slice %100 {offsets = [0, 32], sizes = [2, 32], strides = [1, 1]} : vector<2x96xf32> to vector<2x32xf32>
    %105 = vector.extract_strided_slice %100 {offsets = [0, 64], sizes = [2, 32], strides = [1, 1]} : vector<2x96xf32> to vector<2x32xf32>
    %106 = arith.mulf %104, %89 : vector<2x32xf32>
    %107 = arith.mulf %103, %102 : vector<2x32xf32>
    %108 = arith.addf %106, %107 : vector<2x32xf32>
    %109 = math.tanh %108 : vector<2x32xf32>
    %110 = arith.mulf %105, %109 : vector<2x32xf32>
    %111 = vector.extract_strided_slice %12 {offsets = [10, 0], sizes = [2, 128], strides = [1, 1]} : vector<16x128xf32> to vector<2x128xf32>
    %cst_22 = arith.constant dense<0.000000e+00> : vector<2x128xf32>
    %112 = tpu.matmul %110, %13, %cst_22 {dimension_numbers = #tpu.dot_dimension_numbers<[1], [0], [0], [1], [0, 0, 1, 1], [], []>} : vector<2x32xf32>, vector<32x128xf32>, vector<2x128xf32> -> vector<2x128xf32>
    %113 = arith.addf %111, %112 : vector<2x128xf32>
    %114 = vector.extract_strided_slice %113 {offsets = [0, 0], sizes = [2, 96], strides = [1, 1]} : vector<2x128xf32> to vector<2x96xf32>
    %115 = arith.negf %114 : vector<2x96xf32>
    %116 = math.exp %115 : vector<2x96xf32>
    %cst_23 = arith.constant 1.000000e+00 : f32
    %117 = vector.broadcast %cst_23 : f32 to vector<2x96xf32>
    %118 = arith.addf %117, %116 : vector<2x96xf32>
    %119 = arith.divf %117, %118 : vector<2x96xf32>
    %120 = vector.extract_strided_slice %113 {offsets = [0, 96], sizes = [2, 32], strides = [1, 1]} : vector<2x128xf32> to vector<2x32xf32>
    %121 = math.tanh %120 : vector<2x32xf32>
    %122 = vector.extract_strided_slice %119 {offsets = [0, 0], sizes = [2, 32], strides = [1, 1]} : vector<2x96xf32> to vector<2x32xf32>
    %123 = vector.extract_strided_slice %119 {offsets = [0, 32], sizes = [2, 32], strides = [1, 1]} : vector<2x96xf32> to vector<2x32xf32>
    %124 = vector.extract_strided_slice %119 {offsets = [0, 64], sizes = [2, 32], strides = [1, 1]} : vector<2x96xf32> to vector<2x32xf32>
    %125 = arith.mulf %123, %108 : vector<2x32xf32>
    %126 = arith.mulf %122, %121 : vector<2x32xf32>
    %127 = arith.addf %125, %126 : vector<2x32xf32>
    %128 = math.tanh %127 : vector<2x32xf32>
    %129 = arith.mulf %124, %128 : vector<2x32xf32>
    %130 = vector.extract_strided_slice %12 {offsets = [12, 0], sizes = [2, 128], strides = [1, 1]} : vector<16x128xf32> to vector<2x128xf32>
    %cst_24 = arith.constant dense<0.000000e+00> : vector<2x128xf32>
    %131 = tpu.matmul %129, %13, %cst_24 {dimension_numbers = #tpu.dot_dimension_numbers<[1], [0], [0], [1], [0, 0, 1, 1], [], []>} : vector<2x32xf32>, vector<32x128xf32>, vector<2x128xf32> -> vector<2x128xf32>
    %132 = arith.addf %130, %131 : vector<2x128xf32>
    %133 = vector.extract_strided_slice %132 {offsets = [0, 0], sizes = [2, 96], strides = [1, 1]} : vector<2x128xf32> to vector<2x96xf32>
    %134 = arith.negf %133 : vector<2x96xf32>
    %135 = math.exp %134 : vector<2x96xf32>
    %cst_25 = arith.constant 1.000000e+00 : f32
    %136 = vector.broadcast %cst_25 : f32 to vector<2x96xf32>
    %137 = arith.addf %136, %135 : vector<2x96xf32>
    %138 = arith.divf %136, %137 : vector<2x96xf32>
    %139 = vector.extract_strided_slice %132 {offsets = [0, 96], sizes = [2, 32], strides = [1, 1]} : vector<2x128xf32> to vector<2x32xf32>
    %140 = math.tanh %139 : vector<2x32xf32>
    %141 = vector.extract_strided_slice %138 {offsets = [0, 0], sizes = [2, 32], strides = [1, 1]} : vector<2x96xf32> to vector<2x32xf32>
    %142 = vector.extract_strided_slice %138 {offsets = [0, 32], sizes = [2, 32], strides = [1, 1]} : vector<2x96xf32> to vector<2x32xf32>
    %143 = vector.extract_strided_slice %138 {offsets = [0, 64], sizes = [2, 32], strides = [1, 1]} : vector<2x96xf32> to vector<2x32xf32>
    %144 = arith.mulf %142, %127 : vector<2x32xf32>
    %145 = arith.mulf %141, %140 : vector<2x32xf32>
    %146 = arith.addf %144, %145 : vector<2x32xf32>
    %147 = math.tanh %146 : vector<2x32xf32>
    %148 = arith.mulf %143, %147 : vector<2x32xf32>
    %149 = vector.extract_strided_slice %12 {offsets = [14, 0], sizes = [2, 128], strides = [1, 1]} : vector<16x128xf32> to vector<2x128xf32>
    %cst_26 = arith.constant dense<0.000000e+00> : vector<2x128xf32>
    %150 = tpu.matmul %148, %13, %cst_26 {dimension_numbers = #tpu.dot_dimension_numbers<[1], [0], [0], [1], [0, 0, 1, 1], [], []>} : vector<2x32xf32>, vector<32x128xf32>, vector<2x128xf32> -> vector<2x128xf32>
    %151 = arith.addf %149, %150 : vector<2x128xf32>
    %152 = vector.extract_strided_slice %151 {offsets = [0, 0], sizes = [2, 96], strides = [1, 1]} : vector<2x128xf32> to vector<2x96xf32>
    %153 = arith.negf %152 : vector<2x96xf32>
    %154 = math.exp %153 : vector<2x96xf32>
    %cst_27 = arith.constant 1.000000e+00 : f32
    %155 = vector.broadcast %cst_27 : f32 to vector<2x96xf32>
    %156 = arith.addf %155, %154 : vector<2x96xf32>
    %157 = arith.divf %155, %156 : vector<2x96xf32>
    %158 = vector.extract_strided_slice %151 {offsets = [0, 96], sizes = [2, 32], strides = [1, 1]} : vector<2x128xf32> to vector<2x32xf32>
    %159 = math.tanh %158 : vector<2x32xf32>
    %160 = vector.extract_strided_slice %157 {offsets = [0, 0], sizes = [2, 32], strides = [1, 1]} : vector<2x96xf32> to vector<2x32xf32>
    %161 = vector.extract_strided_slice %157 {offsets = [0, 32], sizes = [2, 32], strides = [1, 1]} : vector<2x96xf32> to vector<2x32xf32>
    %162 = vector.extract_strided_slice %157 {offsets = [0, 64], sizes = [2, 32], strides = [1, 1]} : vector<2x96xf32> to vector<2x32xf32>
    %163 = arith.mulf %161, %146 : vector<2x32xf32>
    %164 = arith.mulf %160, %159 : vector<2x32xf32>
    %165 = arith.addf %163, %164 : vector<2x32xf32>
    %166 = math.tanh %165 : vector<2x32xf32>
    %167 = arith.mulf %162, %166 : vector<2x32xf32>
    %c0_28 = arith.constant 0 : index
    %c0_29 = arith.constant 0 : index
    %168 = vector.load %arg5[%c0_28, %c0_29] : memref<32x12xf32, #tpu.memory_space<vmem>>, vector<32x12xf32>
    %cst_30 = arith.constant dense<0.000000e+00> : vector<2x12xf32>
    %169 = tpu.matmul %167, %168, %cst_30 {dimension_numbers = #tpu.dot_dimension_numbers<[1], [0], [0], [1], [0, 0, 1, 1], [], []>} : vector<2x32xf32>, vector<32x12xf32>, vector<2x12xf32> -> vector<2x12xf32>
    %c0_31 = arith.constant 0 : index
    %c0_32 = arith.constant 0 : index
    %170 = vector.load %arg6[%c0_31, %c0_32] : memref<1x12xf32, #tpu.memory_space<vmem>>, vector<1x12xf32>
    %171 = vector.broadcast %170 : vector<1x12xf32> to vector<2x12xf32>
    %172 = arith.addf %169, %171 : vector<2x12xf32>
    %173 = vector.extract_strided_slice %172 {offsets = [0, 0], sizes = [2, 4], strides = [1, 1]} : vector<2x12xf32> to vector<2x4xf32>
    %174 = vector.extract_strided_slice %172 {offsets = [0, 4], sizes = [2, 4], strides = [1, 1]} : vector<2x12xf32> to vector<2x4xf32>
    %175 = vector.extract_strided_slice %172 {offsets = [0, 8], sizes = [2, 4], strides = [1, 1]} : vector<2x12xf32> to vector<2x4xf32>
    %c0_33 = arith.constant 0 : index
    %c0_34 = arith.constant 0 : index
    %176 = vector.load %arg7[%c0_33, %c0_34] : memref<2x4xf32, #tpu.memory_space<vmem>>, vector<2x4xf32>
    %177 = math.exp %174 : vector<2x4xf32>
    %178 = arith.mulf %177, %176 : vector<2x4xf32>
    %179 = arith.addf %178, %173 : vector<2x4xf32>
    %cst_35 = arith.constant 5.000000e-01 : f32
    %180 = vector.broadcast %cst_35 : f32 to vector<2x4xf32>
    %181 = arith.mulf %180, %176 : vector<2x4xf32>
    %182 = arith.mulf %181, %176 : vector<2x4xf32>
    %183 = arith.addf %174, %182 : vector<2x4xf32>
    %cst_36 = arith.constant 0.918938517 : f32
    %184 = vector.broadcast %cst_36 : f32 to vector<2x4xf32>
    %185 = arith.addf %183, %184 : vector<2x4xf32>
    %186 = vector.shape_cast %185 : vector<2x4xf32> to vector<1x2x4xf32>
    %cst_37 = arith.constant dense<0.000000e+00> : vector<1xf32>
    %187 = vector.multi_reduction <add>, %186, %cst_37 [1, 2] : vector<1x2x4xf32> to vector<1xf32>
    %188 = vector.shape_cast %187 : vector<1xf32> to vector<1x1x1xf32>
    %189 = vector.extract %188[0, 0, 0] : f32 from vector<1x1x1xf32>
    %cst_38 = arith.constant 0.000000e+00 : f32
    %190 = arith.subf %cst_38, %189 : f32
    %c0_39 = arith.constant 0 : index
    %c0_40 = arith.constant 0 : index
    %c0_41 = arith.constant 0 : index
    %191 = vector.load %arg8[%c0_39, %c0_40, %c0_41] : memref<2x4x16xf32, #tpu.memory_space<vmem>>, vector<1x4x16xf32>
    %192 = vector.shape_cast %191 : vector<1x4x16xf32> to vector<4x16xf32>
    %c0_42 = arith.constant 0 : index
    %c0_43 = arith.constant 0 : index
    %c0_44 = arith.constant 0 : index
    %193 = vector.load %arg9[%c0_42, %c0_43, %c0_44] : memref<2x4x16xf32, #tpu.memory_space<vmem>>, vector<1x4x16xf32>
    %194 = vector.shape_cast %193 : vector<1x4x16xf32> to vector<4x16xf32>
    %c0_45 = arith.constant 0 : index
    %c0_46 = arith.constant 0 : index
    %c0_47 = arith.constant 0 : index
    %195 = vector.load %arg10[%c0_45, %c0_46, %c0_47] : memref<2x1x16xf32, #tpu.memory_space<vmem>>, vector<1x1x16xf32>
    %196 = vector.shape_cast %195 : vector<1x1x16xf32> to vector<1x16xf32>
    %c0_48 = arith.constant 0 : index
    %c0_49 = arith.constant 0 : index
    %c0_50 = arith.constant 0 : index
    %197 = vector.load %arg11[%c0_48, %c0_49, %c0_50] : memref<2x16x4xf32, #tpu.memory_space<vmem>>, vector<1x16x4xf32>
    %198 = vector.shape_cast %197 : vector<1x16x4xf32> to vector<16x4xf32>
    %c0_51 = arith.constant 0 : index
    %c0_52 = arith.constant 0 : index
    %c0_53 = arith.constant 0 : index
    %199 = vector.load %arg12[%c0_51, %c0_52, %c0_53] : memref<2x1x4xf32, #tpu.memory_space<vmem>>, vector<1x1x4xf32>
    %200 = vector.shape_cast %199 : vector<1x1x4xf32> to vector<1x4xf32>
    %cst_54 = arith.constant dense<0.000000e+00> : vector<2x16xf32>
    %201 = tpu.matmul %179, %192, %cst_54 {dimension_numbers = #tpu.dot_dimension_numbers<[1], [0], [0], [1], [0, 0, 1, 1], [], []>} : vector<2x4xf32>, vector<4x16xf32>, vector<2x16xf32> -> vector<2x16xf32>
    %cst_55 = arith.constant dense<0.000000e+00> : vector<2x16xf32>
    %202 = tpu.matmul %175, %194, %cst_55 {dimension_numbers = #tpu.dot_dimension_numbers<[1], [0], [0], [1], [0, 0, 1, 1], [], []>} : vector<2x4xf32>, vector<4x16xf32>, vector<2x16xf32> -> vector<2x16xf32>
    %203 = arith.addf %201, %202 : vector<2x16xf32>
    %204 = vector.broadcast %196 : vector<1x16xf32> to vector<2x16xf32>
    %205 = arith.addf %203, %204 : vector<2x16xf32>
    %cst_56 = arith.constant 0.000000e+00 : f32
    %206 = vector.broadcast %cst_56 : f32 to vector<2x16xf32>
    %207 = arith.maximumf %205, %206 : vector<2x16xf32>
    %cst_57 = arith.constant dense<0.000000e+00> : vector<2x4xf32>
    %208 = tpu.matmul %207, %198, %cst_57 {dimension_numbers = #tpu.dot_dimension_numbers<[1], [0], [0], [1], [0, 0, 1, 1], [], []>} : vector<2x16xf32>, vector<16x4xf32>, vector<2x4xf32> -> vector<2x4xf32>
    %209 = vector.broadcast %200 : vector<1x4xf32> to vector<2x4xf32>
    %210 = arith.addf %208, %209 : vector<2x4xf32>
    %c0_58 = arith.constant 0 : index
    %c0_59 = arith.constant 0 : index
    %c0_60 = arith.constant 0 : index
    %211 = vector.load %arg13[%c0_58, %c0_59, %c0_60] : memref<2x4x16xf32, #tpu.memory_space<vmem>>, vector<1x4x16xf32>
    %212 = vector.shape_cast %211 : vector<1x4x16xf32> to vector<4x16xf32>
    %c0_61 = arith.constant 0 : index
    %c0_62 = arith.constant 0 : index
    %c0_63 = arith.constant 0 : index
    %213 = vector.load %arg14[%c0_61, %c0_62, %c0_63] : memref<2x4x16xf32, #tpu.memory_space<vmem>>, vector<1x4x16xf32>
    %214 = vector.shape_cast %213 : vector<1x4x16xf32> to vector<4x16xf32>
    %c0_64 = arith.constant 0 : index
    %c0_65 = arith.constant 0 : index
    %c0_66 = arith.constant 0 : index
    %215 = vector.load %arg15[%c0_64, %c0_65, %c0_66] : memref<2x1x16xf32, #tpu.memory_space<vmem>>, vector<1x1x16xf32>
    %216 = vector.shape_cast %215 : vector<1x1x16xf32> to vector<1x16xf32>
    %c0_67 = arith.constant 0 : index
    %c0_68 = arith.constant 0 : index
    %c0_69 = arith.constant 0 : index
    %217 = vector.load %arg16[%c0_67, %c0_68, %c0_69] : memref<2x16x4xf32, #tpu.memory_space<vmem>>, vector<1x16x4xf32>
    %218 = vector.shape_cast %217 : vector<1x16x4xf32> to vector<16x4xf32>
    %c0_70 = arith.constant 0 : index
    %c0_71 = arith.constant 0 : index
    %c0_72 = arith.constant 0 : index
    %219 = vector.load %arg17[%c0_70, %c0_71, %c0_72] : memref<2x1x4xf32, #tpu.memory_space<vmem>>, vector<1x1x4xf32>
    %220 = vector.shape_cast %219 : vector<1x1x4xf32> to vector<1x4xf32>
    %cst_73 = arith.constant dense<0.000000e+00> : vector<2x16xf32>
    %221 = tpu.matmul %179, %212, %cst_73 {dimension_numbers = #tpu.dot_dimension_numbers<[1], [0], [0], [1], [0, 0, 1, 1], [], []>} : vector<2x4xf32>, vector<4x16xf32>, vector<2x16xf32> -> vector<2x16xf32>
    %cst_74 = arith.constant dense<0.000000e+00> : vector<2x16xf32>
    %222 = tpu.matmul %175, %214, %cst_74 {dimension_numbers = #tpu.dot_dimension_numbers<[1], [0], [0], [1], [0, 0, 1, 1], [], []>} : vector<2x4xf32>, vector<4x16xf32>, vector<2x16xf32> -> vector<2x16xf32>
    %223 = arith.addf %221, %222 : vector<2x16xf32>
    %224 = vector.broadcast %216 : vector<1x16xf32> to vector<2x16xf32>
    %225 = arith.addf %223, %224 : vector<2x16xf32>
    %cst_75 = arith.constant 0.000000e+00 : f32
    %226 = vector.broadcast %cst_75 : f32 to vector<2x16xf32>
    %227 = arith.maximumf %225, %226 : vector<2x16xf32>
    %cst_76 = arith.constant dense<0.000000e+00> : vector<2x4xf32>
    %228 = tpu.matmul %227, %218, %cst_76 {dimension_numbers = #tpu.dot_dimension_numbers<[1], [0], [0], [1], [0, 0, 1, 1], [], []>} : vector<2x16xf32>, vector<16x4xf32>, vector<2x4xf32> -> vector<2x4xf32>
    %229 = vector.broadcast %220 : vector<1x4xf32> to vector<2x4xf32>
    %230 = arith.addf %228, %229 : vector<2x4xf32>
    %cst_77 = arith.constant 1.500000e+00 : f32
    %231 = vector.broadcast %cst_77 : f32 to vector<2x4xf32>
    %232 = arith.addf %230, %231 : vector<2x4xf32>
    %233 = arith.negf %232 : vector<2x4xf32>
    %234 = math.exp %233 : vector<2x4xf32>
    %cst_78 = arith.constant 1.000000e+00 : f32
    %235 = vector.broadcast %cst_78 : f32 to vector<2x4xf32>
    %236 = arith.addf %235, %234 : vector<2x4xf32>
    %237 = arith.divf %235, %236 : vector<2x4xf32>
    %238 = arith.mulf %237, %179 : vector<2x4xf32>
    %cst_79 = arith.constant 1.000000e+00 : f32
    %239 = vector.broadcast %cst_79 : f32 to vector<2x4xf32>
    %240 = arith.subf %239, %237 : vector<2x4xf32>
    %241 = arith.mulf %240, %210 : vector<2x4xf32>
    %242 = arith.addf %238, %241 : vector<2x4xf32>
    %cst_80 = arith.constant 9.99999997E-7 : f32
    %243 = vector.broadcast %cst_80 : f32 to vector<2x4xf32>
    %244 = arith.addf %237, %243 : vector<2x4xf32>
    %245 = math.log %244 : vector<2x4xf32>
    %246 = vector.shape_cast %245 : vector<2x4xf32> to vector<1x2x4xf32>
    %cst_81 = arith.constant dense<0.000000e+00> : vector<1xf32>
    %247 = vector.multi_reduction <add>, %246, %cst_81 [1, 2] : vector<1x2x4xf32> to vector<1xf32>
    %248 = vector.shape_cast %247 : vector<1xf32> to vector<1x1x1xf32>
    %249 = vector.extract %248[0, 0, 0] : f32 from vector<1x1x1xf32>
    %250 = arith.subf %190, %249 : f32
    %c1 = arith.constant 1 : index
    %c0_82 = arith.constant 0 : index
    %c0_83 = arith.constant 0 : index
    %251 = vector.load %arg8[%c1, %c0_82, %c0_83] : memref<2x4x16xf32, #tpu.memory_space<vmem>>, vector<1x4x16xf32>
    %252 = vector.shape_cast %251 : vector<1x4x16xf32> to vector<4x16xf32>
    %c1_84 = arith.constant 1 : index
    %c0_85 = arith.constant 0 : index
    %c0_86 = arith.constant 0 : index
    %253 = vector.load %arg9[%c1_84, %c0_85, %c0_86] : memref<2x4x16xf32, #tpu.memory_space<vmem>>, vector<1x4x16xf32>
    %254 = vector.shape_cast %253 : vector<1x4x16xf32> to vector<4x16xf32>
    %c1_87 = arith.constant 1 : index
    %c0_88 = arith.constant 0 : index
    %c0_89 = arith.constant 0 : index
    %255 = vector.load %arg10[%c1_87, %c0_88, %c0_89] : memref<2x1x16xf32, #tpu.memory_space<vmem>>, vector<1x1x16xf32>
    %256 = vector.shape_cast %255 : vector<1x1x16xf32> to vector<1x16xf32>
    %c1_90 = arith.constant 1 : index
    %c0_91 = arith.constant 0 : index
    %c0_92 = arith.constant 0 : index
    %257 = vector.load %arg11[%c1_90, %c0_91, %c0_92] : memref<2x16x4xf32, #tpu.memory_space<vmem>>, vector<1x16x4xf32>
    %258 = vector.shape_cast %257 : vector<1x16x4xf32> to vector<16x4xf32>
    %c1_93 = arith.constant 1 : index
    %c0_94 = arith.constant 0 : index
    %c0_95 = arith.constant 0 : index
    %259 = vector.load %arg12[%c1_93, %c0_94, %c0_95] : memref<2x1x4xf32, #tpu.memory_space<vmem>>, vector<1x1x4xf32>
    %260 = vector.shape_cast %259 : vector<1x1x4xf32> to vector<1x4xf32>
    %cst_96 = arith.constant dense<0.000000e+00> : vector<2x16xf32>
    %261 = tpu.matmul %242, %252, %cst_96 {dimension_numbers = #tpu.dot_dimension_numbers<[1], [0], [0], [1], [0, 0, 1, 1], [], []>} : vector<2x4xf32>, vector<4x16xf32>, vector<2x16xf32> -> vector<2x16xf32>
    %cst_97 = arith.constant dense<0.000000e+00> : vector<2x16xf32>
    %262 = tpu.matmul %175, %254, %cst_97 {dimension_numbers = #tpu.dot_dimension_numbers<[1], [0], [0], [1], [0, 0, 1, 1], [], []>} : vector<2x4xf32>, vector<4x16xf32>, vector<2x16xf32> -> vector<2x16xf32>
    %263 = arith.addf %261, %262 : vector<2x16xf32>
    %264 = vector.broadcast %256 : vector<1x16xf32> to vector<2x16xf32>
    %265 = arith.addf %263, %264 : vector<2x16xf32>
    %cst_98 = arith.constant 0.000000e+00 : f32
    %266 = vector.broadcast %cst_98 : f32 to vector<2x16xf32>
    %267 = arith.maximumf %265, %266 : vector<2x16xf32>
    %cst_99 = arith.constant dense<0.000000e+00> : vector<2x4xf32>
    %268 = tpu.matmul %267, %258, %cst_99 {dimension_numbers = #tpu.dot_dimension_numbers<[1], [0], [0], [1], [0, 0, 1, 1], [], []>} : vector<2x16xf32>, vector<16x4xf32>, vector<2x4xf32> -> vector<2x4xf32>
    %269 = vector.broadcast %260 : vector<1x4xf32> to vector<2x4xf32>
    %270 = arith.addf %268, %269 : vector<2x4xf32>
    %c1_100 = arith.constant 1 : index
    %c0_101 = arith.constant 0 : index
    %c0_102 = arith.constant 0 : index
    %271 = vector.load %arg13[%c1_100, %c0_101, %c0_102] : memref<2x4x16xf32, #tpu.memory_space<vmem>>, vector<1x4x16xf32>
    %272 = vector.shape_cast %271 : vector<1x4x16xf32> to vector<4x16xf32>
    %c1_103 = arith.constant 1 : index
    %c0_104 = arith.constant 0 : index
    %c0_105 = arith.constant 0 : index
    %273 = vector.load %arg14[%c1_103, %c0_104, %c0_105] : memref<2x4x16xf32, #tpu.memory_space<vmem>>, vector<1x4x16xf32>
    %274 = vector.shape_cast %273 : vector<1x4x16xf32> to vector<4x16xf32>
    %c1_106 = arith.constant 1 : index
    %c0_107 = arith.constant 0 : index
    %c0_108 = arith.constant 0 : index
    %275 = vector.load %arg15[%c1_106, %c0_107, %c0_108] : memref<2x1x16xf32, #tpu.memory_space<vmem>>, vector<1x1x16xf32>
    %276 = vector.shape_cast %275 : vector<1x1x16xf32> to vector<1x16xf32>
    %c1_109 = arith.constant 1 : index
    %c0_110 = arith.constant 0 : index
    %c0_111 = arith.constant 0 : index
    %277 = vector.load %arg16[%c1_109, %c0_110, %c0_111] : memref<2x16x4xf32, #tpu.memory_space<vmem>>, vector<1x16x4xf32>
    %278 = vector.shape_cast %277 : vector<1x16x4xf32> to vector<16x4xf32>
    %c1_112 = arith.constant 1 : index
    %c0_113 = arith.constant 0 : index
    %c0_114 = arith.constant 0 : index
    %279 = vector.load %arg17[%c1_112, %c0_113, %c0_114] : memref<2x1x4xf32, #tpu.memory_space<vmem>>, vector<1x1x4xf32>
    %280 = vector.shape_cast %279 : vector<1x1x4xf32> to vector<1x4xf32>
    %cst_115 = arith.constant dense<0.000000e+00> : vector<2x16xf32>
    %281 = tpu.matmul %242, %272, %cst_115 {dimension_numbers = #tpu.dot_dimension_numbers<[1], [0], [0], [1], [0, 0, 1, 1], [], []>} : vector<2x4xf32>, vector<4x16xf32>, vector<2x16xf32> -> vector<2x16xf32>
    %cst_116 = arith.constant dense<0.000000e+00> : vector<2x16xf32>
    %282 = tpu.matmul %175, %274, %cst_116 {dimension_numbers = #tpu.dot_dimension_numbers<[1], [0], [0], [1], [0, 0, 1, 1], [], []>} : vector<2x4xf32>, vector<4x16xf32>, vector<2x16xf32> -> vector<2x16xf32>
    %283 = arith.addf %281, %282 : vector<2x16xf32>
    %284 = vector.broadcast %276 : vector<1x16xf32> to vector<2x16xf32>
    %285 = arith.addf %283, %284 : vector<2x16xf32>
    %cst_117 = arith.constant 0.000000e+00 : f32
    %286 = vector.broadcast %cst_117 : f32 to vector<2x16xf32>
    %287 = arith.maximumf %285, %286 : vector<2x16xf32>
    %cst_118 = arith.constant dense<0.000000e+00> : vector<2x4xf32>
    %288 = tpu.matmul %287, %278, %cst_118 {dimension_numbers = #tpu.dot_dimension_numbers<[1], [0], [0], [1], [0, 0, 1, 1], [], []>} : vector<2x16xf32>, vector<16x4xf32>, vector<2x4xf32> -> vector<2x4xf32>
    %289 = vector.broadcast %280 : vector<1x4xf32> to vector<2x4xf32>
    %290 = arith.addf %288, %289 : vector<2x4xf32>
    %cst_119 = arith.constant 1.500000e+00 : f32
    %291 = vector.broadcast %cst_119 : f32 to vector<2x4xf32>
    %292 = arith.addf %290, %291 : vector<2x4xf32>
    %293 = arith.negf %292 : vector<2x4xf32>
    %294 = math.exp %293 : vector<2x4xf32>
    %cst_120 = arith.constant 1.000000e+00 : f32
    %295 = vector.broadcast %cst_120 : f32 to vector<2x4xf32>
    %296 = arith.addf %295, %294 : vector<2x4xf32>
    %297 = arith.divf %295, %296 : vector<2x4xf32>
    %298 = arith.mulf %297, %242 : vector<2x4xf32>
    %cst_121 = arith.constant 1.000000e+00 : f32
    %299 = vector.broadcast %cst_121 : f32 to vector<2x4xf32>
    %300 = arith.subf %299, %297 : vector<2x4xf32>
    %301 = arith.mulf %300, %270 : vector<2x4xf32>
    %302 = arith.addf %298, %301 : vector<2x4xf32>
    %cst_122 = arith.constant 9.99999997E-7 : f32
    %303 = vector.broadcast %cst_122 : f32 to vector<2x4xf32>
    %304 = arith.addf %297, %303 : vector<2x4xf32>
    %305 = math.log %304 : vector<2x4xf32>
    %306 = vector.shape_cast %305 : vector<2x4xf32> to vector<1x2x4xf32>
    %cst_123 = arith.constant dense<0.000000e+00> : vector<1xf32>
    %307 = vector.multi_reduction <add>, %306, %cst_123 [1, 2] : vector<1x2x4xf32> to vector<1xf32>
    %308 = vector.shape_cast %307 : vector<1xf32> to vector<1x1x1xf32>
    %309 = vector.extract %308[0, 0, 0] : f32 from vector<1x1x1xf32>
    %310 = arith.subf %250, %309 : f32
    %c0_124 = arith.constant 0 : index
    %c0_125 = arith.constant 0 : index
    %311 = vector.load %arg24[%c0_124, %c0_125] : memref<2x4xf32, #tpu.memory_space<vmem>>, vector<2x4xf32>
    tpu.vector_store %arg24[%c0_124, %c0_125], %302 {strides = array<i32>} : memref<2x4xf32, #tpu.memory_space<vmem>>, vector<2x4xf32>,
    %cst_126 = arith.constant 0.000000e+00 : f32
    %312 = vector.broadcast %cst_126 : f32 to vector<1x1xf32>
    %313 = vector.broadcast %310 : f32 to vector<1x1xf32>
    %314 = arith.addf %312, %313 : vector<1x1xf32>
    %c0_127 = arith.constant 0 : index
    %c0_128 = arith.constant 0 : index
    %315 = vector.load %arg25[%c0_127, %c0_128] : memref<1x1xf32, #tpu.memory_space<vmem>>, vector<1x1xf32>
    tpu.vector_store %arg25[%c0_127, %c0_128], %314 {strides = array<i32>} : memref<1x1xf32, #tpu.memory_space<vmem>>, vector<1x1xf32>,
    %c0_129 = arith.constant 0 : index
    %c0_130 = arith.constant 0 : index
    %316 = vector.load %arg18[%c0_129, %c0_130] : memref<4x128xf32, #tpu.memory_space<vmem>>, vector<4x128xf32>
    %cst_131 = arith.constant dense<0.000000e+00> : vector<2x128xf32>
    %317 = tpu.matmul %302, %316, %cst_131 {dimension_numbers = #tpu.dot_dimension_numbers<[1], [0], [0], [1], [0, 0, 1, 1], [], []>} : vector<2x4xf32>, vector<4x128xf32>, vector<2x128xf32> -> vector<2x128xf32>
    %c0_132 = arith.constant 0 : index
    %c0_133 = arith.constant 0 : index
    %318 = vector.load %arg20[%c0_132, %c0_133] : memref<1x128xf32, #tpu.memory_space<vmem>>, vector<1x128xf32>
    %319 = vector.broadcast %318 : vector<1x128xf32> to vector<2x128xf32>
    %320 = arith.addf %317, %319 : vector<2x128xf32>
    %c0_134 = arith.constant 0 : index
    %c0_135 = arith.constant 0 : index
    %321 = vector.load %arg19[%c0_134, %c0_135] : memref<32x128xf32, #tpu.memory_space<vmem>>, vector<32x128xf32>
    %cst_136 = arith.constant 0.000000e+00 : f32
    %322 = vector.broadcast %cst_136 : f32 to vector<2x32xf32>
    %cst_137 = arith.constant 0.000000e+00 : f32
    %323 = vector.broadcast %cst_137 : f32 to vector<2x32xf32>
    %cst_138 = arith.constant dense<0.000000e+00> : vector<2x128xf32>
    %324 = tpu.matmul %322, %321, %cst_138 {dimension_numbers = #tpu.dot_dimension_numbers<[1], [0], [0], [1], [0, 0, 1, 1], [], []>} : vector<2x32xf32>, vector<32x128xf32>, vector<2x128xf32> -> vector<2x128xf32>
    %325 = arith.addf %320, %324 : vector<2x128xf32>
    %326 = vector.extract_strided_slice %325 {offsets = [0, 0], sizes = [2, 96], strides = [1, 1]} : vector<2x128xf32> to vector<2x96xf32>
    %327 = arith.negf %326 : vector<2x96xf32>
    %328 = math.exp %327 : vector<2x96xf32>
    %cst_139 = arith.constant 1.000000e+00 : f32
    %329 = vector.broadcast %cst_139 : f32 to vector<2x96xf32>
    %330 = arith.addf %329, %328 : vector<2x96xf32>
    %331 = arith.divf %329, %330 : vector<2x96xf32>
    %332 = vector.extract_strided_slice %325 {offsets = [0, 96], sizes = [2, 32], strides = [1, 1]} : vector<2x128xf32> to vector<2x32xf32>
    %333 = math.tanh %332 : vector<2x32xf32>
    %334 = vector.extract_strided_slice %331 {offsets = [0, 0], sizes = [2, 32], strides = [1, 1]} : vector<2x96xf32> to vector<2x32xf32>
    %335 = vector.extract_strided_slice %331 {offsets = [0, 32], sizes = [2, 32], strides = [1, 1]} : vector<2x96xf32> to vector<2x32xf32>
    %336 = vector.extract_strided_slice %331 {offsets = [0, 64], sizes = [2, 32], strides = [1, 1]} : vector<2x96xf32> to vector<2x32xf32>
    %337 = arith.mulf %335, %323 : vector<2x32xf32>
    %338 = arith.mulf %334, %333 : vector<2x32xf32>
    %339 = arith.addf %337, %338 : vector<2x32xf32>
    %340 = math.tanh %339 : vector<2x32xf32>
    %341 = arith.mulf %336, %340 : vector<2x32xf32>
    %cst_140 = arith.constant dense<0.000000e+00> : vector<2x128xf32>
    %342 = tpu.matmul %341, %321, %cst_140 {dimension_numbers = #tpu.dot_dimension_numbers<[1], [0], [0], [1], [0, 0, 1, 1], [], []>} : vector<2x32xf32>, vector<32x128xf32>, vector<2x128xf32> -> vector<2x128xf32>
    %343 = arith.addf %320, %342 : vector<2x128xf32>
    %344 = vector.extract_strided_slice %343 {offsets = [0, 0], sizes = [2, 96], strides = [1, 1]} : vector<2x128xf32> to vector<2x96xf32>
    %345 = arith.negf %344 : vector<2x96xf32>
    %346 = math.exp %345 : vector<2x96xf32>
    %cst_141 = arith.constant 1.000000e+00 : f32
    %347 = vector.broadcast %cst_141 : f32 to vector<2x96xf32>
    %348 = arith.addf %347, %346 : vector<2x96xf32>
    %349 = arith.divf %347, %348 : vector<2x96xf32>
    %350 = vector.extract_strided_slice %343 {offsets = [0, 96], sizes = [2, 32], strides = [1, 1]} : vector<2x128xf32> to vector<2x32xf32>
    %351 = math.tanh %350 : vector<2x32xf32>
    %352 = vector.extract_strided_slice %349 {offsets = [0, 0], sizes = [2, 32], strides = [1, 1]} : vector<2x96xf32> to vector<2x32xf32>
    %353 = vector.extract_strided_slice %349 {offsets = [0, 32], sizes = [2, 32], strides = [1, 1]} : vector<2x96xf32> to vector<2x32xf32>
    %354 = vector.extract_strided_slice %349 {offsets = [0, 64], sizes = [2, 32], strides = [1, 1]} : vector<2x96xf32> to vector<2x32xf32>
    %355 = arith.mulf %353, %339 : vector<2x32xf32>
    %356 = arith.mulf %352, %351 : vector<2x32xf32>
    %357 = arith.addf %355, %356 : vector<2x32xf32>
    %358 = math.tanh %357 : vector<2x32xf32>
    %359 = arith.mulf %354, %358 : vector<2x32xf32>
    %cst_142 = arith.constant dense<0.000000e+00> : vector<2x128xf32>
    %360 = tpu.matmul %359, %321, %cst_142 {dimension_numbers = #tpu.dot_dimension_numbers<[1], [0], [0], [1], [0, 0, 1, 1], [], []>} : vector<2x32xf32>, vector<32x128xf32>, vector<2x128xf32> -> vector<2x128xf32>
    %361 = arith.addf %320, %360 : vector<2x128xf32>
    %362 = vector.extract_strided_slice %361 {offsets = [0, 0], sizes = [2, 96], strides = [1, 1]} : vector<2x128xf32> to vector<2x96xf32>
    %363 = arith.negf %362 : vector<2x96xf32>
    %364 = math.exp %363 : vector<2x96xf32>
    %cst_143 = arith.constant 1.000000e+00 : f32
    %365 = vector.broadcast %cst_143 : f32 to vector<2x96xf32>
    %366 = arith.addf %365, %364 : vector<2x96xf32>
    %367 = arith.divf %365, %366 : vector<2x96xf32>
    %368 = vector.extract_strided_slice %361 {offsets = [0, 96], sizes = [2, 32], strides = [1, 1]} : vector<2x128xf32> to vector<2x32xf32>
    %369 = math.tanh %368 : vector<2x32xf32>
    %370 = vector.extract_strided_slice %367 {offsets = [0, 0], sizes = [2, 32], strides = [1, 1]} : vector<2x96xf32> to vector<2x32xf32>
    %371 = vector.extract_strided_slice %367 {offsets = [0, 32], sizes = [2, 32], strides = [1, 1]} : vector<2x96xf32> to vector<2x32xf32>
    %372 = vector.extract_strided_slice %367 {offsets = [0, 64], sizes = [2, 32], strides = [1, 1]} : vector<2x96xf32> to vector<2x32xf32>
    %373 = arith.mulf %371, %357 : vector<2x32xf32>
    %374 = arith.mulf %370, %369 : vector<2x32xf32>
    %375 = arith.addf %373, %374 : vector<2x32xf32>
    %376 = math.tanh %375 : vector<2x32xf32>
    %377 = arith.mulf %372, %376 : vector<2x32xf32>
    %cst_144 = arith.constant dense<0.000000e+00> : vector<2x128xf32>
    %378 = tpu.matmul %377, %321, %cst_144 {dimension_numbers = #tpu.dot_dimension_numbers<[1], [0], [0], [1], [0, 0, 1, 1], [], []>} : vector<2x32xf32>, vector<32x128xf32>, vector<2x128xf32> -> vector<2x128xf32>
    %379 = arith.addf %320, %378 : vector<2x128xf32>
    %380 = vector.extract_strided_slice %379 {offsets = [0, 0], sizes = [2, 96], strides = [1, 1]} : vector<2x128xf32> to vector<2x96xf32>
    %381 = arith.negf %380 : vector<2x96xf32>
    %382 = math.exp %381 : vector<2x96xf32>
    %cst_145 = arith.constant 1.000000e+00 : f32
    %383 = vector.broadcast %cst_145 : f32 to vector<2x96xf32>
    %384 = arith.addf %383, %382 : vector<2x96xf32>
    %385 = arith.divf %383, %384 : vector<2x96xf32>
    %386 = vector.extract_strided_slice %379 {offsets = [0, 96], sizes = [2, 32], strides = [1, 1]} : vector<2x128xf32> to vector<2x32xf32>
    %387 = math.tanh %386 : vector<2x32xf32>
    %388 = vector.extract_strided_slice %385 {offsets = [0, 0], sizes = [2, 32], strides = [1, 1]} : vector<2x96xf32> to vector<2x32xf32>
    %389 = vector.extract_strided_slice %385 {offsets = [0, 32], sizes = [2, 32], strides = [1, 1]} : vector<2x96xf32> to vector<2x32xf32>
    %390 = vector.extract_strided_slice %385 {offsets = [0, 64], sizes = [2, 32], strides = [1, 1]} : vector<2x96xf32> to vector<2x32xf32>
    %391 = arith.mulf %389, %375 : vector<2x32xf32>
    %392 = arith.mulf %388, %387 : vector<2x32xf32>
    %393 = arith.addf %391, %392 : vector<2x32xf32>
    %394 = math.tanh %393 : vector<2x32xf32>
    %395 = arith.mulf %390, %394 : vector<2x32xf32>
    %cst_146 = arith.constant dense<0.000000e+00> : vector<2x128xf32>
    %396 = tpu.matmul %395, %321, %cst_146 {dimension_numbers = #tpu.dot_dimension_numbers<[1], [0], [0], [1], [0, 0, 1, 1], [], []>} : vector<2x32xf32>, vector<32x128xf32>, vector<2x128xf32> -> vector<2x128xf32>
    %397 = arith.addf %320, %396 : vector<2x128xf32>
    %398 = vector.extract_strided_slice %397 {offsets = [0, 0], sizes = [2, 96], strides = [1, 1]} : vector<2x128xf32> to vector<2x96xf32>
    %399 = arith.negf %398 : vector<2x96xf32>
    %400 = math.exp %399 : vector<2x96xf32>
    %cst_147 = arith.constant 1.000000e+00 : f32
    %401 = vector.broadcast %cst_147 : f32 to vector<2x96xf32>
    %402 = arith.addf %401, %400 : vector<2x96xf32>
    %403 = arith.divf %401, %402 : vector<2x96xf32>
    %404 = vector.extract_strided_slice %397 {offsets = [0, 96], sizes = [2, 32], strides = [1, 1]} : vector<2x128xf32> to vector<2x32xf32>
    %405 = math.tanh %404 : vector<2x32xf32>
    %406 = vector.extract_strided_slice %403 {offsets = [0, 0], sizes = [2, 32], strides = [1, 1]} : vector<2x96xf32> to vector<2x32xf32>
    %407 = vector.extract_strided_slice %403 {offsets = [0, 32], sizes = [2, 32], strides = [1, 1]} : vector<2x96xf32> to vector<2x32xf32>
    %408 = vector.extract_strided_slice %403 {offsets = [0, 64], sizes = [2, 32], strides = [1, 1]} : vector<2x96xf32> to vector<2x32xf32>
    %409 = arith.mulf %407, %393 : vector<2x32xf32>
    %410 = arith.mulf %406, %405 : vector<2x32xf32>
    %411 = arith.addf %409, %410 : vector<2x32xf32>
    %412 = math.tanh %411 : vector<2x32xf32>
    %413 = arith.mulf %408, %412 : vector<2x32xf32>
    %cst_148 = arith.constant dense<0.000000e+00> : vector<2x128xf32>
    %414 = tpu.matmul %413, %321, %cst_148 {dimension_numbers = #tpu.dot_dimension_numbers<[1], [0], [0], [1], [0, 0, 1, 1], [], []>} : vector<2x32xf32>, vector<32x128xf32>, vector<2x128xf32> -> vector<2x128xf32>
    %415 = arith.addf %320, %414 : vector<2x128xf32>
    %416 = vector.extract_strided_slice %415 {offsets = [0, 0], sizes = [2, 96], strides = [1, 1]} : vector<2x128xf32> to vector<2x96xf32>
    %417 = arith.negf %416 : vector<2x96xf32>
    %418 = math.exp %417 : vector<2x96xf32>
    %cst_149 = arith.constant 1.000000e+00 : f32
    %419 = vector.broadcast %cst_149 : f32 to vector<2x96xf32>
    %420 = arith.addf %419, %418 : vector<2x96xf32>
    %421 = arith.divf %419, %420 : vector<2x96xf32>
    %422 = vector.extract_strided_slice %415 {offsets = [0, 96], sizes = [2, 32], strides = [1, 1]} : vector<2x128xf32> to vector<2x32xf32>
    %423 = math.tanh %422 : vector<2x32xf32>
    %424 = vector.extract_strided_slice %421 {offsets = [0, 0], sizes = [2, 32], strides = [1, 1]} : vector<2x96xf32> to vector<2x32xf32>
    %425 = vector.extract_strided_slice %421 {offsets = [0, 32], sizes = [2, 32], strides = [1, 1]} : vector<2x96xf32> to vector<2x32xf32>
    %426 = vector.extract_strided_slice %421 {offsets = [0, 64], sizes = [2, 32], strides = [1, 1]} : vector<2x96xf32> to vector<2x32xf32>
    %427 = arith.mulf %425, %411 : vector<2x32xf32>
    %428 = arith.mulf %424, %423 : vector<2x32xf32>
    %429 = arith.addf %427, %428 : vector<2x32xf32>
    %430 = math.tanh %429 : vector<2x32xf32>
    %431 = arith.mulf %426, %430 : vector<2x32xf32>
    %cst_150 = arith.constant dense<0.000000e+00> : vector<2x128xf32>
    %432 = tpu.matmul %431, %321, %cst_150 {dimension_numbers = #tpu.dot_dimension_numbers<[1], [0], [0], [1], [0, 0, 1, 1], [], []>} : vector<2x32xf32>, vector<32x128xf32>, vector<2x128xf32> -> vector<2x128xf32>
    %433 = arith.addf %320, %432 : vector<2x128xf32>
    %434 = vector.extract_strided_slice %433 {offsets = [0, 0], sizes = [2, 96], strides = [1, 1]} : vector<2x128xf32> to vector<2x96xf32>
    %435 = arith.negf %434 : vector<2x96xf32>
    %436 = math.exp %435 : vector<2x96xf32>
    %cst_151 = arith.constant 1.000000e+00 : f32
    %437 = vector.broadcast %cst_151 : f32 to vector<2x96xf32>
    %438 = arith.addf %437, %436 : vector<2x96xf32>
    %439 = arith.divf %437, %438 : vector<2x96xf32>
    %440 = vector.extract_strided_slice %433 {offsets = [0, 96], sizes = [2, 32], strides = [1, 1]} : vector<2x128xf32> to vector<2x32xf32>
    %441 = math.tanh %440 : vector<2x32xf32>
    %442 = vector.extract_strided_slice %439 {offsets = [0, 0], sizes = [2, 32], strides = [1, 1]} : vector<2x96xf32> to vector<2x32xf32>
    %443 = vector.extract_strided_slice %439 {offsets = [0, 32], sizes = [2, 32], strides = [1, 1]} : vector<2x96xf32> to vector<2x32xf32>
    %444 = vector.extract_strided_slice %439 {offsets = [0, 64], sizes = [2, 32], strides = [1, 1]} : vector<2x96xf32> to vector<2x32xf32>
    %445 = arith.mulf %443, %429 : vector<2x32xf32>
    %446 = arith.mulf %442, %441 : vector<2x32xf32>
    %447 = arith.addf %445, %446 : vector<2x32xf32>
    %448 = math.tanh %447 : vector<2x32xf32>
    %449 = arith.mulf %444, %448 : vector<2x32xf32>
    %cst_152 = arith.constant dense<0.000000e+00> : vector<2x128xf32>
    %450 = tpu.matmul %449, %321, %cst_152 {dimension_numbers = #tpu.dot_dimension_numbers<[1], [0], [0], [1], [0, 0, 1, 1], [], []>} : vector<2x32xf32>, vector<32x128xf32>, vector<2x128xf32> -> vector<2x128xf32>
    %451 = arith.addf %320, %450 : vector<2x128xf32>
    %452 = vector.extract_strided_slice %451 {offsets = [0, 0], sizes = [2, 96], strides = [1, 1]} : vector<2x128xf32> to vector<2x96xf32>
    %453 = arith.negf %452 : vector<2x96xf32>
    %454 = math.exp %453 : vector<2x96xf32>
    %cst_153 = arith.constant 1.000000e+00 : f32
    %455 = vector.broadcast %cst_153 : f32 to vector<2x96xf32>
    %456 = arith.addf %455, %454 : vector<2x96xf32>
    %457 = arith.divf %455, %456 : vector<2x96xf32>
    %458 = vector.extract_strided_slice %451 {offsets = [0, 96], sizes = [2, 32], strides = [1, 1]} : vector<2x128xf32> to vector<2x32xf32>
    %459 = math.tanh %458 : vector<2x32xf32>
    %460 = vector.extract_strided_slice %457 {offsets = [0, 0], sizes = [2, 32], strides = [1, 1]} : vector<2x96xf32> to vector<2x32xf32>
    %461 = vector.extract_strided_slice %457 {offsets = [0, 32], sizes = [2, 32], strides = [1, 1]} : vector<2x96xf32> to vector<2x32xf32>
    %462 = vector.extract_strided_slice %457 {offsets = [0, 64], sizes = [2, 32], strides = [1, 1]} : vector<2x96xf32> to vector<2x32xf32>
    %463 = arith.mulf %461, %447 : vector<2x32xf32>
    %464 = arith.mulf %460, %459 : vector<2x32xf32>
    %465 = arith.addf %463, %464 : vector<2x32xf32>
    %466 = math.tanh %465 : vector<2x32xf32>
    %467 = arith.mulf %462, %466 : vector<2x32xf32>
    %468 = tpu.concatenate %341, %359, %377, %395, %413, %431, %449, %467 in 0 : vector<2x32xf32>, vector<2x32xf32>, vector<2x32xf32>, vector<2x32xf32>, vector<2x32xf32>, vector<2x32xf32>, vector<2x32xf32>, vector<2x32xf32> -> vector<16x32xf32>
    %c0_154 = arith.constant 0 : index
    %c0_155 = arith.constant 0 : index
    %469 = vector.load %arg21[%c0_154, %c0_155] : memref<32x16xf32, #tpu.memory_space<vmem>>, vector<32x16xf32>
    %cst_156 = arith.constant dense<0.000000e+00> : vector<16x16xf32>
    %470 = tpu.matmul %468, %469, %cst_156 {dimension_numbers = #tpu.dot_dimension_numbers<[1], [0], [0], [1], [0, 0, 1, 1], [], []>} : vector<16x32xf32>, vector<32x16xf32>, vector<16x16xf32> -> vector<16x16xf32>
    %c0_157 = arith.constant 0 : index
    %c0_158 = arith.constant 0 : index
    %471 = vector.load %arg22[%c0_157, %c0_158] : memref<1x16xf32, #tpu.memory_space<vmem>>, vector<1x16xf32>
    %472 = vector.broadcast %471 : vector<1x16xf32> to vector<16x16xf32>
    %473 = arith.addf %470, %472 : vector<16x16xf32>
    %c0_159 = arith.constant 0 : index
    %c0_160 = arith.constant 0 : index
    %474 = vector.load %arg23[%c0_159, %c0_160] : memref<16x16xf32, #tpu.memory_space<vmem>>, vector<16x16xf32>
    tpu.vector_store %arg23[%c0_159, %c0_160], %473 {strides = array<i32>} : memref<16x16xf32, #tpu.memory_space<vmem>>, vector<16x16xf32>,
    return
  }
}

</mosaic_0001>

<llo_original>
// kernel: vrae_iaf_with_embedder_forward.1
$region0: #{vrae_iaf_with_embedder_forward.1}
  #allocation0 [shape = 'u32[]', space=smem, size = 0x4, offset = 0x4, fixed_abs, tag = 'smem constant byte address 0x4 - core index']
  #allocation1 [shape = 'u32[144,128]{1,0:T(1,128)}', space=vmem, size = 0x12000, scoped, tag = 'internal scratch']
  %s0 = inlined_call_operand.vmem [shape: s32[16,1], index: 0, kind: input, shape index: {}]
  %s1 = inlined_call_operand.vmem [shape: f32[16,8], index: 1, kind: input, shape index: {}]
  %s2 = inlined_call_operand.vmem [shape: f32[8,128], index: 2, kind: input, shape index: {}]
  %s3 = inlined_call_operand.vmem [shape: f32[32,128], index: 3, kind: input, shape index: {}]
  %s4 = inlined_call_operand.vmem [shape: f32[1,128], index: 4, kind: input, shape index: {}]
  %s5 = inlined_call_operand.vmem [shape: f32[32,12], index: 5, kind: input, shape index: {}]
  %s6 = inlined_call_operand.vmem [shape: f32[1,12], index: 6, kind: input, shape index: {}]
  %s7 = inlined_call_operand.vmem [shape: f32[2,4], index: 7, kind: input, shape index: {}]
  %s8 = inlined_call_operand.vmem [shape: f32[2,4,16], index: 8, kind: input, shape index: {}]
  %s9 = inlined_call_operand.vmem [shape: f32[2,4,16], index: 9, kind: input, shape index: {}]
  %s10 = inlined_call_operand.vmem [shape: f32[2,1,16], index: 10, kind: input, shape index: {}]
  %s11 = inlined_call_operand.vmem [shape: f32[2,16,4], index: 11, kind: input, shape index: {}]
  %s12 = inlined_call_operand.vmem [shape: f32[2,1,4], index: 12, kind: input, shape index: {}]
  %s13 = inlined_call_operand.vmem [shape: f32[2,4,16], index: 13, kind: input, shape index: {}]
  %s14 = inlined_call_operand.vmem [shape: f32[2,4,16], index: 14, kind: input, shape index: {}]
  %s15 = inlined_call_operand.vmem [shape: f32[2,1,16], index: 15, kind: input, shape index: {}]
  %s16 = inlined_call_operand.vmem [shape: f32[2,16,4], index: 16, kind: input, shape index: {}]
  %s17 = inlined_call_operand.vmem [shape: f32[2,1,4], index: 17, kind: input, shape index: {}]
  %s18 = inlined_call_operand.vmem [shape: f32[4,128], index: 18, kind: input, shape index: {}]
  %s19 = inlined_call_operand.vmem [shape: f32[32,128], index: 19, kind: input, shape index: {}]
  %s20 = inlined_call_operand.vmem [shape: f32[1,128], index: 20, kind: input, shape index: {}]
  %s21 = inlined_call_operand.vmem [shape: f32[32,16], index: 21, kind: input, shape index: {}]
  %s22 = inlined_call_operand.vmem [shape: f32[1,16], index: 22, kind: input, shape index: {}]
  %s23 = inlined_call_operand.hbm [shape: f32[16,16], index: 23, kind: output, shape index: {0}]
  %s24 = inlined_call_operand.hbm [shape: f32[2,4], index: 24, kind: output, shape index: {1}]
  %s25 = inlined_call_operand.hbm [shape: f32[1,1], index: 25, kind: output, shape index: {2}]
  %26 = xla_tuple %s23, %s24, %s25
  %s27 = sld [smem:[#allocation0]]
  $region118: #{vrae_iaf_with_embedder_forward.1} parent=0
    _
  %s29 = ssub.s32 1, %s27
  %s30 = scalar_select 0, %s29, %s27
  $region1: #{vrae_iaf_with_embedder_forward.1} parent=0
    #allocation2 [shape = 'u8[8192]{0}', space=vmem, size = 0x2000, scoped, tag = 'output window, operand 0, single buffered']
    #allocation3 [shape = 's32[1]{0}', space=sflag, size = 0x4, scoped, tag = 'scoped memory for vrae_iaf_with_embedder_forward.1']
    #allocation4 [shape = 'u8[1024]{0}', space=vmem, size = 0x400, scoped, tag = 'output window, operand 1, single buffered']
    #allocation5 [shape = 's32[1]{0}', space=sflag, size = 0x4, scoped, tag = 'scoped memory for vrae_iaf_with_embedder_forward.1']
    #allocation6 [shape = 'u8[512]{0}', space=vmem, size = 0x400, scoped, tag = 'output window, operand 2, single buffered']
    %31 = vsyncpa [#allocation3], 0
    %32 = vsyncpa [#allocation5], 0
    // Predicated region
    $region2: #{vrae_iaf_with_embedder_forward.1} parent=1 // pred_check
      _
    $region3: #{vrae_iaf_with_embedder_forward.1} parent=1 // pred_check_branch
      %34 = sbr.rel (0) target = $region5
    $region4: #{vrae_iaf_with_embedder_forward.1} parent=1 // pred_region
      _
    $region5: #{vrae_iaf_with_embedder_forward.1} parent=1 // pred_fallthru
      _
    // Predicated region
    $region6: #{vrae_iaf_with_embedder_forward.1} parent=1 // pred_check
      _
    $region7: #{vrae_iaf_with_embedder_forward.1} parent=1 // pred_check_branch
      %36 = sbr.rel (0) target = $region9
    $region8: #{vrae_iaf_with_embedder_forward.1} parent=1 // pred_region
      _
    $region9: #{vrae_iaf_with_embedder_forward.1} parent=1 // pred_fallthru
      _
    // Predicated region
    $region10: #{vrae_iaf_with_embedder_forward.1} parent=1 // pred_check
      _
    $region11: #{vrae_iaf_with_embedder_forward.1} parent=1 // pred_check_branch
      %38 = sbr.rel (0) target = $region13
    $region12: #{vrae_iaf_with_embedder_forward.1} parent=1 // pred_region
      _
    $region13: #{vrae_iaf_with_embedder_forward.1} parent=1 // pred_fallthru
      _
    // Predicated region
    $region14: #{vrae_iaf_with_embedder_forward.1} parent=1 // pred_check
      _
    $region15: #{vrae_iaf_with_embedder_forward.1} parent=1 // pred_check_branch
      %40 = sbr.rel (0) target = $region17
    $region16: #{vrae_iaf_with_embedder_forward.1} parent=1 // pred_region
      _
    $region17: #{vrae_iaf_with_embedder_forward.1} parent=1 // pred_fallthru
      _
    // Predicated region
    $region18: #{vrae_iaf_with_embedder_forward.1} parent=1 // pred_check
      _
    $region19: #{vrae_iaf_with_embedder_forward.1} parent=1 // pred_check_branch
      %42 = sbr.rel (0) target = $region21
    $region20: #{vrae_iaf_with_embedder_forward.1} parent=1 // pred_region
      _
    $region21: #{vrae_iaf_with_embedder_forward.1} parent=1 // pred_fallthru
      _
    // Predicated region
    $region22: #{vrae_iaf_with_embedder_forward.1} parent=1 // pred_check
      _
    $region23: #{vrae_iaf_with_embedder_forward.1} parent=1 // pred_check_branch
      %44 = sbr.rel (0) target = $region25
    $region24: #{vrae_iaf_with_embedder_forward.1} parent=1 // pred_region
      _
    $region25: #{vrae_iaf_with_embedder_forward.1} parent=1 // pred_fallthru
      _
    // Predicated region
    $region26: #{vrae_iaf_with_embedder_forward.1} parent=1 // pred_check
      _
    $region27: #{vrae_iaf_with_embedder_forward.1} parent=1 // pred_check_branch
      %46 = sbr.rel (0) target = $region29
    $region28: #{vrae_iaf_with_embedder_forward.1} parent=1 // pred_region
      _
    $region29: #{vrae_iaf_with_embedder_forward.1} parent=1 // pred_fallthru
      _
    // Predicated region
    $region30: #{vrae_iaf_with_embedder_forward.1} parent=1 // pred_check
      _
    $region31: #{vrae_iaf_with_embedder_forward.1} parent=1 // pred_check_branch
      %48 = sbr.rel (0) target = $region33
    $region32: #{vrae_iaf_with_embedder_forward.1} parent=1 // pred_region
      _
    $region33: #{vrae_iaf_with_embedder_forward.1} parent=1 // pred_fallthru
      _
    // Predicated region
    $region34: #{vrae_iaf_with_embedder_forward.1} parent=1 // pred_check
      _
    $region35: #{vrae_iaf_with_embedder_forward.1} parent=1 // pred_check_branch
      %50 = sbr.rel (0) target = $region37
    $region36: #{vrae_iaf_with_embedder_forward.1} parent=1 // pred_region
      _
    $region37: #{vrae_iaf_with_embedder_forward.1} parent=1 // pred_fallthru
      _
    // Predicated region
    $region38: #{vrae_iaf_with_embedder_forward.1} parent=1 // pred_check
      _
    $region39: #{vrae_iaf_with_embedder_forward.1} parent=1 // pred_check_branch
      %52 = sbr.rel (0) target = $region41
    $region40: #{vrae_iaf_with_embedder_forward.1} parent=1 // pred_region
      _
    $region41: #{vrae_iaf_with_embedder_forward.1} parent=1 // pred_fallthru
      _
    // Predicated region
    $region42: #{vrae_iaf_with_embedder_forward.1} parent=1 // pred_check
      _
    $region43: #{vrae_iaf_with_embedder_forward.1} parent=1 // pred_check_branch
      %54 = sbr.rel (0) target = $region45
    $region44: #{vrae_iaf_with_embedder_forward.1} parent=1 // pred_region
      _
    $region45: #{vrae_iaf_with_embedder_forward.1} parent=1 // pred_fallthru
      _
    // Predicated region
    $region46: #{vrae_iaf_with_embedder_forward.1} parent=1 // pred_check
      _
    $region47: #{vrae_iaf_with_embedder_forward.1} parent=1 // pred_check_branch
      %56 = sbr.rel (0) target = $region49
    $region48: #{vrae_iaf_with_embedder_forward.1} parent=1 // pred_region
      _
    $region49: #{vrae_iaf_with_embedder_forward.1} parent=1 // pred_fallthru
      _
    // Predicated region
    $region50: #{vrae_iaf_with_embedder_forward.1} parent=1 // pred_check
      _
    $region51: #{vrae_iaf_with_embedder_forward.1} parent=1 // pred_check_branch
      %58 = sbr.rel (0) target = $region53
    $region52: #{vrae_iaf_with_embedder_forward.1} parent=1 // pred_region
      _
    $region53: #{vrae_iaf_with_embedder_forward.1} parent=1 // pred_fallthru
      _
    // Predicated region
    $region54: #{vrae_iaf_with_embedder_forward.1} parent=1 // pred_check
      _
    $region55: #{vrae_iaf_with_embedder_forward.1} parent=1 // pred_check_branch
      %60 = sbr.rel (0) target = $region57
    $region56: #{vrae_iaf_with_embedder_forward.1} parent=1 // pred_region
      _
    $region57: #{vrae_iaf_with_embedder_forward.1} parent=1 // pred_fallthru
      _
    // Predicated region
    $region58: #{vrae_iaf_with_embedder_forward.1} parent=1 // pred_check
      _
    $region59: #{vrae_iaf_with_embedder_forward.1} parent=1 // pred_check_branch
      %62 = sbr.rel (0) target = $region61
    $region60: #{vrae_iaf_with_embedder_forward.1} parent=1 // pred_region
      _
    $region61: #{vrae_iaf_with_embedder_forward.1} parent=1 // pred_fallthru
      _
    // Predicated region
    $region62: #{vrae_iaf_with_embedder_forward.1} parent=1 // pred_check
      _
    $region63: #{vrae_iaf_with_embedder_forward.1} parent=1 // pred_check_branch
      %64 = sbr.rel (0) target = $region65
    $region64: #{vrae_iaf_with_embedder_forward.1} parent=1 // pred_region
      _
    $region65: #{vrae_iaf_with_embedder_forward.1} parent=1 // pred_fallthru
      _
    // Predicated region
    $region66: #{vrae_iaf_with_embedder_forward.1} parent=1 // pred_check
      _
    $region67: #{vrae_iaf_with_embedder_forward.1} parent=1 // pred_check_branch
      %66 = sbr.rel (0) target = $region69
    $region68: #{vrae_iaf_with_embedder_forward.1} parent=1 // pred_region
      _
    $region69: #{vrae_iaf_with_embedder_forward.1} parent=1 // pred_fallthru
      _
    // Predicated region
    $region70: #{vrae_iaf_with_embedder_forward.1} parent=1 // pred_check
      _
    $region71: #{vrae_iaf_with_embedder_forward.1} parent=1 // pred_check_branch
      %68 = sbr.rel (0) target = $region73
    $region72: #{vrae_iaf_with_embedder_forward.1} parent=1 // pred_region
      _
    $region73: #{vrae_iaf_with_embedder_forward.1} parent=1 // pred_fallthru
      _
    // Predicated region
    $region74: #{vrae_iaf_with_embedder_forward.1} parent=1 // pred_check
      _
    $region75: #{vrae_iaf_with_embedder_forward.1} parent=1 // pred_check_branch
      %70 = sbr.rel (0) target = $region77
    $region76: #{vrae_iaf_with_embedder_forward.1} parent=1 // pred_region
      _
    $region77: #{vrae_iaf_with_embedder_forward.1} parent=1 // pred_fallthru
      _
    // Predicated region
    $region78: #{vrae_iaf_with_embedder_forward.1} parent=1 // pred_check
      _
    $region79: #{vrae_iaf_with_embedder_forward.1} parent=1 // pred_check_branch
      %72 = sbr.rel (0) target = $region81
    $region80: #{vrae_iaf_with_embedder_forward.1} parent=1 // pred_region
      _
    $region81: #{vrae_iaf_with_embedder_forward.1} parent=1 // pred_fallthru
      _
    // Predicated region
    $region82: #{vrae_iaf_with_embedder_forward.1} parent=1 // pred_check
      _
    $region83: #{vrae_iaf_with_embedder_forward.1} parent=1 // pred_check_branch
      %74 = sbr.rel (0) target = $region85
    $region84: #{vrae_iaf_with_embedder_forward.1} parent=1 // pred_region
      _
    $region85: #{vrae_iaf_with_embedder_forward.1} parent=1 // pred_fallthru
      _
    // Predicated region
    $region86: #{vrae_iaf_with_embedder_forward.1} parent=1 // pred_check
      _
    $region87: #{vrae_iaf_with_embedder_forward.1} parent=1 // pred_check_branch
      %76 = sbr.rel (0) target = $region89
    $region88: #{vrae_iaf_with_embedder_forward.1} parent=1 // pred_region
      _
    $region89: #{vrae_iaf_with_embedder_forward.1} parent=1 // pred_fallthru
      _
    // Predicated region
    $region90: #{vrae_iaf_with_embedder_forward.1} parent=1 // pred_check
      _
    $region91: #{vrae_iaf_with_embedder_forward.1} parent=1 // pred_check_branch
      %78 = sbr.rel (0) target = $region93
    $region92: #{vrae_iaf_with_embedder_forward.1} parent=1 // pred_region
      _
    $region93: #{vrae_iaf_with_embedder_forward.1} parent=1 // pred_fallthru
      _
    %v79 = vld [vmem:[%s0] sm:$0xff]
    %v80 = vld [vmem:[%s0 + $0x8] sm:$0xff]
    %v81 = vlaneseq
    %v82 = vand.u32 %v81, 127
    %83 = vset.pattern.permute.xlu0 0
    %84 = vperm.xlu0 %83, %v79
    %v85 = vpop.permute.xlu0 %84
    %86 = vset.pattern.permute.xlu0 0
    %87 = vperm.xlu0 %86, %v80
    %v88 = vpop.permute.xlu0 %87
    %vm89 = vcmp.eq.s32.totalorder %v85, %v82
    %vm90 = vcmp.eq.s32.totalorder %v88, %v82
    %v91 = vsel %vm89, 1, 0
    %v92 = vsel %vm90, 1, 0
    %v93 = vcvt.s32.f32 %v91
    %v94 = vcvt.s32.f32 %v92
    %v95 = vld [vmem:[%s1] sm:$0xff]
    %v96 = vld [vmem:[%s1 + $0x8] sm:$0xff]
    %vm97 = vcmask 130048
    %v99 = vsel %vm97, %v93, 0
    %v102 = vsel %vm97, %v94, 0
    %104 = vmatprep.subr.mxu0 0.0
    %105 = vmatpush1.msra.mxu0 %v95
    %106 = vmatprep.subr.mxu0 0.0
    %107 = vmatpush1.msra.mxu0 %v96
    %108 = vmatprep.subr.mxu0 0.0
    %109 = vmatpush1.msra.mxu0 0.0
    %110 = vmatprep.subr.mxu0 0.0
    %111 = vmatpush1.msra.mxu0 0.0
    %112 = vmatprep.subr.mxu0 0.0
    %113 = vmatpush1.msra.mxu0 0.0
    %114 = vmatprep.subr.mxu0 0.0
    %115 = vmatpush1.msra.mxu0 0.0
    %116 = vmatprep.subr.mxu0 0.0
    %117 = vmatpush1.msra.mxu0 0.0
    %118 = vmatprep.subr.mxu0 0.0
    %119 = vmatpush1.msra.mxu0 0.0
    %120 = vmatprep.subr.mxu0 0.0
    %121 = vmatpush1.msra.mxu0 0.0
    %122 = vmatprep.subr.mxu0 0.0
    %123 = vmatpush1.msra.mxu0 0.0
    %124 = vmatprep.subr.mxu0 0.0
    %125 = vmatpush1.msra.mxu0 0.0
    %126 = vmatprep.subr.mxu0 0.0
    %127 = vmatpush1.msra.mxu0 0.0
    %128 = vmatprep.subr.mxu0 0.0
    %129 = vmatpush1.msra.mxu0 0.0
    %130 = vmatprep.subr.mxu0 0.0
    %131 = vmatpush1.msra.mxu0 0.0
    %132 = vmatprep.subr.mxu0 0.0
    %133 = vmatpush1.msra.mxu0 0.0
    %134 = vmatprep.subr.mxu0 0.0
    %135 = vmatpush1.msra.mxu0 0.0
    %136 = vmatprep.subr.mxu0 0.0
    %137 = vmatpush1.msra.mxu0 0.0
    %138 = vmatprep.subr.mxu0 0.0
    %139 = vmatpush1.msra.mxu0 0.0
    %140 = vmatprep.subr.mxu0 0.0
    %141 = vmatpush1.msra.mxu0 0.0
    %142 = vmatprep.subr.mxu0 0.0
    %143 = vmatpush1.msra.mxu0 0.0
    %144 = vmatprep.subr.mxu0 0.0
    %145 = vmatpush1.msra.mxu0 0.0
    %146 = vmatprep.subr.mxu0 0.0
    %147 = vmatpush1.msra.mxu0 0.0
    %148 = vmatprep.subr.mxu0 0.0
    %149 = vmatpush1.msra.mxu0 0.0
    %150 = vmatprep.subr.mxu0 0.0
    %151 = vmatpush1.msra.mxu0 0.0
    %152 = vmatprep.subr.mxu0 0.0
    %153 = vmatpush1.msra.mxu0 0.0
    %154 = vmatprep.subr.mxu0 0.0
    %155 = vmatpush1.msra.mxu0 0.0
    %156 = vmatprep.subr.mxu0 0.0
    %157 = vmatpush1.msra.mxu0 0.0
    %158 = vmatprep.subr.mxu0 0.0
    %159 = vmatpush1.msra.mxu0 0.0
    %160 = vmatprep.subr.mxu0 0.0
    %161 = vmatpush1.msra.mxu0 0.0
    %162 = vmatprep.subr.mxu0 0.0
    %163 = vmatpush1.msra.mxu0 0.0
    %164 = vmatprep.subr.mxu0 0.0
    %165 = vmatpush1.msra.mxu0 0.0
    %166 = vmatprep.subr.mxu0 0.0
    %167 = vmatpush1.msra.mxu0 0.0
    %168 = vmatprep.mubr.f32.mxu0 0.0
    %169 = vmatmul.mubr.f32.gmra.mrb[0].mxu0 %v99
    %v170 = vpop.f32.mrb[0].mxu0
    %v171 = vadd.f32 0.0, %v170
    %v172 = vpop.f32.mrb[0].mxu0
    %173 = vmatprep.mubr.f32.mxu0 0.0
    %174 = vmatmul.mubr.f32.gmra.mrb[0].mxu0 %v102
    %v175 = vpop.f32.mrb[0].mxu0
    %v176 = vadd.f32 0.0, %v175
    %v177 = vpop.f32.mrb[0].mxu0
    %178 = vdwg.mxu0
    %v179 = vld [vmem:[%s2] sm:$0xff]
    %v180 = vld [vmem:[%s4] sm:$0x1]
    %v182 = vlaneseq
    %v183 = vshrl.u32 %v182, 7
    %v184 = vsub.s32 0, %v183
    %v185 = vrot.slane %v180, %v184
    %vm187 = vcmask 64512
    %v189 = vsel %vm187, %v171, 0
    %v192 = vsel %vm187, %v176, 0
    %194 = vmatprep.subr.mxu0 0.0
    %195 = vmatpush1.msra.mxu0 %v179
    %196 = vmatprep.subr.mxu0 0.0
    %197 = vmatpush1.msra.mxu0 0.0
    %198 = vmatprep.subr.mxu0 0.0
    %199 = vmatpush1.msra.mxu0 0.0
    %200 = vmatprep.subr.mxu0 0.0
    %201 = vmatpush1.msra.mxu0 0.0
    %202 = vmatprep.subr.mxu0 0.0
    %203 = vmatpush1.msra.mxu0 0.0
    %204 = vmatprep.subr.mxu0 0.0
    %205 = vmatpush1.msra.mxu0 0.0
    %206 = vmatprep.subr.mxu0 0.0
    %207 = vmatpush1.msra.mxu0 0.0
    %208 = vmatprep.subr.mxu0 0.0
    %209 = vmatpush1.msra.mxu0 0.0
    %210 = vmatprep.subr.mxu0 0.0
    %211 = vmatpush1.msra.mxu0 0.0
    %212 = vmatprep.subr.mxu0 0.0
    %213 = vmatpush1.msra.mxu0 0.0
    %214 = vmatprep.subr.mxu0 0.0
    %215 = vmatpush1.msra.mxu0 0.0
    %216 = vmatprep.subr.mxu0 0.0
    %217 = vmatpush1.msra.mxu0 0.0
    %218 = vmatprep.subr.mxu0 0.0
    %219 = vmatpush1.msra.mxu0 0.0
    %220 = vmatprep.subr.mxu0 0.0
    %221 = vmatpush1.msra.mxu0 0.0
    %222 = vmatprep.subr.mxu0 0.0
    %223 = vmatpush1.msra.mxu0 0.0
    %224 = vmatprep.subr.mxu0 0.0
    %225 = vmatpush1.msra.mxu0 0.0
    %226 = vmatprep.subr.mxu0 0.0
    %227 = vmatpush1.msra.mxu0 0.0
    %228 = vmatprep.subr.mxu0 0.0
    %229 = vmatpush1.msra.mxu0 0.0
    %230 = vmatprep.subr.mxu0 0.0
    %231 = vmatpush1.msra.mxu0 0.0
    %232 = vmatprep.subr.mxu0 0.0
    %233 = vmatpush1.msra.mxu0 0.0
    %234 = vmatprep.subr.mxu0 0.0
    %235 = vmatpush1.msra.mxu0 0.0
    %236 = vmatprep.subr.mxu0 0.0
    %237 = vmatpush1.msra.mxu0 0.0
    %238 = vmatprep.subr.mxu0 0.0
    %239 = vmatpush1.msra.mxu0 0.0
    %240 = vmatprep.subr.mxu0 0.0
    %241 = vmatpush1.msra.mxu0 0.0
    %242 = vmatprep.subr.mxu0 0.0
    %243 = vmatpush1.msra.mxu0 0.0
    %244 = vmatprep.subr.mxu0 0.0
    %245 = vmatpush1.msra.mxu0 0.0
    %246 = vmatprep.subr.mxu0 0.0
    %247 = vmatpush1.msra.mxu0 0.0
    %248 = vmatprep.subr.mxu0 0.0
    %249 = vmatpush1.msra.mxu0 0.0
    %250 = vmatprep.subr.mxu0 0.0
    %251 = vmatpush1.msra.mxu0 0.0
    %252 = vmatprep.subr.mxu0 0.0
    %253 = vmatpush1.msra.mxu0 0.0
    %254 = vmatprep.subr.mxu0 0.0
    %255 = vmatpush1.msra.mxu0 0.0
    %256 = vmatprep.subr.mxu0 0.0
    %257 = vmatpush1.msra.mxu0 0.0
    %258 = vmatprep.mubr.f32.mxu0 0.0
    %259 = vmatmul.mubr.f32.gmra.mrb[0].mxu0 %v189
    %v260 = vpop.f32.mrb[0].mxu0
    %v261 = vadd.f32 %v185, %v260
    %v262 = vpop.f32.mrb[0].mxu0
    %263 = vmatprep.mubr.f32.mxu0 0.0
    %264 = vmatmul.mubr.f32.gmra.mrb[0].mxu0 %v192
    %v265 = vpop.f32.mrb[0].mxu0
    %v266 = vadd.f32 %v185, %v265
    %v267 = vpop.f32.mrb[0].mxu0
    %268 = vdwg.mxu0
    %v269 = vld [vmem:[%s3] sm:$0xff]
    %v270 = vld [vmem:[%s3 + $0x8] sm:$0xff]
    %v271 = vld [vmem:[%s3 + $0x10] sm:$0xff]
    %v272 = vld [vmem:[%s3 + $0x18] sm:$0xff]
    %vm273 = vcmask 261120
    %v275 = vsel %vm273, 0.0, 0
    %277 = vmatprep.subr.mxu0 0.0
    %278 = vmatpush1.msra.mxu0 %v269
    %279 = vmatprep.subr.mxu0 0.0
    %280 = vmatpush1.msra.mxu0 %v270
    %281 = vmatprep.subr.mxu0 0.0
    %282 = vmatpush1.msra.mxu0 %v271
    %283 = vmatprep.subr.mxu0 0.0
    %284 = vmatpush1.msra.mxu0 %v272
    %285 = vmatprep.subr.mxu0 0.0
    %286 = vmatpush1.msra.mxu0 0.0
    %287 = vmatprep.subr.mxu0 0.0
    %288 = vmatpush1.msra.mxu0 0.0
    %289 = vmatprep.subr.mxu0 0.0
    %290 = vmatpush1.msra.mxu0 0.0
    %291 = vmatprep.subr.mxu0 0.0
    %292 = vmatpush1.msra.mxu0 0.0
    %293 = vmatprep.subr.mxu0 0.0
    %294 = vmatpush1.msra.mxu0 0.0
    %295 = vmatprep.subr.mxu0 0.0
    %296 = vmatpush1.msra.mxu0 0.0
    %297 = vmatprep.subr.mxu0 0.0
    %298 = vmatpush1.msra.mxu0 0.0
    %299 = vmatprep.subr.mxu0 0.0
    %300 = vmatpush1.msra.mxu0 0.0
    %301 = vmatprep.subr.mxu0 0.0
    %302 = vmatpush1.msra.mxu0 0.0
    %303 = vmatprep.subr.mxu0 0.0
    %304 = vmatpush1.msra.mxu0 0.0
    %305 = vmatprep.subr.mxu0 0.0
    %306 = vmatpush1.msra.mxu0 0.0
    %307 = vmatprep.subr.mxu0 0.0
    %308 = vmatpush1.msra.mxu0 0.0
    %309 = vmatprep.subr.mxu0 0.0
    %310 = vmatpush1.msra.mxu0 0.0
    %311 = vmatprep.subr.mxu0 0.0
    %312 = vmatpush1.msra.mxu0 0.0
    %313 = vmatprep.subr.mxu0 0.0
    %314 = vmatpush1.msra.mxu0 0.0
    %315 = vmatprep.subr.mxu0 0.0
    %316 = vmatpush1.msra.mxu0 0.0
    %317 = vmatprep.subr.mxu0 0.0
    %318 = vmatpush1.msra.mxu0 0.0
    %319 = vmatprep.subr.mxu0 0.0
    %320 = vmatpush1.msra.mxu0 0.0
    %321 = vmatprep.subr.mxu0 0.0
    %322 = vmatpush1.msra.mxu0 0.0
    %323 = vmatprep.subr.mxu0 0.0
    %324 = vmatpush1.msra.mxu0 0.0
    %325 = vmatprep.subr.mxu0 0.0
    %326 = vmatpush1.msra.mxu0 0.0
    %327 = vmatprep.subr.mxu0 0.0
    %328 = vmatpush1.msra.mxu0 0.0
    %329 = vmatprep.subr.mxu0 0.0
    %330 = vmatpush1.msra.mxu0 0.0
    %331 = vmatprep.subr.mxu0 0.0
    %332 = vmatpush1.msra.mxu0 0.0
    %333 = vmatprep.subr.mxu0 0.0
    %334 = vmatpush1.msra.mxu0 0.0
    %335 = vmatprep.subr.mxu0 0.0
    %336 = vmatpush1.msra.mxu0 0.0
    %337 = vmatprep.subr.mxu0 0.0
    %338 = vmatpush1.msra.mxu0 0.0
    %339 = vmatprep.subr.mxu0 0.0
    %340 = vmatpush1.msra.mxu0 0.0
    %341 = vmatprep.mubr.f32.mxu0 0.0
    %342 = vmatmul.mubr.f32.gmra.mrb[0].mxu0 %v275
    %v343 = vpop.f32.mrb[0].mxu0
    %v344 = vadd.f32 0.0, %v343
    %v345 = vpop.f32.mrb[0].mxu0
    %346 = vdwg.mxu0
    %v347 = vadd.f32 %v261, %v344
    %v348 = vxor.u32 %v347, 2147483648
    %v349 = vmul.f32 %v348, 1.442695
    %v350 = vpow.pop %v349
    %v351 = vadd.f32 %v350, 1.0
    %v352 = vrcp.pop %v351
    %v353 = vmul.f32 1.0, %v352
    %v354 = vtanh.pop %v347
    %v355 = vmul.f32 %v353, 0.0
    %357 = vrot.lane.b32.xlu0 %v354, 32
    %v358 = vpop.permute.xlu0 %357
    %v360 = vmul.f32 %v353, %v358
    %362 = vrot.lane.b32.xlu0 %v360, 32
    %v363 = vpop.permute.xlu0 %362
    %v365 = vadd.f32 %v355, %v363
    %v366 = vtanh.pop %v365
    %368 = vrot.lane.b32.xlu0 %v366, 32
    %v369 = vpop.permute.xlu0 %368
    %v371 = vmul.f32 %v353, %v369
    %373 = vrot.lane.b32.xlu0 %v371, 64
    %v374 = vpop.permute.xlu0 %373
    %v375 = vsel %vm273, %v374, 0
    %377 = vmatprep.subr.mxu0 0.0
    %378 = vmatpush1.msra.mxu0 %v269
    %379 = vmatprep.subr.mxu0 0.0
    %380 = vmatpush1.msra.mxu0 %v270
    %381 = vmatprep.subr.mxu0 0.0
    %382 = vmatpush1.msra.mxu0 %v271
    %383 = vmatprep.subr.mxu0 0.0
    %384 = vmatpush1.msra.mxu0 %v272
    %385 = vmatprep.subr.mxu0 0.0
    %386 = vmatpush1.msra.mxu0 0.0
    %387 = vmatprep.subr.mxu0 0.0
    %388 = vmatpush1.msra.mxu0 0.0
    %389 = vmatprep.subr.mxu0 0.0
    %390 = vmatpush1.msra.mxu0 0.0
    %391 = vmatprep.subr.mxu0 0.0
    %392 = vmatpush1.msra.mxu0 0.0
    %393 = vmatprep.subr.mxu0 0.0
    %394 = vmatpush1.msra.mxu0 0.0
    %395 = vmatprep.subr.mxu0 0.0
    %396 = vmatpush1.msra.mxu0 0.0
    %397 = vmatprep.subr.mxu0 0.0
    %398 = vmatpush1.msra.mxu0 0.0
    %399 = vmatprep.subr.mxu0 0.0
    %400 = vmatpush1.msra.mxu0 0.0
    %401 = vmatprep.subr.mxu0 0.0
    %402 = vmatpush1.msra.mxu0 0.0
    %403 = vmatprep.subr.mxu0 0.0
    %404 = vmatpush1.msra.mxu0 0.0
    %405 = vmatprep.subr.mxu0 0.0
    %406 = vmatpush1.msra.mxu0 0.0
    %407 = vmatprep.subr.mxu0 0.0
    %408 = vmatpush1.msra.mxu0 0.0
    %409 = vmatprep.subr.mxu0 0.0
    %410 = vmatpush1.msra.mxu0 0.0
    %411 = vmatprep.subr.mxu0 0.0
    %412 = vmatpush1.msra.mxu0 0.0
    %413 = vmatprep.subr.mxu0 0.0
    %414 = vmatpush1.msra.mxu0 0.0
    %415 = vmatprep.subr.mxu0 0.0
    %416 = vmatpush1.msra.mxu0 0.0
    %417 = vmatprep.subr.mxu0 0.0
    %418 = vmatpush1.msra.mxu0 0.0
    %419 = vmatprep.subr.mxu0 0.0
    %420 = vmatpush1.msra.mxu0 0.0
    %421 = vmatprep.subr.mxu0 0.0
    %422 = vmatpush1.msra.mxu0 0.0
    %423 = vmatprep.subr.mxu0 0.0
    %424 = vmatpush1.msra.mxu0 0.0
    %425 = vmatprep.subr.mxu0 0.0
    %426 = vmatpush1.msra.mxu0 0.0
    %427 = vmatprep.subr.mxu0 0.0
    %428 = vmatpush1.msra.mxu0 0.0
    %429 = vmatprep.subr.mxu0 0.0
    %430 = vmatpush1.msra.mxu0 0.0
    %431 = vmatprep.subr.mxu0 0.0
    %432 = vmatpush1.msra.mxu0 0.0
    %433 = vmatprep.subr.mxu0 0.0
    %434 = vmatpush1.msra.mxu0 0.0
    %435 = vmatprep.subr.mxu0 0.0
    %436 = vmatpush1.msra.mxu0 0.0
    %437 = vmatprep.subr.mxu0 0.0
    %438 = vmatpush1.msra.mxu0 0.0
    %439 = vmatprep.subr.mxu0 0.0
    %440 = vmatpush1.msra.mxu0 0.0
    %441 = vmatprep.mubr.f32.mxu0 0.0
    %442 = vmatmul.mubr.f32.gmra.mrb[0].mxu0 %v375
    %v443 = vpop.f32.mrb[0].mxu0
    %v444 = vadd.f32 0.0, %v443
    %v445 = vpop.f32.mrb[0].mxu0
    %446 = vdwg.mxu0
    %v448 = vrot.slane %v444, 6
    %v450 = vadd.f32 %v261, %v448
    %v451 = vxor.u32 %v450, 2147483648
    %v452 = vmul.f32 %v451, 1.442695
    %v453 = vpow.pop %v452
    %v454 = vadd.f32 %v453, 1.0
    %v455 = vrcp.pop %v454
    %v456 = vmul.f32 1.0, %v455
    %v457 = vtanh.pop %v450
    %v459 = vrot.slane %v365, 6
    %v461 = vmul.f32 %v456, %v459
    %463 = vrot.lane.b32.xlu0 %v457, 32
    %v464 = vpop.permute.xlu0 %463
    %v466 = vmul.f32 %v456, %v464
    %468 = vrot.lane.b32.xlu0 %v466, 32
    %v469 = vpop.permute.xlu0 %468
    %v471 = vadd.f32 %v461, %v469
    %v472 = vtanh.pop %v471
    %474 = vrot.lane.b32.xlu0 %v472, 32
    %v475 = vpop.permute.xlu0 %474
    %v477 = vmul.f32 %v456, %v475
    %v479 = vrot.slane %v477, 2
    %480 = vrot.lane.b32.xlu0 %v479, 64
    %v481 = vpop.permute.xlu0 %480
    %v482 = vsel %vm273, %v481, 0
    %484 = vmatprep.subr.mxu0 0.0
    %485 = vmatpush1.msra.mxu0 %v269
    %486 = vmatprep.subr.mxu0 0.0
    %487 = vmatpush1.msra.mxu0 %v270
    %488 = vmatprep.subr.mxu0 0.0
    %489 = vmatpush1.msra.mxu0 %v271
    %490 = vmatprep.subr.mxu0 0.0
    %491 = vmatpush1.msra.mxu0 %v272
    %492 = vmatprep.subr.mxu0 0.0
    %493 = vmatpush1.msra.mxu0 0.0
    %494 = vmatprep.subr.mxu0 0.0
    %495 = vmatpush1.msra.mxu0 0.0
    %496 = vmatprep.subr.mxu0 0.0
    %497 = vmatpush1.msra.mxu0 0.0
    %498 = vmatprep.subr.mxu0 0.0
    %499 = vmatpush1.msra.mxu0 0.0
    %500 = vmatprep.subr.mxu0 0.0
    %501 = vmatpush1.msra.mxu0 0.0
    %502 = vmatprep.subr.mxu0 0.0
    %503 = vmatpush1.msra.mxu0 0.0
    %504 = vmatprep.subr.mxu0 0.0
    %505 = vmatpush1.msra.mxu0 0.0
    %506 = vmatprep.subr.mxu0 0.0
    %507 = vmatpush1.msra.mxu0 0.0
    %508 = vmatprep.subr.mxu0 0.0
    %509 = vmatpush1.msra.mxu0 0.0
    %510 = vmatprep.subr.mxu0 0.0
    %511 = vmatpush1.msra.mxu0 0.0
    %512 = vmatprep.subr.mxu0 0.0
    %513 = vmatpush1.msra.mxu0 0.0
    %514 = vmatprep.subr.mxu0 0.0
    %515 = vmatpush1.msra.mxu0 0.0
    %516 = vmatprep.subr.mxu0 0.0
    %517 = vmatpush1.msra.mxu0 0.0
    %518 = vmatprep.subr.mxu0 0.0
    %519 = vmatpush1.msra.mxu0 0.0
    %520 = vmatprep.subr.mxu0 0.0
    %521 = vmatpush1.msra.mxu0 0.0
    %522 = vmatprep.subr.mxu0 0.0
    %523 = vmatpush1.msra.mxu0 0.0
    %524 = vmatprep.subr.mxu0 0.0
    %525 = vmatpush1.msra.mxu0 0.0
    %526 = vmatprep.subr.mxu0 0.0
    %527 = vmatpush1.msra.mxu0 0.0
    %528 = vmatprep.subr.mxu0 0.0
    %529 = vmatpush1.msra.mxu0 0.0
    %530 = vmatprep.subr.mxu0 0.0
    %531 = vmatpush1.msra.mxu0 0.0
    %532 = vmatprep.subr.mxu0 0.0
    %533 = vmatpush1.msra.mxu0 0.0
    %534 = vmatprep.subr.mxu0 0.0
    %535 = vmatpush1.msra.mxu0 0.0
    %536 = vmatprep.subr.mxu0 0.0
    %537 = vmatpush1.msra.mxu0 0.0
    %538 = vmatprep.subr.mxu0 0.0
    %539 = vmatpush1.msra.mxu0 0.0
    %540 = vmatprep.subr.mxu0 0.0
    %541 = vmatpush1.msra.mxu0 0.0
    %542 = vmatprep.subr.mxu0 0.0
    %543 = vmatpush1.msra.mxu0 0.0
    %544 = vmatprep.subr.mxu0 0.0
    %545 = vmatpush1.msra.mxu0 0.0
    %546 = vmatprep.subr.mxu0 0.0
    %547 = vmatpush1.msra.mxu0 0.0
    %548 = vmatprep.mubr.f32.mxu0 0.0
    %549 = vmatmul.mubr.f32.gmra.mrb[0].mxu0 %v482
    %v550 = vpop.f32.mrb[0].mxu0
    %v551 = vadd.f32 0.0, %v550
    %v552 = vpop.f32.mrb[0].mxu0
    %553 = vdwg.mxu0
    %v555 = vrot.slane %v551, 4
    %v557 = vadd.f32 %v261, %v555
    %v558 = vxor.u32 %v557, 2147483648
    %v559 = vmul.f32 %v558, 1.442695
    %v560 = vpow.pop %v559
    %v561 = vadd.f32 %v560, 1.0
    %v562 = vrcp.pop %v561
    %v563 = vmul.f32 1.0, %v562
    %v564 = vtanh.pop %v557
    %v566 = vrot.slane %v471, 6
    %v568 = vmul.f32 %v563, %v566
    %570 = vrot.lane.b32.xlu0 %v564, 32
    %v571 = vpop.permute.xlu0 %570
    %v573 = vmul.f32 %v563, %v571
    %575 = vrot.lane.b32.xlu0 %v573, 32
    %v576 = vpop.permute.xlu0 %575
    %v578 = vadd.f32 %v568, %v576
    %v579 = vtanh.pop %v578
    %581 = vrot.lane.b32.xlu0 %v579, 32
    %v582 = vpop.permute.xlu0 %581
    %v584 = vmul.f32 %v563, %v582
    %v586 = vrot.slane %v584, 4
    %587 = vrot.lane.b32.xlu0 %v586, 64
    %v588 = vpop.permute.xlu0 %587
    %v589 = vsel %vm273, %v588, 0
    %591 = vmatprep.subr.mxu0 0.0
    %592 = vmatpush1.msra.mxu0 %v269
    %593 = vmatprep.subr.mxu0 0.0
    %594 = vmatpush1.msra.mxu0 %v270
    %595 = vmatprep.subr.mxu0 0.0
    %596 = vmatpush1.msra.mxu0 %v271
    %597 = vmatprep.subr.mxu0 0.0
    %598 = vmatpush1.msra.mxu0 %v272
    %599 = vmatprep.subr.mxu0 0.0
    %600 = vmatpush1.msra.mxu0 0.0
    %601 = vmatprep.subr.mxu0 0.0
    %602 = vmatpush1.msra.mxu0 0.0
    %603 = vmatprep.subr.mxu0 0.0
    %604 = vmatpush1.msra.mxu0 0.0
    %605 = vmatprep.subr.mxu0 0.0
    %606 = vmatpush1.msra.mxu0 0.0
    %607 = vmatprep.subr.mxu0 0.0
    %608 = vmatpush1.msra.mxu0 0.0
    %609 = vmatprep.subr.mxu0 0.0
    %610 = vmatpush1.msra.mxu0 0.0
    %611 = vmatprep.subr.mxu0 0.0
    %612 = vmatpush1.msra.mxu0 0.0
    %613 = vmatprep.subr.mxu0 0.0
    %614 = vmatpush1.msra.mxu0 0.0
    %615 = vmatprep.subr.mxu0 0.0
    %616 = vmatpush1.msra.mxu0 0.0
    %617 = vmatprep.subr.mxu0 0.0
    %618 = vmatpush1.msra.mxu0 0.0
    %619 = vmatprep.subr.mxu0 0.0
    %620 = vmatpush1.msra.mxu0 0.0
    %621 = vmatprep.subr.mxu0 0.0
    %622 = vmatpush1.msra.mxu0 0.0
    %623 = vmatprep.subr.mxu0 0.0
    %624 = vmatpush1.msra.mxu0 0.0
    %625 = vmatprep.subr.mxu0 0.0
    %626 = vmatpush1.msra.mxu0 0.0
    %627 = vmatprep.subr.mxu0 0.0
    %628 = vmatpush1.msra.mxu0 0.0
    %629 = vmatprep.subr.mxu0 0.0
    %630 = vmatpush1.msra.mxu0 0.0
    %631 = vmatprep.subr.mxu0 0.0
    %632 = vmatpush1.msra.mxu0 0.0
    %633 = vmatprep.subr.mxu0 0.0
    %634 = vmatpush1.msra.mxu0 0.0
    %635 = vmatprep.subr.mxu0 0.0
    %636 = vmatpush1.msra.mxu0 0.0
    %637 = vmatprep.subr.mxu0 0.0
    %638 = vmatpush1.msra.mxu0 0.0
    %639 = vmatprep.subr.mxu0 0.0
    %640 = vmatpush1.msra.mxu0 0.0
    %641 = vmatprep.subr.mxu0 0.0
    %642 = vmatpush1.msra.mxu0 0.0
    %643 = vmatprep.subr.mxu0 0.0
    %644 = vmatpush1.msra.mxu0 0.0
    %645 = vmatprep.subr.mxu0 0.0
    %646 = vmatpush1.msra.mxu0 0.0
    %647 = vmatprep.subr.mxu0 0.0
    %648 = vmatpush1.msra.mxu0 0.0
    %649 = vmatprep.subr.mxu0 0.0
    %650 = vmatpush1.msra.mxu0 0.0
    %651 = vmatprep.subr.mxu0 0.0
    %652 = vmatpush1.msra.mxu0 0.0
    %653 = vmatprep.subr.mxu0 0.0
    %654 = vmatpush1.msra.mxu0 0.0
    %655 = vmatprep.mubr.f32.mxu0 0.0
    %656 = vmatmul.mubr.f32.gmra.mrb[0].mxu0 %v589
    %v657 = vpop.f32.mrb[0].mxu0
    %v658 = vadd.f32 0.0, %v657
    %v659 = vpop.f32.mrb[0].mxu0
    %660 = vdwg.mxu0
    %v662 = vrot.slane %v658, 2
    %v664 = vadd.f32 %v261, %v662
    %v665 = vxor.u32 %v664, 2147483648
    %v666 = vmul.f32 %v665, 1.442695
    %v667 = vpow.pop %v666
    %v668 = vadd.f32 %v667, 1.0
    %v669 = vrcp.pop %v668
    %v670 = vmul.f32 1.0, %v669
    %v671 = vtanh.pop %v664
    %v673 = vrot.slane %v578, 6
    %v675 = vmul.f32 %v670, %v673
    %677 = vrot.lane.b32.xlu0 %v671, 32
    %v678 = vpop.permute.xlu0 %677
    %v680 = vmul.f32 %v670, %v678
    %682 = vrot.lane.b32.xlu0 %v680, 32
    %v683 = vpop.permute.xlu0 %682
    %v685 = vadd.f32 %v675, %v683
    %v686 = vtanh.pop %v685
    %688 = vrot.lane.b32.xlu0 %v686, 32
    %v689 = vpop.permute.xlu0 %688
    %v691 = vmul.f32 %v670, %v689
    %v693 = vrot.slane %v691, 6
    %694 = vrot.lane.b32.xlu0 %v693, 64
    %v695 = vpop.permute.xlu0 %694
    %v696 = vsel %vm273, %v695, 0
    %698 = vmatprep.subr.mxu0 0.0
    %699 = vmatpush1.msra.mxu0 %v269
    %700 = vmatprep.subr.mxu0 0.0
    %701 = vmatpush1.msra.mxu0 %v270
    %702 = vmatprep.subr.mxu0 0.0
    %703 = vmatpush1.msra.mxu0 %v271
    %704 = vmatprep.subr.mxu0 0.0
    %705 = vmatpush1.msra.mxu0 %v272
    %706 = vmatprep.subr.mxu0 0.0
    %707 = vmatpush1.msra.mxu0 0.0
    %708 = vmatprep.subr.mxu0 0.0
    %709 = vmatpush1.msra.mxu0 0.0
    %710 = vmatprep.subr.mxu0 0.0
    %711 = vmatpush1.msra.mxu0 0.0
    %712 = vmatprep.subr.mxu0 0.0
    %713 = vmatpush1.msra.mxu0 0.0
    %714 = vmatprep.subr.mxu0 0.0
    %715 = vmatpush1.msra.mxu0 0.0
    %716 = vmatprep.subr.mxu0 0.0
    %717 = vmatpush1.msra.mxu0 0.0
    %718 = vmatprep.subr.mxu0 0.0
    %719 = vmatpush1.msra.mxu0 0.0
    %720 = vmatprep.subr.mxu0 0.0
    %721 = vmatpush1.msra.mxu0 0.0
    %722 = vmatprep.subr.mxu0 0.0
    %723 = vmatpush1.msra.mxu0 0.0
    %724 = vmatprep.subr.mxu0 0.0
    %725 = vmatpush1.msra.mxu0 0.0
    %726 = vmatprep.subr.mxu0 0.0
    %727 = vmatpush1.msra.mxu0 0.0
    %728 = vmatprep.subr.mxu0 0.0
    %729 = vmatpush1.msra.mxu0 0.0
    %730 = vmatprep.subr.mxu0 0.0
    %731 = vmatpush1.msra.mxu0 0.0
    %732 = vmatprep.subr.mxu0 0.0
    %733 = vmatpush1.msra.mxu0 0.0
    %734 = vmatprep.subr.mxu0 0.0
    %735 = vmatpush1.msra.mxu0 0.0
    %736 = vmatprep.subr.mxu0 0.0
    %737 = vmatpush1.msra.mxu0 0.0
    %738 = vmatprep.subr.mxu0 0.0
    %739 = vmatpush1.msra.mxu0 0.0
    %740 = vmatprep.subr.mxu0 0.0
    %741 = vmatpush1.msra.mxu0 0.0
    %742 = vmatprep.subr.mxu0 0.0
    %743 = vmatpush1.msra.mxu0 0.0
    %744 = vmatprep.subr.mxu0 0.0
    %745 = vmatpush1.msra.mxu0 0.0
    %746 = vmatprep.subr.mxu0 0.0
    %747 = vmatpush1.msra.mxu0 0.0
    %748 = vmatprep.subr.mxu0 0.0
    %749 = vmatpush1.msra.mxu0 0.0
    %750 = vmatprep.subr.mxu0 0.0
    %751 = vmatpush1.msra.mxu0 0.0
    %752 = vmatprep.subr.mxu0 0.0
    %753 = vmatpush1.msra.mxu0 0.0
    %754 = vmatprep.subr.mxu0 0.0
    %755 = vmatpush1.msra.mxu0 0.0
    %756 = vmatprep.subr.mxu0 0.0
    %757 = vmatpush1.msra.mxu0 0.0
    %758 = vmatprep.subr.mxu0 0.0
    %759 = vmatpush1.msra.mxu0 0.0
    %760 = vmatprep.subr.mxu0 0.0
    %761 = vmatpush1.msra.mxu0 0.0
    %762 = vmatprep.mubr.f32.mxu0 0.0
    %763 = vmatmul.mubr.f32.gmra.mrb[0].mxu0 %v696
    %v764 = vpop.f32.mrb[0].mxu0
    %v765 = vadd.f32 0.0, %v764
    %v766 = vpop.f32.mrb[0].mxu0
    %767 = vdwg.mxu0
    %v768 = vadd.f32 %v266, %v765
    %v769 = vxor.u32 %v768, 2147483648
    %v770 = vmul.f32 %v769, 1.442695
    %v771 = vpow.pop %v770
    %v772 = vadd.f32 %v771, 1.0
    %v773 = vrcp.pop %v772
    %v774 = vmul.f32 1.0, %v773
    %v775 = vtanh.pop %v768
    %v777 = vrot.slane %v685, 6
    %v779 = vmul.f32 %v774, %v777
    %781 = vrot.lane.b32.xlu0 %v775, 32
    %v782 = vpop.permute.xlu0 %781
    %v784 = vmul.f32 %v774, %v782
    %786 = vrot.lane.b32.xlu0 %v784, 32
    %v787 = vpop.permute.xlu0 %786
    %v789 = vadd.f32 %v779, %v787
    %v790 = vtanh.pop %v789
    %792 = vrot.lane.b32.xlu0 %v790, 32
    %v793 = vpop.permute.xlu0 %792
    %v795 = vmul.f32 %v774, %v793
    %797 = vrot.lane.b32.xlu0 %v795, 64
    %v798 = vpop.permute.xlu0 %797
    %v799 = vsel %vm273, %v798, 0
    %801 = vmatprep.subr.mxu0 0.0
    %802 = vmatpush1.msra.mxu0 %v269
    %803 = vmatprep.subr.mxu0 0.0
    %804 = vmatpush1.msra.mxu0 %v270
    %805 = vmatprep.subr.mxu0 0.0
    %806 = vmatpush1.msra.mxu0 %v271
    %807 = vmatprep.subr.mxu0 0.0
    %808 = vmatpush1.msra.mxu0 %v272
    %809 = vmatprep.subr.mxu0 0.0
    %810 = vmatpush1.msra.mxu0 0.0
    %811 = vmatprep.subr.mxu0 0.0
    %812 = vmatpush1.msra.mxu0 0.0
    %813 = vmatprep.subr.mxu0 0.0
    %814 = vmatpush1.msra.mxu0 0.0
    %815 = vmatprep.subr.mxu0 0.0
    %816 = vmatpush1.msra.mxu0 0.0
    %817 = vmatprep.subr.mxu0 0.0
    %818 = vmatpush1.msra.mxu0 0.0
    %819 = vmatprep.subr.mxu0 0.0
    %820 = vmatpush1.msra.mxu0 0.0
    %821 = vmatprep.subr.mxu0 0.0
    %822 = vmatpush1.msra.mxu0 0.0
    %823 = vmatprep.subr.mxu0 0.0
    %824 = vmatpush1.msra.mxu0 0.0
    %825 = vmatprep.subr.mxu0 0.0
    %826 = vmatpush1.msra.mxu0 0.0
    %827 = vmatprep.subr.mxu0 0.0
    %828 = vmatpush1.msra.mxu0 0.0
    %829 = vmatprep.subr.mxu0 0.0
    %830 = vmatpush1.msra.mxu0 0.0
    %831 = vmatprep.subr.mxu0 0.0
    %832 = vmatpush1.msra.mxu0 0.0
    %833 = vmatprep.subr.mxu0 0.0
    %834 = vmatpush1.msra.mxu0 0.0
    %835 = vmatprep.subr.mxu0 0.0
    %836 = vmatpush1.msra.mxu0 0.0
    %837 = vmatprep.subr.mxu0 0.0
    %838 = vmatpush1.msra.mxu0 0.0
    %839 = vmatprep.subr.mxu0 0.0
    %840 = vmatpush1.msra.mxu0 0.0
    %841 = vmatprep.subr.mxu0 0.0
    %842 = vmatpush1.msra.mxu0 0.0
    %843 = vmatprep.subr.mxu0 0.0
    %844 = vmatpush1.msra.mxu0 0.0
    %845 = vmatprep.subr.mxu0 0.0
    %846 = vmatpush1.msra.mxu0 0.0
    %847 = vmatprep.subr.mxu0 0.0
    %848 = vmatpush1.msra.mxu0 0.0
    %849 = vmatprep.subr.mxu0 0.0
    %850 = vmatpush1.msra.mxu0 0.0
    %851 = vmatprep.subr.mxu0 0.0
    %852 = vmatpush1.msra.mxu0 0.0
    %853 = vmatprep.subr.mxu0 0.0
    %854 = vmatpush1.msra.mxu0 0.0
    %855 = vmatprep.subr.mxu0 0.0
    %856 = vmatpush1.msra.mxu0 0.0
    %857 = vmatprep.subr.mxu0 0.0
    %858 = vmatpush1.msra.mxu0 0.0
    %859 = vmatprep.subr.mxu0 0.0
    %860 = vmatpush1.msra.mxu0 0.0
    %861 = vmatprep.subr.mxu0 0.0
    %862 = vmatpush1.msra.mxu0 0.0
    %863 = vmatprep.subr.mxu0 0.0
    %864 = vmatpush1.msra.mxu0 0.0
    %865 = vmatprep.mubr.f32.mxu0 0.0
    %866 = vmatmul.mubr.f32.gmra.mrb[0].mxu0 %v799
    %v867 = vpop.f32.mrb[0].mxu0
    %v868 = vadd.f32 0.0, %v867
    %v869 = vpop.f32.mrb[0].mxu0
    %870 = vdwg.mxu0
    %v872 = vrot.slane %v868, 6
    %v874 = vadd.f32 %v266, %v872
    %v875 = vxor.u32 %v874, 2147483648
    %v876 = vmul.f32 %v875, 1.442695
    %v877 = vpow.pop %v876
    %v878 = vadd.f32 %v877, 1.0
    %v879 = vrcp.pop %v878
    %v880 = vmul.f32 1.0, %v879
    %v881 = vtanh.pop %v874
    %v883 = vrot.slane %v789, 6
    %v885 = vmul.f32 %v880, %v883
    %887 = vrot.lane.b32.xlu0 %v881, 32
    %v888 = vpop.permute.xlu0 %887
    %v890 = vmul.f32 %v880, %v888
    %892 = vrot.lane.b32.xlu0 %v890, 32
    %v893 = vpop.permute.xlu0 %892
    %v895 = vadd.f32 %v885, %v893
    %v896 = vtanh.pop %v895
    %898 = vrot.lane.b32.xlu0 %v896, 32
    %v899 = vpop.permute.xlu0 %898
    %v901 = vmul.f32 %v880, %v899
    %v903 = vrot.slane %v901, 2
    %904 = vrot.lane.b32.xlu0 %v903, 64
    %v905 = vpop.permute.xlu0 %904
    %v906 = vsel %vm273, %v905, 0
    %908 = vmatprep.subr.mxu0 0.0
    %909 = vmatpush1.msra.mxu0 %v269
    %910 = vmatprep.subr.mxu0 0.0
    %911 = vmatpush1.msra.mxu0 %v270
    %912 = vmatprep.subr.mxu0 0.0
    %913 = vmatpush1.msra.mxu0 %v271
    %914 = vmatprep.subr.mxu0 0.0
    %915 = vmatpush1.msra.mxu0 %v272
    %916 = vmatprep.subr.mxu0 0.0
    %917 = vmatpush1.msra.mxu0 0.0
    %918 = vmatprep.subr.mxu0 0.0
    %919 = vmatpush1.msra.mxu0 0.0
    %920 = vmatprep.subr.mxu0 0.0
    %921 = vmatpush1.msra.mxu0 0.0
    %922 = vmatprep.subr.mxu0 0.0
    %923 = vmatpush1.msra.mxu0 0.0
    %924 = vmatprep.subr.mxu0 0.0
    %925 = vmatpush1.msra.mxu0 0.0
    %926 = vmatprep.subr.mxu0 0.0
    %927 = vmatpush1.msra.mxu0 0.0
    %928 = vmatprep.subr.mxu0 0.0
    %929 = vmatpush1.msra.mxu0 0.0
    %930 = vmatprep.subr.mxu0 0.0
    %931 = vmatpush1.msra.mxu0 0.0
    %932 = vmatprep.subr.mxu0 0.0
    %933 = vmatpush1.msra.mxu0 0.0
    %934 = vmatprep.subr.mxu0 0.0
    %935 = vmatpush1.msra.mxu0 0.0
    %936 = vmatprep.subr.mxu0 0.0
    %937 = vmatpush1.msra.mxu0 0.0
    %938 = vmatprep.subr.mxu0 0.0
    %939 = vmatpush1.msra.mxu0 0.0
    %940 = vmatprep.subr.mxu0 0.0
    %941 = vmatpush1.msra.mxu0 0.0
    %942 = vmatprep.subr.mxu0 0.0
    %943 = vmatpush1.msra.mxu0 0.0
    %944 = vmatprep.subr.mxu0 0.0
    %945 = vmatpush1.msra.mxu0 0.0
    %946 = vmatprep.subr.mxu0 0.0
    %947 = vmatpush1.msra.mxu0 0.0
    %948 = vmatprep.subr.mxu0 0.0
    %949 = vmatpush1.msra.mxu0 0.0
    %950 = vmatprep.subr.mxu0 0.0
    %951 = vmatpush1.msra.mxu0 0.0
    %952 = vmatprep.subr.mxu0 0.0
    %953 = vmatpush1.msra.mxu0 0.0
    %954 = vmatprep.subr.mxu0 0.0
    %955 = vmatpush1.msra.mxu0 0.0
    %956 = vmatprep.subr.mxu0 0.0
    %957 = vmatpush1.msra.mxu0 0.0
    %958 = vmatprep.subr.mxu0 0.0
    %959 = vmatpush1.msra.mxu0 0.0
    %960 = vmatprep.subr.mxu0 0.0
    %961 = vmatpush1.msra.mxu0 0.0
    %962 = vmatprep.subr.mxu0 0.0
    %963 = vmatpush1.msra.mxu0 0.0
    %964 = vmatprep.subr.mxu0 0.0
    %965 = vmatpush1.msra.mxu0 0.0
    %966 = vmatprep.subr.mxu0 0.0
    %967 = vmatpush1.msra.mxu0 0.0
    %968 = vmatprep.subr.mxu0 0.0
    %969 = vmatpush1.msra.mxu0 0.0
    %970 = vmatprep.subr.mxu0 0.0
    %971 = vmatpush1.msra.mxu0 0.0
    %972 = vmatprep.mubr.f32.mxu0 0.0
    %973 = vmatmul.mubr.f32.gmra.mrb[0].mxu0 %v906
    %v974 = vpop.f32.mrb[0].mxu0
    %v975 = vadd.f32 0.0, %v974
    %v976 = vpop.f32.mrb[0].mxu0
    %977 = vdwg.mxu0
    %v979 = vrot.slane %v975, 4
    %v981 = vadd.f32 %v266, %v979
    %v982 = vxor.u32 %v981, 2147483648
    %v983 = vmul.f32 %v982, 1.442695
    %v984 = vpow.pop %v983
    %v985 = vadd.f32 %v984, 1.0
    %v986 = vrcp.pop %v985
    %v987 = vmul.f32 1.0, %v986
    %v988 = vtanh.pop %v981
    %v990 = vrot.slane %v895, 6
    %v992 = vmul.f32 %v987, %v990
    %994 = vrot.lane.b32.xlu0 %v988, 32
    %v995 = vpop.permute.xlu0 %994
    %v997 = vmul.f32 %v987, %v995
    %999 = vrot.lane.b32.xlu0 %v997, 32
    %v1000 = vpop.permute.xlu0 %999
    %v1002 = vadd.f32 %v992, %v1000
    %v1003 = vtanh.pop %v1002
    %1005 = vrot.lane.b32.xlu0 %v1003, 32
    %v1006 = vpop.permute.xlu0 %1005
    %v1008 = vmul.f32 %v987, %v1006
    %v1010 = vrot.slane %v1008, 4
    %1011 = vrot.lane.b32.xlu0 %v1010, 64
    %v1012 = vpop.permute.xlu0 %1011
    %v1013 = vsel %vm273, %v1012, 0
    %1015 = vmatprep.subr.mxu0 0.0
    %1016 = vmatpush1.msra.mxu0 %v269
    %1017 = vmatprep.subr.mxu0 0.0
    %1018 = vmatpush1.msra.mxu0 %v270
    %1019 = vmatprep.subr.mxu0 0.0
    %1020 = vmatpush1.msra.mxu0 %v271
    %1021 = vmatprep.subr.mxu0 0.0
    %1022 = vmatpush1.msra.mxu0 %v272
    %1023 = vmatprep.subr.mxu0 0.0
    %1024 = vmatpush1.msra.mxu0 0.0
    %1025 = vmatprep.subr.mxu0 0.0
    %1026 = vmatpush1.msra.mxu0 0.0
    %1027 = vmatprep.subr.mxu0 0.0
    %1028 = vmatpush1.msra.mxu0 0.0
    %1029 = vmatprep.subr.mxu0 0.0
    %1030 = vmatpush1.msra.mxu0 0.0
    %1031 = vmatprep.subr.mxu0 0.0
    %1032 = vmatpush1.msra.mxu0 0.0
    %1033 = vmatprep.subr.mxu0 0.0
    %1034 = vmatpush1.msra.mxu0 0.0
    %1035 = vmatprep.subr.mxu0 0.0
    %1036 = vmatpush1.msra.mxu0 0.0
    %1037 = vmatprep.subr.mxu0 0.0
    %1038 = vmatpush1.msra.mxu0 0.0
    %1039 = vmatprep.subr.mxu0 0.0
    %1040 = vmatpush1.msra.mxu0 0.0
    %1041 = vmatprep.subr.mxu0 0.0
    %1042 = vmatpush1.msra.mxu0 0.0
    %1043 = vmatprep.subr.mxu0 0.0
    %1044 = vmatpush1.msra.mxu0 0.0
    %1045 = vmatprep.subr.mxu0 0.0
    %1046 = vmatpush1.msra.mxu0 0.0
    %1047 = vmatprep.subr.mxu0 0.0
    %1048 = vmatpush1.msra.mxu0 0.0
    %1049 = vmatprep.subr.mxu0 0.0
    %1050 = vmatpush1.msra.mxu0 0.0
    %1051 = vmatprep.subr.mxu0 0.0
    %1052 = vmatpush1.msra.mxu0 0.0
    %1053 = vmatprep.subr.mxu0 0.0
    %1054 = vmatpush1.msra.mxu0 0.0
    %1055 = vmatprep.subr.mxu0 0.0
    %1056 = vmatpush1.msra.mxu0 0.0
    %1057 = vmatprep.subr.mxu0 0.0
    %1058 = vmatpush1.msra.mxu0 0.0
    %1059 = vmatprep.subr.mxu0 0.0
    %1060 = vmatpush1.msra.mxu0 0.0
    %1061 = vmatprep.subr.mxu0 0.0
    %1062 = vmatpush1.msra.mxu0 0.0
    %1063 = vmatprep.subr.mxu0 0.0
    %1064 = vmatpush1.msra.mxu0 0.0
    %1065 = vmatprep.subr.mxu0 0.0
    %1066 = vmatpush1.msra.mxu0 0.0
    %1067 = vmatprep.subr.mxu0 0.0
    %1068 = vmatpush1.msra.mxu0 0.0
    %1069 = vmatprep.subr.mxu0 0.0
    %1070 = vmatpush1.msra.mxu0 0.0
    %1071 = vmatprep.subr.mxu0 0.0
    %1072 = vmatpush1.msra.mxu0 0.0
    %1073 = vmatprep.subr.mxu0 0.0
    %1074 = vmatpush1.msra.mxu0 0.0
    %1075 = vmatprep.subr.mxu0 0.0
    %1076 = vmatpush1.msra.mxu0 0.0
    %1077 = vmatprep.subr.mxu0 0.0
    %1078 = vmatpush1.msra.mxu0 0.0
    %1079 = vmatprep.mubr.f32.mxu0 0.0
    %1080 = vmatmul.mubr.f32.gmra.mrb[0].mxu0 %v1013
    %v1081 = vpop.f32.mrb[0].mxu0
    %v1082 = vadd.f32 0.0, %v1081
    %v1083 = vpop.f32.mrb[0].mxu0
    %1084 = vdwg.mxu0
    %v1086 = vrot.slane %v1082, 2
    %v1088 = vadd.f32 %v266, %v1086
    %v1089 = vxor.u32 %v1088, 2147483648
    %v1090 = vmul.f32 %v1089, 1.442695
    %v1091 = vpow.pop %v1090
    %v1092 = vadd.f32 %v1091, 1.0
    %v1093 = vrcp.pop %v1092
    %v1094 = vmul.f32 1.0, %v1093
    %v1095 = vtanh.pop %v1088
    %v1097 = vrot.slane %v1002, 6
    %v1099 = vmul.f32 %v1094, %v1097
    %1101 = vrot.lane.b32.xlu0 %v1095, 32
    %v1102 = vpop.permute.xlu0 %1101
    %v1104 = vmul.f32 %v1094, %v1102
    %1106 = vrot.lane.b32.xlu0 %v1104, 32
    %v1107 = vpop.permute.xlu0 %1106
    %v1109 = vadd.f32 %v1099, %v1107
    %v1110 = vtanh.pop %v1109
    %1112 = vrot.lane.b32.xlu0 %v1110, 32
    %v1113 = vpop.permute.xlu0 %1112
    %v1115 = vmul.f32 %v1094, %v1113
    %v1116 = vld [vmem:[%s5] sm:$0xff]
    %v1117 = vld [vmem:[%s5 + $0x8] sm:$0xff]
    %v1118 = vld [vmem:[%s5 + $0x10] sm:$0xff]
    %v1119 = vld [vmem:[%s5 + $0x18] sm:$0xff]
    %v1120 = vld [vmem:[%s6] sm:$0x1]
    %v1122 = vlaneseq
    %v1123 = vshrl.u32 %v1122, 7
    %v1124 = vsub.s32 0, %v1123
    %v1125 = vrot.slane %v1120, %v1124
    %v1128 = vrot.slane %v1115, 6
    %1129 = vrot.lane.b32.xlu0 %v1128, 64
    %v1130 = vpop.permute.xlu0 %1129
    %v1131 = vsel %vm273, %v1130, 0
    %1133 = vmatprep.subr.mxu0 0.0
    %1134 = vmatpush1.msra.mxu0 %v1116
    %1135 = vmatprep.subr.mxu0 0.0
    %1136 = vmatpush1.msra.mxu0 %v1117
    %1137 = vmatprep.subr.mxu0 0.0
    %1138 = vmatpush1.msra.mxu0 %v1118
    %1139 = vmatprep.subr.mxu0 0.0
    %1140 = vmatpush1.msra.mxu0 %v1119
    %1141 = vmatprep.subr.mxu0 0.0
    %1142 = vmatpush1.msra.mxu0 0.0
    %1143 = vmatprep.subr.mxu0 0.0
    %1144 = vmatpush1.msra.mxu0 0.0
    %1145 = vmatprep.subr.mxu0 0.0
    %1146 = vmatpush1.msra.mxu0 0.0
    %1147 = vmatprep.subr.mxu0 0.0
    %1148 = vmatpush1.msra.mxu0 0.0
    %1149 = vmatprep.subr.mxu0 0.0
    %1150 = vmatpush1.msra.mxu0 0.0
    %1151 = vmatprep.subr.mxu0 0.0
    %1152 = vmatpush1.msra.mxu0 0.0
    %1153 = vmatprep.subr.mxu0 0.0
    %1154 = vmatpush1.msra.mxu0 0.0
    %1155 = vmatprep.subr.mxu0 0.0
    %1156 = vmatpush1.msra.mxu0 0.0
    %1157 = vmatprep.subr.mxu0 0.0
    %1158 = vmatpush1.msra.mxu0 0.0
    %1159 = vmatprep.subr.mxu0 0.0
    %1160 = vmatpush1.msra.mxu0 0.0
    %1161 = vmatprep.subr.mxu0 0.0
    %1162 = vmatpush1.msra.mxu0 0.0
    %1163 = vmatprep.subr.mxu0 0.0
    %1164 = vmatpush1.msra.mxu0 0.0
    %1165 = vmatprep.subr.mxu0 0.0
    %1166 = vmatpush1.msra.mxu0 0.0
    %1167 = vmatprep.subr.mxu0 0.0
    %1168 = vmatpush1.msra.mxu0 0.0
    %1169 = vmatprep.subr.mxu0 0.0
    %1170 = vmatpush1.msra.mxu0 0.0
    %1171 = vmatprep.subr.mxu0 0.0
    %1172 = vmatpush1.msra.mxu0 0.0
    %1173 = vmatprep.subr.mxu0 0.0
    %1174 = vmatpush1.msra.mxu0 0.0
    %1175 = vmatprep.subr.mxu0 0.0
    %1176 = vmatpush1.msra.mxu0 0.0
    %1177 = vmatprep.subr.mxu0 0.0
    %1178 = vmatpush1.msra.mxu0 0.0
    %1179 = vmatprep.subr.mxu0 0.0
    %1180 = vmatpush1.msra.mxu0 0.0
    %1181 = vmatprep.subr.mxu0 0.0
    %1182 = vmatpush1.msra.mxu0 0.0
    %1183 = vmatprep.subr.mxu0 0.0
    %1184 = vmatpush1.msra.mxu0 0.0
    %1185 = vmatprep.subr.mxu0 0.0
    %1186 = vmatpush1.msra.mxu0 0.0
    %1187 = vmatprep.subr.mxu0 0.0
    %1188 = vmatpush1.msra.mxu0 0.0
    %1189 = vmatprep.subr.mxu0 0.0
    %1190 = vmatpush1.msra.mxu0 0.0
    %1191 = vmatprep.subr.mxu0 0.0
    %1192 = vmatpush1.msra.mxu0 0.0
    %1193 = vmatprep.subr.mxu0 0.0
    %1194 = vmatpush1.msra.mxu0 0.0
    %1195 = vmatprep.subr.mxu0 0.0
    %1196 = vmatpush1.msra.mxu0 0.0
    %1197 = vmatprep.mubr.f32.mxu0 0.0
    %1198 = vmatmul.mubr.f32.gmra.mrb[0].mxu0 %v1131
    %v1199 = vpop.f32.mrb[0].mxu0
    %v1200 = vadd.f32 %v1125, %v1199
    %v1201 = vpop.f32.mrb[0].mxu0
    %1202 = vdwg.mxu0
    %v1203 = vld [vmem:[%s7] sm:$0x3]
    %v1204 = vmul.f32 %v1200, 1.442695
    %v1205 = vpow.pop %v1204
    %1207 = vrot.lane.b32.xlu0 %v1203, 4
    %v1208 = vpop.permute.xlu0 %1207
    %v1210 = vmul.f32 %v1205, %v1208
    %1212 = vrot.lane.b32.xlu0 %v1200, 4
    %v1213 = vpop.permute.xlu0 %1212
    %v1215 = vadd.f32 %v1210, %v1213
    %v1216 = vmul.f32 %v1203, 0.5
    %v1217 = vmul.f32 %v1216, %v1203
    %1219 = vrot.lane.b32.xlu0 %v1217, 4
    %v1220 = vpop.permute.xlu0 %1219
    %v1222 = vadd.f32 %v1200, %v1220
    %v1223 = vadd.f32 %v1222, 0.9189385
    %1225 = vrot.lane.b32.xlu0 %v1223, 124
    %v1226 = vpop.permute.xlu0 %1225
    %vm1228 = vcmask 25600
    %v1229 = vsel %vm1228, %v1226, 0.0
    %1230 = vadd.xlane.f32.xlu0 %v1229
    %v1231 = vpop.xlane.xlu0 %1230
    %v1232 = vrot.slane %v1231, 4
    %v1233 = vadd.f32 %v1231, %v1232
    %v1234 = vrot.slane %v1233, 2
    %v1235 = vadd.f32 %v1233, %v1234
    %v1236 = vrot.slane %v1235, 1
    %v1237 = vadd.f32 %v1235, %v1236
    %s1238 = vtos %v1237
    %s1239 = ssub.f32 0.0, %s1238
    %v1240 = vld [vmem:[%s8] sm:$0xf]
    %v1241 = vld [vmem:[%s9] sm:$0xf]
    %v1242 = vld [vmem:[%s10] sm:$0x1]
    %v1243 = vld [vmem:[%s11] sm:$0xff]
    %v1244 = vld [vmem:[%s11 + $0x8] sm:$0xff]
    %v1245 = vld [vmem:[%s12] sm:$0x1]
    %1246 = vrot.lane.b32.xlu0 %v1200, 120
    %v1247 = vpop.permute.xlu0 %1246
    %vm1248 = vcmask 31744
    %v1249 = vsel %vm1248, %v1247, 0
    %vm1251 = vcmask 1043456
    %v1253 = vsel %vm1251, %v1241, 0
    %1255 = vmatprep.subr.mxu0 0.0
    %1256 = vmatpush1.msra.mxu0 %v1253
    %1257 = vmatprep.subr.mxu0 0.0
    %1258 = vmatpush1.msra.mxu0 0.0
    %1259 = vmatprep.subr.mxu0 0.0
    %1260 = vmatpush1.msra.mxu0 0.0
    %1261 = vmatprep.subr.mxu0 0.0
    %1262 = vmatpush1.msra.mxu0 0.0
    %1263 = vmatprep.subr.mxu0 0.0
    %1264 = vmatpush1.msra.mxu0 0.0
    %1265 = vmatprep.subr.mxu0 0.0
    %1266 = vmatpush1.msra.mxu0 0.0
    %1267 = vmatprep.subr.mxu0 0.0
    %1268 = vmatpush1.msra.mxu0 0.0
    %1269 = vmatprep.subr.mxu0 0.0
    %1270 = vmatpush1.msra.mxu0 0.0
    %1271 = vmatprep.subr.mxu0 0.0
    %1272 = vmatpush1.msra.mxu0 0.0
    %1273 = vmatprep.subr.mxu0 0.0
    %1274 = vmatpush1.msra.mxu0 0.0
    %1275 = vmatprep.subr.mxu0 0.0
    %1276 = vmatpush1.msra.mxu0 0.0
    %1277 = vmatprep.subr.mxu0 0.0
    %1278 = vmatpush1.msra.mxu0 0.0
    %1279 = vmatprep.subr.mxu0 0.0
    %1280 = vmatpush1.msra.mxu0 0.0
    %1281 = vmatprep.subr.mxu0 0.0
    %1282 = vmatpush1.msra.mxu0 0.0
    %1283 = vmatprep.subr.mxu0 0.0
    %1284 = vmatpush1.msra.mxu0 0.0
    %1285 = vmatprep.subr.mxu0 0.0
    %1286 = vmatpush1.msra.mxu0 0.0
    %1287 = vmatprep.subr.mxu0 0.0
    %1288 = vmatpush1.msra.mxu0 0.0
    %1289 = vmatprep.subr.mxu0 0.0
    %1290 = vmatpush1.msra.mxu0 0.0
    %1291 = vmatprep.subr.mxu0 0.0
    %1292 = vmatpush1.msra.mxu0 0.0
    %1293 = vmatprep.subr.mxu0 0.0
    %1294 = vmatpush1.msra.mxu0 0.0
    %1295 = vmatprep.subr.mxu0 0.0
    %1296 = vmatpush1.msra.mxu0 0.0
    %1297 = vmatprep.subr.mxu0 0.0
    %1298 = vmatpush1.msra.mxu0 0.0
    %1299 = vmatprep.subr.mxu0 0.0
    %1300 = vmatpush1.msra.mxu0 0.0
    %1301 = vmatprep.subr.mxu0 0.0
    %1302 = vmatpush1.msra.mxu0 0.0
    %1303 = vmatprep.subr.mxu0 0.0
    %1304 = vmatpush1.msra.mxu0 0.0
    %1305 = vmatprep.subr.mxu0 0.0
    %1306 = vmatpush1.msra.mxu0 0.0
    %1307 = vmatprep.subr.mxu0 0.0
    %1308 = vmatpush1.msra.mxu0 0.0
    %1309 = vmatprep.subr.mxu0 0.0
    %1310 = vmatpush1.msra.mxu0 0.0
    %1311 = vmatprep.subr.mxu0 0.0
    %1312 = vmatpush1.msra.mxu0 0.0
    %1313 = vmatprep.subr.mxu0 0.0
    %1314 = vmatpush1.msra.mxu0 0.0
    %1315 = vmatprep.subr.mxu0 0.0
    %1316 = vmatpush1.msra.mxu0 0.0
    %1317 = vmatprep.subr.mxu0 0.0
    %1318 = vmatpush1.msra.mxu0 0.0
    %1319 = vmatprep.mubr.f32.mxu0 0.0
    %1320 = vmatmul.mubr.f32.gmra.mrb[0].mxu0 %v1249
    %v1321 = vpop.f32.mrb[0].mxu0
    %v1322 = vadd.f32 0.0, %v1321
    %v1323 = vpop.f32.mrb[0].mxu0
    %1324 = vdwg.mxu0
    %1326 = vrot.lane.b32.xlu0 %v1215, 124
    %v1327 = vpop.permute.xlu0 %1326
    %v1328 = vsel %vm1248, %v1327, 0
    %v1331 = vsel %vm1251, %v1240, 0
    %1333 = vmatprep.subr.mxu0 0.0
    %1334 = vmatpush1.msra.mxu0 %v1331
    %1335 = vmatprep.subr.mxu0 0.0
    %1336 = vmatpush1.msra.mxu0 0.0
    %1337 = vmatprep.subr.mxu0 0.0
    %1338 = vmatpush1.msra.mxu0 0.0
    %1339 = vmatprep.subr.mxu0 0.0
    %1340 = vmatpush1.msra.mxu0 0.0
    %1341 = vmatprep.subr.mxu0 0.0
    %1342 = vmatpush1.msra.mxu0 0.0
    %1343 = vmatprep.subr.mxu0 0.0
    %1344 = vmatpush1.msra.mxu0 0.0
    %1345 = vmatprep.subr.mxu0 0.0
    %1346 = vmatpush1.msra.mxu0 0.0
    %1347 = vmatprep.subr.mxu0 0.0
    %1348 = vmatpush1.msra.mxu0 0.0
    %1349 = vmatprep.subr.mxu0 0.0
    %1350 = vmatpush1.msra.mxu0 0.0
    %1351 = vmatprep.subr.mxu0 0.0
    %1352 = vmatpush1.msra.mxu0 0.0
    %1353 = vmatprep.subr.mxu0 0.0
    %1354 = vmatpush1.msra.mxu0 0.0
    %1355 = vmatprep.subr.mxu0 0.0
    %1356 = vmatpush1.msra.mxu0 0.0
    %1357 = vmatprep.subr.mxu0 0.0
    %1358 = vmatpush1.msra.mxu0 0.0
    %1359 = vmatprep.subr.mxu0 0.0
    %1360 = vmatpush1.msra.mxu0 0.0
    %1361 = vmatprep.subr.mxu0 0.0
    %1362 = vmatpush1.msra.mxu0 0.0
    %1363 = vmatprep.subr.mxu0 0.0
    %1364 = vmatpush1.msra.mxu0 0.0
    %1365 = vmatprep.subr.mxu0 0.0
    %1366 = vmatpush1.msra.mxu0 0.0
    %1367 = vmatprep.subr.mxu0 0.0
    %1368 = vmatpush1.msra.mxu0 0.0
    %1369 = vmatprep.subr.mxu0 0.0
    %1370 = vmatpush1.msra.mxu0 0.0
    %1371 = vmatprep.subr.mxu0 0.0
    %1372 = vmatpush1.msra.mxu0 0.0
    %1373 = vmatprep.subr.mxu0 0.0
    %1374 = vmatpush1.msra.mxu0 0.0
    %1375 = vmatprep.subr.mxu0 0.0
    %1376 = vmatpush1.msra.mxu0 0.0
    %1377 = vmatprep.subr.mxu0 0.0
    %1378 = vmatpush1.msra.mxu0 0.0
    %1379 = vmatprep.subr.mxu0 0.0
    %1380 = vmatpush1.msra.mxu0 0.0
    %1381 = vmatprep.subr.mxu0 0.0
    %1382 = vmatpush1.msra.mxu0 0.0
    %1383 = vmatprep.subr.mxu0 0.0
    %1384 = vmatpush1.msra.mxu0 0.0
    %1385 = vmatprep.subr.mxu0 0.0
    %1386 = vmatpush1.msra.mxu0 0.0
    %1387 = vmatprep.subr.mxu0 0.0
    %1388 = vmatpush1.msra.mxu0 0.0
    %1389 = vmatprep.subr.mxu0 0.0
    %1390 = vmatpush1.msra.mxu0 0.0
    %1391 = vmatprep.subr.mxu0 0.0
    %1392 = vmatpush1.msra.mxu0 0.0
    %1393 = vmatprep.subr.mxu0 0.0
    %1394 = vmatpush1.msra.mxu0 0.0
    %1395 = vmatprep.subr.mxu0 0.0
    %1396 = vmatpush1.msra.mxu0 0.0
    %1397 = vmatprep.mubr.f32.mxu0 0.0
    %1398 = vmatmul.mubr.f32.gmra.mrb[0].mxu0 %v1328
    %v1399 = vpop.f32.mrb[0].mxu0
    %v1400 = vadd.f32 %v1322, %v1399
    %v1401 = vpop.f32.mrb[0].mxu0
    %1402 = vdwg.mxu0
    %v1404 = vlaneseq
    %v1405 = vshrl.u32 %v1404, 7
    %v1406 = vsub.s32 0, %v1405
    %v1407 = vrot.slane %v1242, %v1406
    %v1409 = vadd.f32 %v1400, %v1407
    %v1410 = vmax.f32 %v1409, 0.0
    %v1412 = vlaneseq
    %v1413 = vshrl.u32 %v1412, 7
    %v1414 = vsub.s32 0, %v1413
    %v1415 = vrot.slane %v1245, %v1414
    %v1418 = vsel %vm97, %v1410, 0
    %1420 = vmatprep.subr.mxu0 0.0
    %1421 = vmatpush1.msra.mxu0 %v1243
    %1422 = vmatprep.subr.mxu0 0.0
    %1423 = vmatpush1.msra.mxu0 %v1244
    %1424 = vmatprep.subr.mxu0 0.0
    %1425 = vmatpush1.msra.mxu0 0.0
    %1426 = vmatprep.subr.mxu0 0.0
    %1427 = vmatpush1.msra.mxu0 0.0
    %1428 = vmatprep.subr.mxu0 0.0
    %1429 = vmatpush1.msra.mxu0 0.0
    %1430 = vmatprep.subr.mxu0 0.0
    %1431 = vmatpush1.msra.mxu0 0.0
    %1432 = vmatprep.subr.mxu0 0.0
    %1433 = vmatpush1.msra.mxu0 0.0
    %1434 = vmatprep.subr.mxu0 0.0
    %1435 = vmatpush1.msra.mxu0 0.0
    %1436 = vmatprep.subr.mxu0 0.0
    %1437 = vmatpush1.msra.mxu0 0.0
    %1438 = vmatprep.subr.mxu0 0.0
    %1439 = vmatpush1.msra.mxu0 0.0
    %1440 = vmatprep.subr.mxu0 0.0
    %1441 = vmatpush1.msra.mxu0 0.0
    %1442 = vmatprep.subr.mxu0 0.0
    %1443 = vmatpush1.msra.mxu0 0.0
    %1444 = vmatprep.subr.mxu0 0.0
    %1445 = vmatpush1.msra.mxu0 0.0
    %1446 = vmatprep.subr.mxu0 0.0
    %1447 = vmatpush1.msra.mxu0 0.0
    %1448 = vmatprep.subr.mxu0 0.0
    %1449 = vmatpush1.msra.mxu0 0.0
    %1450 = vmatprep.subr.mxu0 0.0
    %1451 = vmatpush1.msra.mxu0 0.0
    %1452 = vmatprep.subr.mxu0 0.0
    %1453 = vmatpush1.msra.mxu0 0.0
    %1454 = vmatprep.subr.mxu0 0.0
    %1455 = vmatpush1.msra.mxu0 0.0
    %1456 = vmatprep.subr.mxu0 0.0
    %1457 = vmatpush1.msra.mxu0 0.0
    %1458 = vmatprep.subr.mxu0 0.0
    %1459 = vmatpush1.msra.mxu0 0.0
    %1460 = vmatprep.subr.mxu0 0.0
    %1461 = vmatpush1.msra.mxu0 0.0
    %1462 = vmatprep.subr.mxu0 0.0
    %1463 = vmatpush1.msra.mxu0 0.0
    %1464 = vmatprep.subr.mxu0 0.0
    %1465 = vmatpush1.msra.mxu0 0.0
    %1466 = vmatprep.subr.mxu0 0.0
    %1467 = vmatpush1.msra.mxu0 0.0
    %1468 = vmatprep.subr.mxu0 0.0
    %1469 = vmatpush1.msra.mxu0 0.0
    %1470 = vmatprep.subr.mxu0 0.0
    %1471 = vmatpush1.msra.mxu0 0.0
    %1472 = vmatprep.subr.mxu0 0.0
    %1473 = vmatpush1.msra.mxu0 0.0
    %1474 = vmatprep.subr.mxu0 0.0
    %1475 = vmatpush1.msra.mxu0 0.0
    %1476 = vmatprep.subr.mxu0 0.0
    %1477 = vmatpush1.msra.mxu0 0.0
    %1478 = vmatprep.subr.mxu0 0.0
    %1479 = vmatpush1.msra.mxu0 0.0
    %1480 = vmatprep.subr.mxu0 0.0
    %1481 = vmatpush1.msra.mxu0 0.0
    %1482 = vmatprep.subr.mxu0 0.0
    %1483 = vmatpush1.msra.mxu0 0.0
    %1484 = vmatprep.mubr.f32.mxu0 0.0
    %1485 = vmatmul.mubr.f32.gmra.mrb[0].mxu0 %v1418
    %v1486 = vpop.f32.mrb[0].mxu0
    %v1487 = vadd.f32 %v1415, %v1486
    %v1488 = vpop.f32.mrb[0].mxu0
    %1489 = vdwg.mxu0
    %v1490 = vld [vmem:[%s13] sm:$0xf]
    %v1491 = vld [vmem:[%s14] sm:$0xf]
    %v1492 = vld [vmem:[%s15] sm:$0x1]
    %v1493 = vld [vmem:[%s16] sm:$0xff]
    %v1494 = vld [vmem:[%s16 + $0x8] sm:$0xff]
    %v1495 = vld [vmem:[%s17] sm:$0x1]
    %v1497 = vsel %vm1251, %v1491, 0
    %1499 = vmatprep.subr.mxu0 0.0
    %1500 = vmatpush1.msra.mxu0 %v1497
    %1501 = vmatprep.subr.mxu0 0.0
    %1502 = vmatpush1.msra.mxu0 0.0
    %1503 = vmatprep.subr.mxu0 0.0
    %1504 = vmatpush1.msra.mxu0 0.0
    %1505 = vmatprep.subr.mxu0 0.0
    %1506 = vmatpush1.msra.mxu0 0.0
    %1507 = vmatprep.subr.mxu0 0.0
    %1508 = vmatpush1.msra.mxu0 0.0
    %1509 = vmatprep.subr.mxu0 0.0
    %1510 = vmatpush1.msra.mxu0 0.0
    %1511 = vmatprep.subr.mxu0 0.0
    %1512 = vmatpush1.msra.mxu0 0.0
    %1513 = vmatprep.subr.mxu0 0.0
    %1514 = vmatpush1.msra.mxu0 0.0
    %1515 = vmatprep.subr.mxu0 0.0
    %1516 = vmatpush1.msra.mxu0 0.0
    %1517 = vmatprep.subr.mxu0 0.0
    %1518 = vmatpush1.msra.mxu0 0.0
    %1519 = vmatprep.subr.mxu0 0.0
    %1520 = vmatpush1.msra.mxu0 0.0
    %1521 = vmatprep.subr.mxu0 0.0
    %1522 = vmatpush1.msra.mxu0 0.0
    %1523 = vmatprep.subr.mxu0 0.0
    %1524 = vmatpush1.msra.mxu0 0.0
    %1525 = vmatprep.subr.mxu0 0.0
    %1526 = vmatpush1.msra.mxu0 0.0
    %1527 = vmatprep.subr.mxu0 0.0
    %1528 = vmatpush1.msra.mxu0 0.0
    %1529 = vmatprep.subr.mxu0 0.0
    %1530 = vmatpush1.msra.mxu0 0.0
    %1531 = vmatprep.subr.mxu0 0.0
    %1532 = vmatpush1.msra.mxu0 0.0
    %1533 = vmatprep.subr.mxu0 0.0
    %1534 = vmatpush1.msra.mxu0 0.0
    %1535 = vmatprep.subr.mxu0 0.0
    %1536 = vmatpush1.msra.mxu0 0.0
    %1537 = vmatprep.subr.mxu0 0.0
    %1538 = vmatpush1.msra.mxu0 0.0
    %1539 = vmatprep.subr.mxu0 0.0
    %1540 = vmatpush1.msra.mxu0 0.0
    %1541 = vmatprep.subr.mxu0 0.0
    %1542 = vmatpush1.msra.mxu0 0.0
    %1543 = vmatprep.subr.mxu0 0.0
    %1544 = vmatpush1.msra.mxu0 0.0
    %1545 = vmatprep.subr.mxu0 0.0
    %1546 = vmatpush1.msra.mxu0 0.0
    %1547 = vmatprep.subr.mxu0 0.0
    %1548 = vmatpush1.msra.mxu0 0.0
    %1549 = vmatprep.subr.mxu0 0.0
    %1550 = vmatpush1.msra.mxu0 0.0
    %1551 = vmatprep.subr.mxu0 0.0
    %1552 = vmatpush1.msra.mxu0 0.0
    %1553 = vmatprep.subr.mxu0 0.0
    %1554 = vmatpush1.msra.mxu0 0.0
    %1555 = vmatprep.subr.mxu0 0.0
    %1556 = vmatpush1.msra.mxu0 0.0
    %1557 = vmatprep.subr.mxu0 0.0
    %1558 = vmatpush1.msra.mxu0 0.0
    %1559 = vmatprep.subr.mxu0 0.0
    %1560 = vmatpush1.msra.mxu0 0.0
    %1561 = vmatprep.subr.mxu0 0.0
    %1562 = vmatpush1.msra.mxu0 0.0
    %1563 = vmatprep.mubr.f32.mxu0 0.0
    %1564 = vmatmul.mubr.f32.gmra.mrb[0].mxu0 %v1249
    %v1565 = vpop.f32.mrb[0].mxu0
    %v1566 = vadd.f32 0.0, %v1565
    %v1567 = vpop.f32.mrb[0].mxu0
    %1568 = vdwg.mxu0
    %v1570 = vsel %vm1251, %v1490, 0
    %1572 = vmatprep.subr.mxu0 0.0
    %1573 = vmatpush1.msra.mxu0 %v1570
    %1574 = vmatprep.subr.mxu0 0.0
    %1575 = vmatpush1.msra.mxu0 0.0
    %1576 = vmatprep.subr.mxu0 0.0
    %1577 = vmatpush1.msra.mxu0 0.0
    %1578 = vmatprep.subr.mxu0 0.0
    %1579 = vmatpush1.msra.mxu0 0.0
    %1580 = vmatprep.subr.mxu0 0.0
    %1581 = vmatpush1.msra.mxu0 0.0
    %1582 = vmatprep.subr.mxu0 0.0
    %1583 = vmatpush1.msra.mxu0 0.0
    %1584 = vmatprep.subr.mxu0 0.0
    %1585 = vmatpush1.msra.mxu0 0.0
    %1586 = vmatprep.subr.mxu0 0.0
    %1587 = vmatpush1.msra.mxu0 0.0
    %1588 = vmatprep.subr.mxu0 0.0
    %1589 = vmatpush1.msra.mxu0 0.0
    %1590 = vmatprep.subr.mxu0 0.0
    %1591 = vmatpush1.msra.mxu0 0.0
    %1592 = vmatprep.subr.mxu0 0.0
    %1593 = vmatpush1.msra.mxu0 0.0
    %1594 = vmatprep.subr.mxu0 0.0
    %1595 = vmatpush1.msra.mxu0 0.0
    %1596 = vmatprep.subr.mxu0 0.0
    %1597 = vmatpush1.msra.mxu0 0.0
    %1598 = vmatprep.subr.mxu0 0.0
    %1599 = vmatpush1.msra.mxu0 0.0
    %1600 = vmatprep.subr.mxu0 0.0
    %1601 = vmatpush1.msra.mxu0 0.0
    %1602 = vmatprep.subr.mxu0 0.0
    %1603 = vmatpush1.msra.mxu0 0.0
    %1604 = vmatprep.subr.mxu0 0.0
    %1605 = vmatpush1.msra.mxu0 0.0
    %1606 = vmatprep.subr.mxu0 0.0
    %1607 = vmatpush1.msra.mxu0 0.0
    %1608 = vmatprep.subr.mxu0 0.0
    %1609 = vmatpush1.msra.mxu0 0.0
    %1610 = vmatprep.subr.mxu0 0.0
    %1611 = vmatpush1.msra.mxu0 0.0
    %1612 = vmatprep.subr.mxu0 0.0
    %1613 = vmatpush1.msra.mxu0 0.0
    %1614 = vmatprep.subr.mxu0 0.0
    %1615 = vmatpush1.msra.mxu0 0.0
    %1616 = vmatprep.subr.mxu0 0.0
    %1617 = vmatpush1.msra.mxu0 0.0
    %1618 = vmatprep.subr.mxu0 0.0
    %1619 = vmatpush1.msra.mxu0 0.0
    %1620 = vmatprep.subr.mxu0 0.0
    %1621 = vmatpush1.msra.mxu0 0.0
    %1622 = vmatprep.subr.mxu0 0.0
    %1623 = vmatpush1.msra.mxu0 0.0
    %1624 = vmatprep.subr.mxu0 0.0
    %1625 = vmatpush1.msra.mxu0 0.0
    %1626 = vmatprep.subr.mxu0 0.0
    %1627 = vmatpush1.msra.mxu0 0.0
    %1628 = vmatprep.subr.mxu0 0.0
    %1629 = vmatpush1.msra.mxu0 0.0
    %1630 = vmatprep.subr.mxu0 0.0
    %1631 = vmatpush1.msra.mxu0 0.0
    %1632 = vmatprep.subr.mxu0 0.0
    %1633 = vmatpush1.msra.mxu0 0.0
    %1634 = vmatprep.subr.mxu0 0.0
    %1635 = vmatpush1.msra.mxu0 0.0
    %1636 = vmatprep.mubr.f32.mxu0 0.0
    %1637 = vmatmul.mubr.f32.gmra.mrb[0].mxu0 %v1328
    %v1638 = vpop.f32.mrb[0].mxu0
    %v1639 = vadd.f32 %v1566, %v1638
    %v1640 = vpop.f32.mrb[0].mxu0
    %1641 = vdwg.mxu0
    %v1643 = vlaneseq
    %v1644 = vshrl.u32 %v1643, 7
    %v1645 = vsub.s32 0, %v1644
    %v1646 = vrot.slane %v1492, %v1645
    %v1648 = vadd.f32 %v1639, %v1646
    %v1649 = vmax.f32 %v1648, 0.0
    %v1651 = vlaneseq
    %v1652 = vshrl.u32 %v1651, 7
    %v1653 = vsub.s32 0, %v1652
    %v1654 = vrot.slane %v1495, %v1653
    %v1657 = vsel %vm97, %v1649, 0
    %1659 = vmatprep.subr.mxu0 0.0
    %1660 = vmatpush1.msra.mxu0 %v1493
    %1661 = vmatprep.subr.mxu0 0.0
    %1662 = vmatpush1.msra.mxu0 %v1494
    %1663 = vmatprep.subr.mxu0 0.0
    %1664 = vmatpush1.msra.mxu0 0.0
    %1665 = vmatprep.subr.mxu0 0.0
    %1666 = vmatpush1.msra.mxu0 0.0
    %1667 = vmatprep.subr.mxu0 0.0
    %1668 = vmatpush1.msra.mxu0 0.0
    %1669 = vmatprep.subr.mxu0 0.0
    %1670 = vmatpush1.msra.mxu0 0.0
    %1671 = vmatprep.subr.mxu0 0.0
    %1672 = vmatpush1.msra.mxu0 0.0
    %1673 = vmatprep.subr.mxu0 0.0
    %1674 = vmatpush1.msra.mxu0 0.0
    %1675 = vmatprep.subr.mxu0 0.0
    %1676 = vmatpush1.msra.mxu0 0.0
    %1677 = vmatprep.subr.mxu0 0.0
    %1678 = vmatpush1.msra.mxu0 0.0
    %1679 = vmatprep.subr.mxu0 0.0
    %1680 = vmatpush1.msra.mxu0 0.0
    %1681 = vmatprep.subr.mxu0 0.0
    %1682 = vmatpush1.msra.mxu0 0.0
    %1683 = vmatprep.subr.mxu0 0.0
    %1684 = vmatpush1.msra.mxu0 0.0
    %1685 = vmatprep.subr.mxu0 0.0
    %1686 = vmatpush1.msra.mxu0 0.0
    %1687 = vmatprep.subr.mxu0 0.0
    %1688 = vmatpush1.msra.mxu0 0.0
    %1689 = vmatprep.subr.mxu0 0.0
    %1690 = vmatpush1.msra.mxu0 0.0
    %1691 = vmatprep.subr.mxu0 0.0
    %1692 = vmatpush1.msra.mxu0 0.0
    %1693 = vmatprep.subr.mxu0 0.0
    %1694 = vmatpush1.msra.mxu0 0.0
    %1695 = vmatprep.subr.mxu0 0.0
    %1696 = vmatpush1.msra.mxu0 0.0
    %1697 = vmatprep.subr.mxu0 0.0
    %1698 = vmatpush1.msra.mxu0 0.0
    %1699 = vmatprep.subr.mxu0 0.0
    %1700 = vmatpush1.msra.mxu0 0.0
    %1701 = vmatprep.subr.mxu0 0.0
    %1702 = vmatpush1.msra.mxu0 0.0
    %1703 = vmatprep.subr.mxu0 0.0
    %1704 = vmatpush1.msra.mxu0 0.0
    %1705 = vmatprep.subr.mxu0 0.0
    %1706 = vmatpush1.msra.mxu0 0.0
    %1707 = vmatprep.subr.mxu0 0.0
    %1708 = vmatpush1.msra.mxu0 0.0
    %1709 = vmatprep.subr.mxu0 0.0
    %1710 = vmatpush1.msra.mxu0 0.0
    %1711 = vmatprep.subr.mxu0 0.0
    %1712 = vmatpush1.msra.mxu0 0.0
    %1713 = vmatprep.subr.mxu0 0.0
    %1714 = vmatpush1.msra.mxu0 0.0
    %1715 = vmatprep.subr.mxu0 0.0
    %1716 = vmatpush1.msra.mxu0 0.0
    %1717 = vmatprep.subr.mxu0 0.0
    %1718 = vmatpush1.msra.mxu0 0.0
    %1719 = vmatprep.subr.mxu0 0.0
    %1720 = vmatpush1.msra.mxu0 0.0
    %1721 = vmatprep.subr.mxu0 0.0
    %1722 = vmatpush1.msra.mxu0 0.0
    %1723 = vmatprep.mubr.f32.mxu0 0.0
    %1724 = vmatmul.mubr.f32.gmra.mrb[0].mxu0 %v1657
    %v1725 = vpop.f32.mrb[0].mxu0
    %v1726 = vadd.f32 %v1654, %v1725
    %v1727 = vpop.f32.mrb[0].mxu0
    %1728 = vdwg.mxu0
    %v1729 = vadd.f32 %v1726, 1.5
    %v1730 = vxor.u32 %v1729, 2147483648
    %v1731 = vmul.f32 %v1730, 1.442695
    %v1732 = vpow.pop %v1731
    %v1733 = vadd.f32 %v1732, 1.0
    %v1734 = vrcp.pop %v1733
    %v1735 = vmul.f32 1.0, %v1734
    %v1737 = vmul.f32 %v1735, %v1327
    %v1738 = vsub.f32 1.0, %v1735
    %v1739 = vmul.f32 %v1738, %v1487
    %v1740 = vadd.f32 %v1737, %v1739
    %v1741 = vadd.f32 %v1735, 1e-06
    %v1742 = vlog2.pop %v1741
    %v1743 = vmul.f32 %v1742, 0.6931472
    %v1744 = vsel %vm1228, %v1743, 0.0
    %1745 = vadd.xlane.f32.xlu0 %v1744
    %v1746 = vpop.xlane.xlu0 %1745
    %v1747 = vrot.slane %v1746, 4
    %v1748 = vadd.f32 %v1746, %v1747
    %v1749 = vrot.slane %v1748, 2
    %v1750 = vadd.f32 %v1748, %v1749
    %v1751 = vrot.slane %v1750, 1
    %v1752 = vadd.f32 %v1750, %v1751
    %s1753 = vtos %v1752
    %s1754 = ssub.f32 %s1239, %s1753
    %s1755 = scalar_lea.vmem %s8, 4
    %v1756 = vld [vmem:[%s1755] sm:$0xf]
    %s1757 = scalar_lea.vmem %s9, 4
    %v1758 = vld [vmem:[%s1757] sm:$0xf]
    %s1759 = scalar_lea.vmem %s10, 1
    %v1760 = vld [vmem:[%s1759] sm:$0x1]
    %s1761 = scalar_lea.vmem %s11, 16
    %v1762 = vld [vmem:[%s1761] sm:$0xff]
    %v1763 = vld [vmem:[%s1761 + $0x8] sm:$0xff]
    %s1764 = scalar_lea.vmem %s12, 1
    %v1765 = vld [vmem:[%s1764] sm:$0x1]
    %v1767 = vsel %vm1251, %v1758, 0
    %1769 = vmatprep.subr.mxu0 0.0
    %1770 = vmatpush1.msra.mxu0 %v1767
    %1771 = vmatprep.subr.mxu0 0.0
    %1772 = vmatpush1.msra.mxu0 0.0
    %1773 = vmatprep.subr.mxu0 0.0
    %1774 = vmatpush1.msra.mxu0 0.0
    %1775 = vmatprep.subr.mxu0 0.0
    %1776 = vmatpush1.msra.mxu0 0.0
    %1777 = vmatprep.subr.mxu0 0.0
    %1778 = vmatpush1.msra.mxu0 0.0
    %1779 = vmatprep.subr.mxu0 0.0
    %1780 = vmatpush1.msra.mxu0 0.0
    %1781 = vmatprep.subr.mxu0 0.0
    %1782 = vmatpush1.msra.mxu0 0.0
    %1783 = vmatprep.subr.mxu0 0.0
    %1784 = vmatpush1.msra.mxu0 0.0
    %1785 = vmatprep.subr.mxu0 0.0
    %1786 = vmatpush1.msra.mxu0 0.0
    %1787 = vmatprep.subr.mxu0 0.0
    %1788 = vmatpush1.msra.mxu0 0.0
    %1789 = vmatprep.subr.mxu0 0.0
    %1790 = vmatpush1.msra.mxu0 0.0
    %1791 = vmatprep.subr.mxu0 0.0
    %1792 = vmatpush1.msra.mxu0 0.0
    %1793 = vmatprep.subr.mxu0 0.0
    %1794 = vmatpush1.msra.mxu0 0.0
    %1795 = vmatprep.subr.mxu0 0.0
    %1796 = vmatpush1.msra.mxu0 0.0
    %1797 = vmatprep.subr.mxu0 0.0
    %1798 = vmatpush1.msra.mxu0 0.0
    %1799 = vmatprep.subr.mxu0 0.0
    %1800 = vmatpush1.msra.mxu0 0.0
    %1801 = vmatprep.subr.mxu0 0.0
    %1802 = vmatpush1.msra.mxu0 0.0
    %1803 = vmatprep.subr.mxu0 0.0
    %1804 = vmatpush1.msra.mxu0 0.0
    %1805 = vmatprep.subr.mxu0 0.0
    %1806 = vmatpush1.msra.mxu0 0.0
    %1807 = vmatprep.subr.mxu0 0.0
    %1808 = vmatpush1.msra.mxu0 0.0
    %1809 = vmatprep.subr.mxu0 0.0
    %1810 = vmatpush1.msra.mxu0 0.0
    %1811 = vmatprep.subr.mxu0 0.0
    %1812 = vmatpush1.msra.mxu0 0.0
    %1813 = vmatprep.subr.mxu0 0.0
    %1814 = vmatpush1.msra.mxu0 0.0
    %1815 = vmatprep.subr.mxu0 0.0
    %1816 = vmatpush1.msra.mxu0 0.0
    %1817 = vmatprep.subr.mxu0 0.0
    %1818 = vmatpush1.msra.mxu0 0.0
    %1819 = vmatprep.subr.mxu0 0.0
    %1820 = vmatpush1.msra.mxu0 0.0
    %1821 = vmatprep.subr.mxu0 0.0
    %1822 = vmatpush1.msra.mxu0 0.0
    %1823 = vmatprep.subr.mxu0 0.0
    %1824 = vmatpush1.msra.mxu0 0.0
    %1825 = vmatprep.subr.mxu0 0.0
    %1826 = vmatpush1.msra.mxu0 0.0
    %1827 = vmatprep.subr.mxu0 0.0
    %1828 = vmatpush1.msra.mxu0 0.0
    %1829 = vmatprep.subr.mxu0 0.0
    %1830 = vmatpush1.msra.mxu0 0.0
    %1831 = vmatprep.subr.mxu0 0.0
    %1832 = vmatpush1.msra.mxu0 0.0
    %1833 = vmatprep.mubr.f32.mxu0 0.0
    %1834 = vmatmul.mubr.f32.gmra.mrb[0].mxu0 %v1249
    %v1835 = vpop.f32.mrb[0].mxu0
    %v1836 = vadd.f32 0.0, %v1835
    %v1837 = vpop.f32.mrb[0].mxu0
    %1838 = vdwg.mxu0
    %v1840 = vsel %vm1248, %v1740, 0
    %v1843 = vsel %vm1251, %v1756, 0
    %1845 = vmatprep.subr.mxu0 0.0
    %1846 = vmatpush1.msra.mxu0 %v1843
    %1847 = vmatprep.subr.mxu0 0.0
    %1848 = vmatpush1.msra.mxu0 0.0
    %1849 = vmatprep.subr.mxu0 0.0
    %1850 = vmatpush1.msra.mxu0 0.0
    %1851 = vmatprep.subr.mxu0 0.0
    %1852 = vmatpush1.msra.mxu0 0.0
    %1853 = vmatprep.subr.mxu0 0.0
    %1854 = vmatpush1.msra.mxu0 0.0
    %1855 = vmatprep.subr.mxu0 0.0
    %1856 = vmatpush1.msra.mxu0 0.0
    %1857 = vmatprep.subr.mxu0 0.0
    %1858 = vmatpush1.msra.mxu0 0.0
    %1859 = vmatprep.subr.mxu0 0.0
    %1860 = vmatpush1.msra.mxu0 0.0
    %1861 = vmatprep.subr.mxu0 0.0
    %1862 = vmatpush1.msra.mxu0 0.0
    %1863 = vmatprep.subr.mxu0 0.0
    %1864 = vmatpush1.msra.mxu0 0.0
    %1865 = vmatprep.subr.mxu0 0.0
    %1866 = vmatpush1.msra.mxu0 0.0
    %1867 = vmatprep.subr.mxu0 0.0
    %1868 = vmatpush1.msra.mxu0 0.0
    %1869 = vmatprep.subr.mxu0 0.0
    %1870 = vmatpush1.msra.mxu0 0.0
    %1871 = vmatprep.subr.mxu0 0.0
    %1872 = vmatpush1.msra.mxu0 0.0
    %1873 = vmatprep.subr.mxu0 0.0
    %1874 = vmatpush1.msra.mxu0 0.0
    %1875 = vmatprep.subr.mxu0 0.0
    %1876 = vmatpush1.msra.mxu0 0.0
    %1877 = vmatprep.subr.mxu0 0.0
    %1878 = vmatpush1.msra.mxu0 0.0
    %1879 = vmatprep.subr.mxu0 0.0
    %1880 = vmatpush1.msra.mxu0 0.0
    %1881 = vmatprep.subr.mxu0 0.0
    %1882 = vmatpush1.msra.mxu0 0.0
    %1883 = vmatprep.subr.mxu0 0.0
    %1884 = vmatpush1.msra.mxu0 0.0
    %1885 = vmatprep.subr.mxu0 0.0
    %1886 = vmatpush1.msra.mxu0 0.0
    %1887 = vmatprep.subr.mxu0 0.0
    %1888 = vmatpush1.msra.mxu0 0.0
    %1889 = vmatprep.subr.mxu0 0.0
    %1890 = vmatpush1.msra.mxu0 0.0
    %1891 = vmatprep.subr.mxu0 0.0
    %1892 = vmatpush1.msra.mxu0 0.0
    %1893 = vmatprep.subr.mxu0 0.0
    %1894 = vmatpush1.msra.mxu0 0.0
    %1895 = vmatprep.subr.mxu0 0.0
    %1896 = vmatpush1.msra.mxu0 0.0
    %1897 = vmatprep.subr.mxu0 0.0
    %1898 = vmatpush1.msra.mxu0 0.0
    %1899 = vmatprep.subr.mxu0 0.0
    %1900 = vmatpush1.msra.mxu0 0.0
    %1901 = vmatprep.subr.mxu0 0.0
    %1902 = vmatpush1.msra.mxu0 0.0
    %1903 = vmatprep.subr.mxu0 0.0
    %1904 = vmatpush1.msra.mxu0 0.0
    %1905 = vmatprep.subr.mxu0 0.0
    %1906 = vmatpush1.msra.mxu0 0.0
    %1907 = vmatprep.subr.mxu0 0.0
    %1908 = vmatpush1.msra.mxu0 0.0
    %1909 = vmatprep.mubr.f32.mxu0 0.0
    %1910 = vmatmul.mubr.f32.gmra.mrb[0].mxu0 %v1840
    %v1911 = vpop.f32.mrb[0].mxu0
    %v1912 = vadd.f32 %v1836, %v1911
    %v1913 = vpop.f32.mrb[0].mxu0
    %1914 = vdwg.mxu0
    %v1916 = vlaneseq
    %v1917 = vshrl.u32 %v1916, 7
    %v1918 = vsub.s32 0, %v1917
    %v1919 = vrot.slane %v1760, %v1918
    %v1921 = vadd.f32 %v1912, %v1919
    %v1922 = vmax.f32 %v1921, 0.0
    %v1924 = vlaneseq
    %v1925 = vshrl.u32 %v1924, 7
    %v1926 = vsub.s32 0, %v1925
    %v1927 = vrot.slane %v1765, %v1926
    %v1930 = vsel %vm97, %v1922, 0
    %1932 = vmatprep.subr.mxu0 0.0
    %1933 = vmatpush1.msra.mxu0 %v1762
    %1934 = vmatprep.subr.mxu0 0.0
    %1935 = vmatpush1.msra.mxu0 %v1763
    %1936 = vmatprep.subr.mxu0 0.0
    %1937 = vmatpush1.msra.mxu0 0.0
    %1938 = vmatprep.subr.mxu0 0.0
    %1939 = vmatpush1.msra.mxu0 0.0
    %1940 = vmatprep.subr.mxu0 0.0
    %1941 = vmatpush1.msra.mxu0 0.0
    %1942 = vmatprep.subr.mxu0 0.0
    %1943 = vmatpush1.msra.mxu0 0.0
    %1944 = vmatprep.subr.mxu0 0.0
    %1945 = vmatpush1.msra.mxu0 0.0
    %1946 = vmatprep.subr.mxu0 0.0
    %1947 = vmatpush1.msra.mxu0 0.0
    %1948 = vmatprep.subr.mxu0 0.0
    %1949 = vmatpush1.msra.mxu0 0.0
    %1950 = vmatprep.subr.mxu0 0.0
    %1951 = vmatpush1.msra.mxu0 0.0
    %1952 = vmatprep.subr.mxu0 0.0
    %1953 = vmatpush1.msra.mxu0 0.0
    %1954 = vmatprep.subr.mxu0 0.0
    %1955 = vmatpush1.msra.mxu0 0.0
    %1956 = vmatprep.subr.mxu0 0.0
    %1957 = vmatpush1.msra.mxu0 0.0
    %1958 = vmatprep.subr.mxu0 0.0
    %1959 = vmatpush1.msra.mxu0 0.0
    %1960 = vmatprep.subr.mxu0 0.0
    %1961 = vmatpush1.msra.mxu0 0.0
    %1962 = vmatprep.subr.mxu0 0.0
    %1963 = vmatpush1.msra.mxu0 0.0
    %1964 = vmatprep.subr.mxu0 0.0
    %1965 = vmatpush1.msra.mxu0 0.0
    %1966 = vmatprep.subr.mxu0 0.0
    %1967 = vmatpush1.msra.mxu0 0.0
    %1968 = vmatprep.subr.mxu0 0.0
    %1969 = vmatpush1.msra.mxu0 0.0
    %1970 = vmatprep.subr.mxu0 0.0
    %1971 = vmatpush1.msra.mxu0 0.0
    %1972 = vmatprep.subr.mxu0 0.0
    %1973 = vmatpush1.msra.mxu0 0.0
    %1974 = vmatprep.subr.mxu0 0.0
    %1975 = vmatpush1.msra.mxu0 0.0
    %1976 = vmatprep.subr.mxu0 0.0
    %1977 = vmatpush1.msra.mxu0 0.0
    %1978 = vmatprep.subr.mxu0 0.0
    %1979 = vmatpush1.msra.mxu0 0.0
    %1980 = vmatprep.subr.mxu0 0.0
    %1981 = vmatpush1.msra.mxu0 0.0
    %1982 = vmatprep.subr.mxu0 0.0
    %1983 = vmatpush1.msra.mxu0 0.0
    %1984 = vmatprep.subr.mxu0 0.0
    %1985 = vmatpush1.msra.mxu0 0.0
    %1986 = vmatprep.subr.mxu0 0.0
    %1987 = vmatpush1.msra.mxu0 0.0
    %1988 = vmatprep.subr.mxu0 0.0
    %1989 = vmatpush1.msra.mxu0 0.0
    %1990 = vmatprep.subr.mxu0 0.0
    %1991 = vmatpush1.msra.mxu0 0.0
    %1992 = vmatprep.subr.mxu0 0.0
    %1993 = vmatpush1.msra.mxu0 0.0
    %1994 = vmatprep.subr.mxu0 0.0
    %1995 = vmatpush1.msra.mxu0 0.0
    %1996 = vmatprep.mubr.f32.mxu0 0.0
    %1997 = vmatmul.mubr.f32.gmra.mrb[0].mxu0 %v1930
    %v1998 = vpop.f32.mrb[0].mxu0
    %v1999 = vadd.f32 %v1927, %v1998
    %v2000 = vpop.f32.mrb[0].mxu0
    %2001 = vdwg.mxu0
    %s2002 = scalar_lea.vmem %s13, 4
    %v2003 = vld [vmem:[%s2002] sm:$0xf]
    %s2004 = scalar_lea.vmem %s14, 4
    %v2005 = vld [vmem:[%s2004] sm:$0xf]
    %s2006 = scalar_lea.vmem %s15, 1
    %v2007 = vld [vmem:[%s2006] sm:$0x1]
    %s2008 = scalar_lea.vmem %s16, 16
    %v2009 = vld [vmem:[%s2008] sm:$0xff]
    %v2010 = vld [vmem:[%s2008 + $0x8] sm:$0xff]
    %s2011 = scalar_lea.vmem %s17, 1
    %v2012 = vld [vmem:[%s2011] sm:$0x1]
    %v2014 = vsel %vm1251, %v2005, 0
    %2016 = vmatprep.subr.mxu0 0.0
    %2017 = vmatpush1.msra.mxu0 %v2014
    %2018 = vmatprep.subr.mxu0 0.0
    %2019 = vmatpush1.msra.mxu0 0.0
    %2020 = vmatprep.subr.mxu0 0.0
    %2021 = vmatpush1.msra.mxu0 0.0
    %2022 = vmatprep.subr.mxu0 0.0
    %2023 = vmatpush1.msra.mxu0 0.0
    %2024 = vmatprep.subr.mxu0 0.0
    %2025 = vmatpush1.msra.mxu0 0.0
    %2026 = vmatprep.subr.mxu0 0.0
    %2027 = vmatpush1.msra.mxu0 0.0
    %2028 = vmatprep.subr.mxu0 0.0
    %2029 = vmatpush1.msra.mxu0 0.0
    %2030 = vmatprep.subr.mxu0 0.0
    %2031 = vmatpush1.msra.mxu0 0.0
    %2032 = vmatprep.subr.mxu0 0.0
    %2033 = vmatpush1.msra.mxu0 0.0
    %2034 = vmatprep.subr.mxu0 0.0
    %2035 = vmatpush1.msra.mxu0 0.0
    %2036 = vmatprep.subr.mxu0 0.0
    %2037 = vmatpush1.msra.mxu0 0.0
    %2038 = vmatprep.subr.mxu0 0.0
    %2039 = vmatpush1.msra.mxu0 0.0
    %2040 = vmatprep.subr.mxu0 0.0
    %2041 = vmatpush1.msra.mxu0 0.0
    %2042 = vmatprep.subr.mxu0 0.0
    %2043 = vmatpush1.msra.mxu0 0.0
    %2044 = vmatprep.subr.mxu0 0.0
    %2045 = vmatpush1.msra.mxu0 0.0
    %2046 = vmatprep.subr.mxu0 0.0
    %2047 = vmatpush1.msra.mxu0 0.0
    %2048 = vmatprep.subr.mxu0 0.0
    %2049 = vmatpush1.msra.mxu0 0.0
    %2050 = vmatprep.subr.mxu0 0.0
    %2051 = vmatpush1.msra.mxu0 0.0
    %2052 = vmatprep.subr.mxu0 0.0
    %2053 = vmatpush1.msra.mxu0 0.0
    %2054 = vmatprep.subr.mxu0 0.0
    %2055 = vmatpush1.msra.mxu0 0.0
    %2056 = vmatprep.subr.mxu0 0.0
    %2057 = vmatpush1.msra.mxu0 0.0
    %2058 = vmatprep.subr.mxu0 0.0
    %2059 = vmatpush1.msra.mxu0 0.0
    %2060 = vmatprep.subr.mxu0 0.0
    %2061 = vmatpush1.msra.mxu0 0.0
    %2062 = vmatprep.subr.mxu0 0.0
    %2063 = vmatpush1.msra.mxu0 0.0
    %2064 = vmatprep.subr.mxu0 0.0
    %2065 = vmatpush1.msra.mxu0 0.0
    %2066 = vmatprep.subr.mxu0 0.0
    %2067 = vmatpush1.msra.mxu0 0.0
    %2068 = vmatprep.subr.mxu0 0.0
    %2069 = vmatpush1.msra.mxu0 0.0
    %2070 = vmatprep.subr.mxu0 0.0
    %2071 = vmatpush1.msra.mxu0 0.0
    %2072 = vmatprep.subr.mxu0 0.0
    %2073 = vmatpush1.msra.mxu0 0.0
    %2074 = vmatprep.subr.mxu0 0.0
    %2075 = vmatpush1.msra.mxu0 0.0
    %2076 = vmatprep.subr.mxu0 0.0
    %2077 = vmatpush1.msra.mxu0 0.0
    %2078 = vmatprep.subr.mxu0 0.0
    %2079 = vmatpush1.msra.mxu0 0.0
    %2080 = vmatprep.mubr.f32.mxu0 0.0
    %2081 = vmatmul.mubr.f32.gmra.mrb[0].mxu0 %v1249
    %v2082 = vpop.f32.mrb[0].mxu0
    %v2083 = vadd.f32 0.0, %v2082
    %v2084 = vpop.f32.mrb[0].mxu0
    %2085 = vdwg.mxu0
    %v2087 = vsel %vm1251, %v2003, 0
    %2089 = vmatprep.subr.mxu0 0.0
    %2090 = vmatpush1.msra.mxu0 %v2087
    %2091 = vmatprep.subr.mxu0 0.0
    %2092 = vmatpush1.msra.mxu0 0.0
    %2093 = vmatprep.subr.mxu0 0.0
    %2094 = vmatpush1.msra.mxu0 0.0
    %2095 = vmatprep.subr.mxu0 0.0
    %2096 = vmatpush1.msra.mxu0 0.0
    %2097 = vmatprep.subr.mxu0 0.0
    %2098 = vmatpush1.msra.mxu0 0.0
    %2099 = vmatprep.subr.mxu0 0.0
    %2100 = vmatpush1.msra.mxu0 0.0
    %2101 = vmatprep.subr.mxu0 0.0
    %2102 = vmatpush1.msra.mxu0 0.0
    %2103 = vmatprep.subr.mxu0 0.0
    %2104 = vmatpush1.msra.mxu0 0.0
    %2105 = vmatprep.subr.mxu0 0.0
    %2106 = vmatpush1.msra.mxu0 0.0
    %2107 = vmatprep.subr.mxu0 0.0
    %2108 = vmatpush1.msra.mxu0 0.0
    %2109 = vmatprep.subr.mxu0 0.0
    %2110 = vmatpush1.msra.mxu0 0.0
    %2111 = vmatprep.subr.mxu0 0.0
    %2112 = vmatpush1.msra.mxu0 0.0
    %2113 = vmatprep.subr.mxu0 0.0
    %2114 = vmatpush1.msra.mxu0 0.0
    %2115 = vmatprep.subr.mxu0 0.0
    %2116 = vmatpush1.msra.mxu0 0.0
    %2117 = vmatprep.subr.mxu0 0.0
    %2118 = vmatpush1.msra.mxu0 0.0
    %2119 = vmatprep.subr.mxu0 0.0
    %2120 = vmatpush1.msra.mxu0 0.0
    %2121 = vmatprep.subr.mxu0 0.0
    %2122 = vmatpush1.msra.mxu0 0.0
    %2123 = vmatprep.subr.mxu0 0.0
    %2124 = vmatpush1.msra.mxu0 0.0
    %2125 = vmatprep.subr.mxu0 0.0
    %2126 = vmatpush1.msra.mxu0 0.0
    %2127 = vmatprep.subr.mxu0 0.0
    %2128 = vmatpush1.msra.mxu0 0.0
    %2129 = vmatprep.subr.mxu0 0.0
    %2130 = vmatpush1.msra.mxu0 0.0
    %2131 = vmatprep.subr.mxu0 0.0
    %2132 = vmatpush1.msra.mxu0 0.0
    %2133 = vmatprep.subr.mxu0 0.0
    %2134 = vmatpush1.msra.mxu0 0.0
    %2135 = vmatprep.subr.mxu0 0.0
    %2136 = vmatpush1.msra.mxu0 0.0
    %2137 = vmatprep.subr.mxu0 0.0
    %2138 = vmatpush1.msra.mxu0 0.0
    %2139 = vmatprep.subr.mxu0 0.0
    %2140 = vmatpush1.msra.mxu0 0.0
    %2141 = vmatprep.subr.mxu0 0.0
    %2142 = vmatpush1.msra.mxu0 0.0
    %2143 = vmatprep.subr.mxu0 0.0
    %2144 = vmatpush1.msra.mxu0 0.0
    %2145 = vmatprep.subr.mxu0 0.0
    %2146 = vmatpush1.msra.mxu0 0.0
    %2147 = vmatprep.subr.mxu0 0.0
    %2148 = vmatpush1.msra.mxu0 0.0
    %2149 = vmatprep.subr.mxu0 0.0
    %2150 = vmatpush1.msra.mxu0 0.0
    %2151 = vmatprep.subr.mxu0 0.0
    %2152 = vmatpush1.msra.mxu0 0.0
    %2153 = vmatprep.mubr.f32.mxu0 0.0
    %2154 = vmatmul.mubr.f32.gmra.mrb[0].mxu0 %v1840
    %v2155 = vpop.f32.mrb[0].mxu0
    %v2156 = vadd.f32 %v2083, %v2155
    %v2157 = vpop.f32.mrb[0].mxu0
    %2158 = vdwg.mxu0
    %v2160 = vlaneseq
    %v2161 = vshrl.u32 %v2160, 7
    %v2162 = vsub.s32 0, %v2161
    %v2163 = vrot.slane %v2007, %v2162
    %v2165 = vadd.f32 %v2156, %v2163
    %v2166 = vmax.f32 %v2165, 0.0
    %v2168 = vlaneseq
    %v2169 = vshrl.u32 %v2168, 7
    %v2170 = vsub.s32 0, %v2169
    %v2171 = vrot.slane %v2012, %v2170
    %v2174 = vsel %vm97, %v2166, 0
    %2176 = vmatprep.subr.mxu0 0.0
    %2177 = vmatpush1.msra.mxu0 %v2009
    %2178 = vmatprep.subr.mxu0 0.0
    %2179 = vmatpush1.msra.mxu0 %v2010
    %2180 = vmatprep.subr.mxu0 0.0
    %2181 = vmatpush1.msra.mxu0 0.0
    %2182 = vmatprep.subr.mxu0 0.0
    %2183 = vmatpush1.msra.mxu0 0.0
    %2184 = vmatprep.subr.mxu0 0.0
    %2185 = vmatpush1.msra.mxu0 0.0
    %2186 = vmatprep.subr.mxu0 0.0
    %2187 = vmatpush1.msra.mxu0 0.0
    %2188 = vmatprep.subr.mxu0 0.0
    %2189 = vmatpush1.msra.mxu0 0.0
    %2190 = vmatprep.subr.mxu0 0.0
    %2191 = vmatpush1.msra.mxu0 0.0
    %2192 = vmatprep.subr.mxu0 0.0
    %2193 = vmatpush1.msra.mxu0 0.0
    %2194 = vmatprep.subr.mxu0 0.0
    %2195 = vmatpush1.msra.mxu0 0.0
    %2196 = vmatprep.subr.mxu0 0.0
    %2197 = vmatpush1.msra.mxu0 0.0
    %2198 = vmatprep.subr.mxu0 0.0
    %2199 = vmatpush1.msra.mxu0 0.0
    %2200 = vmatprep.subr.mxu0 0.0
    %2201 = vmatpush1.msra.mxu0 0.0
    %2202 = vmatprep.subr.mxu0 0.0
    %2203 = vmatpush1.msra.mxu0 0.0
    %2204 = vmatprep.subr.mxu0 0.0
    %2205 = vmatpush1.msra.mxu0 0.0
    %2206 = vmatprep.subr.mxu0 0.0
    %2207 = vmatpush1.msra.mxu0 0.0
    %2208 = vmatprep.subr.mxu0 0.0
    %2209 = vmatpush1.msra.mxu0 0.0
    %2210 = vmatprep.subr.mxu0 0.0
    %2211 = vmatpush1.msra.mxu0 0.0
    %2212 = vmatprep.subr.mxu0 0.0
    %2213 = vmatpush1.msra.mxu0 0.0
    %2214 = vmatprep.subr.mxu0 0.0
    %2215 = vmatpush1.msra.mxu0 0.0
    %2216 = vmatprep.subr.mxu0 0.0
    %2217 = vmatpush1.msra.mxu0 0.0
    %2218 = vmatprep.subr.mxu0 0.0
    %2219 = vmatpush1.msra.mxu0 0.0
    %2220 = vmatprep.subr.mxu0 0.0
    %2221 = vmatpush1.msra.mxu0 0.0
    %2222 = vmatprep.subr.mxu0 0.0
    %2223 = vmatpush1.msra.mxu0 0.0
    %2224 = vmatprep.subr.mxu0 0.0
    %2225 = vmatpush1.msra.mxu0 0.0
    %2226 = vmatprep.subr.mxu0 0.0
    %2227 = vmatpush1.msra.mxu0 0.0
    %2228 = vmatprep.subr.mxu0 0.0
    %2229 = vmatpush1.msra.mxu0 0.0
    %2230 = vmatprep.subr.mxu0 0.0
    %2231 = vmatpush1.msra.mxu0 0.0
    %2232 = vmatprep.subr.mxu0 0.0
    %2233 = vmatpush1.msra.mxu0 0.0
    %2234 = vmatprep.subr.mxu0 0.0
    %2235 = vmatpush1.msra.mxu0 0.0
    %2236 = vmatprep.subr.mxu0 0.0
    %2237 = vmatpush1.msra.mxu0 0.0
    %2238 = vmatprep.subr.mxu0 0.0
    %2239 = vmatpush1.msra.mxu0 0.0
    %2240 = vmatprep.mubr.f32.mxu0 0.0
    %2241 = vmatmul.mubr.f32.gmra.mrb[0].mxu0 %v2174
    %v2242 = vpop.f32.mrb[0].mxu0
    %v2243 = vadd.f32 %v2171, %v2242
    %v2244 = vpop.f32.mrb[0].mxu0
    %2245 = vdwg.mxu0
    %v2246 = vadd.f32 %v2243, 1.5
    %v2247 = vxor.u32 %v2246, 2147483648
    %v2248 = vmul.f32 %v2247, 1.442695
    %v2249 = vpow.pop %v2248
    %v2250 = vadd.f32 %v2249, 1.0
    %v2251 = vrcp.pop %v2250
    %v2252 = vmul.f32 1.0, %v2251
    %v2253 = vmul.f32 %v2252, %v1740
    %v2254 = vsub.f32 1.0, %v2252
    %v2255 = vmul.f32 %v2254, %v1999
    %v2256 = vadd.f32 %v2253, %v2255
    %v2257 = vadd.f32 %v2252, 1e-06
    %v2258 = vlog2.pop %v2257
    %v2259 = vmul.f32 %v2258, 0.6931472
    %v2260 = vsel %vm1228, %v2259, 0.0
    %2261 = vadd.xlane.f32.xlu0 %v2260
    %v2262 = vpop.xlane.xlu0 %2261
    %v2263 = vrot.slane %v2262, 4
    %v2264 = vadd.f32 %v2262, %v2263
    %v2265 = vrot.slane %v2264, 2
    %v2266 = vadd.f32 %v2264, %v2265
    %v2267 = vrot.slane %v2266, 1
    %v2268 = vadd.f32 %v2266, %v2267
    %s2269 = vtos %v2268
    %s2270 = ssub.f32 %s1754, %s2269
    %2271 = vst.msk [vmem:[#allocation4] sm:$0x3] %vm1228, %v2256
    %v2272 = vstv %s2270
    %v2273 = vadd.f32 %v2272, 0.0
    %vm2274 = vcmask 0
    %2275 = vst.msk [vmem:[#allocation6] sm:$0x1] %vm2274, %v2273
    %v2276 = vld [vmem:[%s18] sm:$0xf]
    %v2277 = vld [vmem:[%s20] sm:$0x1]
    %v2279 = vlaneseq
    %v2280 = vshrl.u32 %v2279, 7
    %v2281 = vsub.s32 0, %v2280
    %v2282 = vrot.slane %v2277, %v2281
    %v2285 = vsel %vm1248, %v2256, 0
    %v2288 = vsel %vm1251, %v2276, 0
    %2290 = vmatprep.subr.mxu0 0.0
    %2291 = vmatpush1.msra.mxu0 %v2288
    %2292 = vmatprep.subr.mxu0 0.0
    %2293 = vmatpush1.msra.mxu0 0.0
    %2294 = vmatprep.subr.mxu0 0.0
    %2295 = vmatpush1.msra.mxu0 0.0
    %2296 = vmatprep.subr.mxu0 0.0
    %2297 = vmatpush1.msra.mxu0 0.0
    %2298 = vmatprep.subr.mxu0 0.0
    %2299 = vmatpush1.msra.mxu0 0.0
    %2300 = vmatprep.subr.mxu0 0.0
    %2301 = vmatpush1.msra.mxu0 0.0
    %2302 = vmatprep.subr.mxu0 0.0
    %2303 = vmatpush1.msra.mxu0 0.0
    %2304 = vmatprep.subr.mxu0 0.0
    %2305 = vmatpush1.msra.mxu0 0.0
    %2306 = vmatprep.subr.mxu0 0.0
    %2307 = vmatpush1.msra.mxu0 0.0
    %2308 = vmatprep.subr.mxu0 0.0
    %2309 = vmatpush1.msra.mxu0 0.0
    %2310 = vmatprep.subr.mxu0 0.0
    %2311 = vmatpush1.msra.mxu0 0.0
    %2312 = vmatprep.subr.mxu0 0.0
    %2313 = vmatpush1.msra.mxu0 0.0
    %2314 = vmatprep.subr.mxu0 0.0
    %2315 = vmatpush1.msra.mxu0 0.0
    %2316 = vmatprep.subr.mxu0 0.0
    %2317 = vmatpush1.msra.mxu0 0.0
    %2318 = vmatprep.subr.mxu0 0.0
    %2319 = vmatpush1.msra.mxu0 0.0
    %2320 = vmatprep.subr.mxu0 0.0
    %2321 = vmatpush1.msra.mxu0 0.0
    %2322 = vmatprep.subr.mxu0 0.0
    %2323 = vmatpush1.msra.mxu0 0.0
    %2324 = vmatprep.subr.mxu0 0.0
    %2325 = vmatpush1.msra.mxu0 0.0
    %2326 = vmatprep.subr.mxu0 0.0
    %2327 = vmatpush1.msra.mxu0 0.0
    %2328 = vmatprep.subr.mxu0 0.0
    %2329 = vmatpush1.msra.mxu0 0.0
    %2330 = vmatprep.subr.mxu0 0.0
    %2331 = vmatpush1.msra.mxu0 0.0
    %2332 = vmatprep.subr.mxu0 0.0
    %2333 = vmatpush1.msra.mxu0 0.0
    %2334 = vmatprep.subr.mxu0 0.0
    %2335 = vmatpush1.msra.mxu0 0.0
    %2336 = vmatprep.subr.mxu0 0.0
    %2337 = vmatpush1.msra.mxu0 0.0
    %2338 = vmatprep.subr.mxu0 0.0
    %2339 = vmatpush1.msra.mxu0 0.0
    %2340 = vmatprep.subr.mxu0 0.0
    %2341 = vmatpush1.msra.mxu0 0.0
    %2342 = vmatprep.subr.mxu0 0.0
    %2343 = vmatpush1.msra.mxu0 0.0
    %2344 = vmatprep.subr.mxu0 0.0
    %2345 = vmatpush1.msra.mxu0 0.0
    %2346 = vmatprep.subr.mxu0 0.0
    %2347 = vmatpush1.msra.mxu0 0.0
    %2348 = vmatprep.subr.mxu0 0.0
    %2349 = vmatpush1.msra.mxu0 0.0
    %2350 = vmatprep.subr.mxu0 0.0
    %2351 = vmatpush1.msra.mxu0 0.0
    %2352 = vmatprep.subr.mxu0 0.0
    %2353 = vmatpush1.msra.mxu0 0.0
    %2354 = vmatprep.mubr.f32.mxu0 0.0
    %2355 = vmatmul.mubr.f32.gmra.mrb[0].mxu0 %v2285
    %v2356 = vpop.f32.mrb[0].mxu0
    %v2357 = vadd.f32 %v2282, %v2356
    %v2358 = vpop.f32.mrb[0].mxu0
    %2359 = vdwg.mxu0
    %v2360 = vld [vmem:[%s19] sm:$0xff]
    %v2361 = vld [vmem:[%s19 + $0x8] sm:$0xff]
    %v2362 = vld [vmem:[%s19 + $0x10] sm:$0xff]
    %v2363 = vld [vmem:[%s19 + $0x18] sm:$0xff]
    %2364 = vmatprep.subr.mxu0 0.0
    %2365 = vmatpush1.msra.mxu0 %v2360
    %2366 = vmatprep.subr.mxu0 0.0
    %2367 = vmatpush1.msra.mxu0 %v2361
    %2368 = vmatprep.subr.mxu0 0.0
    %2369 = vmatpush1.msra.mxu0 %v2362
    %2370 = vmatprep.subr.mxu0 0.0
    %2371 = vmatpush1.msra.mxu0 %v2363
    %2372 = vmatprep.subr.mxu0 0.0
    %2373 = vmatpush1.msra.mxu0 0.0
    %2374 = vmatprep.subr.mxu0 0.0
    %2375 = vmatpush1.msra.mxu0 0.0
    %2376 = vmatprep.subr.mxu0 0.0
    %2377 = vmatpush1.msra.mxu0 0.0
    %2378 = vmatprep.subr.mxu0 0.0
    %2379 = vmatpush1.msra.mxu0 0.0
    %2380 = vmatprep.subr.mxu0 0.0
    %2381 = vmatpush1.msra.mxu0 0.0
    %2382 = vmatprep.subr.mxu0 0.0
    %2383 = vmatpush1.msra.mxu0 0.0
    %2384 = vmatprep.subr.mxu0 0.0
    %2385 = vmatpush1.msra.mxu0 0.0
    %2386 = vmatprep.subr.mxu0 0.0
    %2387 = vmatpush1.msra.mxu0 0.0
    %2388 = vmatprep.subr.mxu0 0.0
    %2389 = vmatpush1.msra.mxu0 0.0
    %2390 = vmatprep.subr.mxu0 0.0
    %2391 = vmatpush1.msra.mxu0 0.0
    %2392 = vmatprep.subr.mxu0 0.0
    %2393 = vmatpush1.msra.mxu0 0.0
    %2394 = vmatprep.subr.mxu0 0.0
    %2395 = vmatpush1.msra.mxu0 0.0
    %2396 = vmatprep.subr.mxu0 0.0
    %2397 = vmatpush1.msra.mxu0 0.0
    %2398 = vmatprep.subr.mxu0 0.0
    %2399 = vmatpush1.msra.mxu0 0.0
    %2400 = vmatprep.subr.mxu0 0.0
    %2401 = vmatpush1.msra.mxu0 0.0
    %2402 = vmatprep.subr.mxu0 0.0
    %2403 = vmatpush1.msra.mxu0 0.0
    %2404 = vmatprep.subr.mxu0 0.0
    %2405 = vmatpush1.msra.mxu0 0.0
    %2406 = vmatprep.subr.mxu0 0.0
    %2407 = vmatpush1.msra.mxu0 0.0
    %2408 = vmatprep.subr.mxu0 0.0
    %2409 = vmatpush1.msra.mxu0 0.0
    %2410 = vmatprep.subr.mxu0 0.0
    %2411 = vmatpush1.msra.mxu0 0.0
    %2412 = vmatprep.subr.mxu0 0.0
    %2413 = vmatpush1.msra.mxu0 0.0
    %2414 = vmatprep.subr.mxu0 0.0
    %2415 = vmatpush1.msra.mxu0 0.0
    %2416 = vmatprep.subr.mxu0 0.0
    %2417 = vmatpush1.msra.mxu0 0.0
    %2418 = vmatprep.subr.mxu0 0.0
    %2419 = vmatpush1.msra.mxu0 0.0
    %2420 = vmatprep.subr.mxu0 0.0
    %2421 = vmatpush1.msra.mxu0 0.0
    %2422 = vmatprep.subr.mxu0 0.0
    %2423 = vmatpush1.msra.mxu0 0.0
    %2424 = vmatprep.subr.mxu0 0.0
    %2425 = vmatpush1.msra.mxu0 0.0
    %2426 = vmatprep.subr.mxu0 0.0
    %2427 = vmatpush1.msra.mxu0 0.0
    %2428 = vmatprep.mubr.f32.mxu0 0.0
    %2429 = vmatmul.mubr.f32.gmra.mrb[0].mxu0 %v275
    %v2430 = vpop.f32.mrb[0].mxu0
    %v2431 = vadd.f32 0.0, %v2430
    %v2432 = vpop.f32.mrb[0].mxu0
    %2433 = vdwg.mxu0
    %v2434 = vadd.f32 %v2357, %v2431
    %v2435 = vxor.u32 %v2434, 2147483648
    %v2436 = vmul.f32 %v2435, 1.442695
    %v2437 = vpow.pop %v2436
    %v2438 = vadd.f32 %v2437, 1.0
    %v2439 = vrcp.pop %v2438
    %v2440 = vmul.f32 1.0, %v2439
    %v2441 = vtanh.pop %v2434
    %v2442 = vmul.f32 %v2440, 0.0
    %2444 = vrot.lane.b32.xlu0 %v2441, 32
    %v2445 = vpop.permute.xlu0 %2444
    %v2447 = vmul.f32 %v2440, %v2445
    %2449 = vrot.lane.b32.xlu0 %v2447, 32
    %v2450 = vpop.permute.xlu0 %2449
    %v2452 = vadd.f32 %v2442, %v2450
    %v2453 = vtanh.pop %v2452
    %2455 = vrot.lane.b32.xlu0 %v2453, 32
    %v2456 = vpop.permute.xlu0 %2455
    %v2458 = vmul.f32 %v2440, %v2456
    %2460 = vrot.lane.b32.xlu0 %v2458, 64
    %v2461 = vpop.permute.xlu0 %2460
    %v2462 = vsel %vm273, %v2461, 0
    %2464 = vmatprep.subr.mxu0 0.0
    %2465 = vmatpush1.msra.mxu0 %v2360
    %2466 = vmatprep.subr.mxu0 0.0
    %2467 = vmatpush1.msra.mxu0 %v2361
    %2468 = vmatprep.subr.mxu0 0.0
    %2469 = vmatpush1.msra.mxu0 %v2362
    %2470 = vmatprep.subr.mxu0 0.0
    %2471 = vmatpush1.msra.mxu0 %v2363
    %2472 = vmatprep.subr.mxu0 0.0
    %2473 = vmatpush1.msra.mxu0 0.0
    %2474 = vmatprep.subr.mxu0 0.0
    %2475 = vmatpush1.msra.mxu0 0.0
    %2476 = vmatprep.subr.mxu0 0.0
    %2477 = vmatpush1.msra.mxu0 0.0
    %2478 = vmatprep.subr.mxu0 0.0
    %2479 = vmatpush1.msra.mxu0 0.0
    %2480 = vmatprep.subr.mxu0 0.0
    %2481 = vmatpush1.msra.mxu0 0.0
    %2482 = vmatprep.subr.mxu0 0.0
    %2483 = vmatpush1.msra.mxu0 0.0
    %2484 = vmatprep.subr.mxu0 0.0
    %2485 = vmatpush1.msra.mxu0 0.0
    %2486 = vmatprep.subr.mxu0 0.0
    %2487 = vmatpush1.msra.mxu0 0.0
    %2488 = vmatprep.subr.mxu0 0.0
    %2489 = vmatpush1.msra.mxu0 0.0
    %2490 = vmatprep.subr.mxu0 0.0
    %2491 = vmatpush1.msra.mxu0 0.0
    %2492 = vmatprep.subr.mxu0 0.0
    %2493 = vmatpush1.msra.mxu0 0.0
    %2494 = vmatprep.subr.mxu0 0.0
    %2495 = vmatpush1.msra.mxu0 0.0
    %2496 = vmatprep.subr.mxu0 0.0
    %2497 = vmatpush1.msra.mxu0 0.0
    %2498 = vmatprep.subr.mxu0 0.0
    %2499 = vmatpush1.msra.mxu0 0.0
    %2500 = vmatprep.subr.mxu0 0.0
    %2501 = vmatpush1.msra.mxu0 0.0
    %2502 = vmatprep.subr.mxu0 0.0
    %2503 = vmatpush1.msra.mxu0 0.0
    %2504 = vmatprep.subr.mxu0 0.0
    %2505 = vmatpush1.msra.mxu0 0.0
    %2506 = vmatprep.subr.mxu0 0.0
    %2507 = vmatpush1.msra.mxu0 0.0
    %2508 = vmatprep.subr.mxu0 0.0
    %2509 = vmatpush1.msra.mxu0 0.0
    %2510 = vmatprep.subr.mxu0 0.0
    %2511 = vmatpush1.msra.mxu0 0.0
    %2512 = vmatprep.subr.mxu0 0.0
    %2513 = vmatpush1.msra.mxu0 0.0
    %2514 = vmatprep.subr.mxu0 0.0
    %2515 = vmatpush1.msra.mxu0 0.0
    %2516 = vmatprep.subr.mxu0 0.0
    %2517 = vmatpush1.msra.mxu0 0.0
    %2518 = vmatprep.subr.mxu0 0.0
    %2519 = vmatpush1.msra.mxu0 0.0
    %2520 = vmatprep.subr.mxu0 0.0
    %2521 = vmatpush1.msra.mxu0 0.0
    %2522 = vmatprep.subr.mxu0 0.0
    %2523 = vmatpush1.msra.mxu0 0.0
    %2524 = vmatprep.subr.mxu0 0.0
    %2525 = vmatpush1.msra.mxu0 0.0
    %2526 = vmatprep.subr.mxu0 0.0
    %2527 = vmatpush1.msra.mxu0 0.0
    %2528 = vmatprep.mubr.f32.mxu0 0.0
    %2529 = vmatmul.mubr.f32.gmra.mrb[0].mxu0 %v2462
    %v2530 = vpop.f32.mrb[0].mxu0
    %v2531 = vadd.f32 0.0, %v2530
    %v2532 = vpop.f32.mrb[0].mxu0
    %2533 = vdwg.mxu0
    %v2534 = vadd.f32 %v2357, %v2531
    %v2535 = vxor.u32 %v2534, 2147483648
    %v2536 = vmul.f32 %v2535, 1.442695
    %v2537 = vpow.pop %v2536
    %v2538 = vadd.f32 %v2537, 1.0
    %v2539 = vrcp.pop %v2538
    %v2540 = vmul.f32 1.0, %v2539
    %v2541 = vtanh.pop %v2534
    %v2542 = vmul.f32 %v2540, %v2452
    %2544 = vrot.lane.b32.xlu0 %v2541, 32
    %v2545 = vpop.permute.xlu0 %2544
    %v2547 = vmul.f32 %v2540, %v2545
    %2549 = vrot.lane.b32.xlu0 %v2547, 32
    %v2550 = vpop.permute.xlu0 %2549
    %v2552 = vadd.f32 %v2542, %v2550
    %v2553 = vtanh.pop %v2552
    %2555 = vrot.lane.b32.xlu0 %v2553, 32
    %v2556 = vpop.permute.xlu0 %2555
    %v2558 = vmul.f32 %v2540, %v2556
    %2560 = vrot.lane.b32.xlu0 %v2558, 64
    %v2561 = vpop.permute.xlu0 %2560
    %v2562 = vsel %vm273, %v2561, 0
    %2564 = vmatprep.subr.mxu0 0.0
    %2565 = vmatpush1.msra.mxu0 %v2360
    %2566 = vmatprep.subr.mxu0 0.0
    %2567 = vmatpush1.msra.mxu0 %v2361
    %2568 = vmatprep.subr.mxu0 0.0
    %2569 = vmatpush1.msra.mxu0 %v2362
    %2570 = vmatprep.subr.mxu0 0.0
    %2571 = vmatpush1.msra.mxu0 %v2363
    %2572 = vmatprep.subr.mxu0 0.0
    %2573 = vmatpush1.msra.mxu0 0.0
    %2574 = vmatprep.subr.mxu0 0.0
    %2575 = vmatpush1.msra.mxu0 0.0
    %2576 = vmatprep.subr.mxu0 0.0
    %2577 = vmatpush1.msra.mxu0 0.0
    %2578 = vmatprep.subr.mxu0 0.0
    %2579 = vmatpush1.msra.mxu0 0.0
    %2580 = vmatprep.subr.mxu0 0.0
    %2581 = vmatpush1.msra.mxu0 0.0
    %2582 = vmatprep.subr.mxu0 0.0
    %2583 = vmatpush1.msra.mxu0 0.0
    %2584 = vmatprep.subr.mxu0 0.0
    %2585 = vmatpush1.msra.mxu0 0.0
    %2586 = vmatprep.subr.mxu0 0.0
    %2587 = vmatpush1.msra.mxu0 0.0
    %2588 = vmatprep.subr.mxu0 0.0
    %2589 = vmatpush1.msra.mxu0 0.0
    %2590 = vmatprep.subr.mxu0 0.0
    %2591 = vmatpush1.msra.mxu0 0.0
    %2592 = vmatprep.subr.mxu0 0.0
    %2593 = vmatpush1.msra.mxu0 0.0
    %2594 = vmatprep.subr.mxu0 0.0
    %2595 = vmatpush1.msra.mxu0 0.0
    %2596 = vmatprep.subr.mxu0 0.0
    %2597 = vmatpush1.msra.mxu0 0.0
    %2598 = vmatprep.subr.mxu0 0.0
    %2599 = vmatpush1.msra.mxu0 0.0
    %2600 = vmatprep.subr.mxu0 0.0
    %2601 = vmatpush1.msra.mxu0 0.0
    %2602 = vmatprep.subr.mxu0 0.0
    %2603 = vmatpush1.msra.mxu0 0.0
    %2604 = vmatprep.subr.mxu0 0.0
    %2605 = vmatpush1.msra.mxu0 0.0
    %2606 = vmatprep.subr.mxu0 0.0
    %2607 = vmatpush1.msra.mxu0 0.0
    %2608 = vmatprep.subr.mxu0 0.0
    %2609 = vmatpush1.msra.mxu0 0.0
    %2610 = vmatprep.subr.mxu0 0.0
    %2611 = vmatpush1.msra.mxu0 0.0
    %2612 = vmatprep.subr.mxu0 0.0
    %2613 = vmatpush1.msra.mxu0 0.0
    %2614 = vmatprep.subr.mxu0 0.0
    %2615 = vmatpush1.msra.mxu0 0.0
    %2616 = vmatprep.subr.mxu0 0.0
    %2617 = vmatpush1.msra.mxu0 0.0
    %2618 = vmatprep.subr.mxu0 0.0
    %2619 = vmatpush1.msra.mxu0 0.0
    %2620 = vmatprep.subr.mxu0 0.0
    %2621 = vmatpush1.msra.mxu0 0.0
    %2622 = vmatprep.subr.mxu0 0.0
    %2623 = vmatpush1.msra.mxu0 0.0
    %2624 = vmatprep.subr.mxu0 0.0
    %2625 = vmatpush1.msra.mxu0 0.0
    %2626 = vmatprep.subr.mxu0 0.0
    %2627 = vmatpush1.msra.mxu0 0.0
    %2628 = vmatprep.mubr.f32.mxu0 0.0
    %2629 = vmatmul.mubr.f32.gmra.mrb[0].mxu0 %v2562
    %v2630 = vpop.f32.mrb[0].mxu0
    %v2631 = vadd.f32 0.0, %v2630
    %v2632 = vpop.f32.mrb[0].mxu0
    %2633 = vdwg.mxu0
    %v2634 = vadd.f32 %v2357, %v2631
    %v2635 = vxor.u32 %v2634, 2147483648
    %v2636 = vmul.f32 %v2635, 1.442695
    %v2637 = vpow.pop %v2636
    %v2638 = vadd.f32 %v2637, 1.0
    %v2639 = vrcp.pop %v2638
    %v2640 = vmul.f32 1.0, %v2639
    %v2641 = vtanh.pop %v2634
    %v2642 = vmul.f32 %v2640, %v2552
    %2644 = vrot.lane.b32.xlu0 %v2641, 32
    %v2645 = vpop.permute.xlu0 %2644
    %v2647 = vmul.f32 %v2640, %v2645
    %2649 = vrot.lane.b32.xlu0 %v2647, 32
    %v2650 = vpop.permute.xlu0 %2649
    %v2652 = vadd.f32 %v2642, %v2650
    %v2653 = vtanh.pop %v2652
    %2655 = vrot.lane.b32.xlu0 %v2653, 32
    %v2656 = vpop.permute.xlu0 %2655
    %v2658 = vmul.f32 %v2640, %v2656
    %2660 = vrot.lane.b32.xlu0 %v2658, 64
    %v2661 = vpop.permute.xlu0 %2660
    %v2662 = vsel %vm273, %v2661, 0
    %2664 = vmatprep.subr.mxu0 0.0
    %2665 = vmatpush1.msra.mxu0 %v2360
    %2666 = vmatprep.subr.mxu0 0.0
    %2667 = vmatpush1.msra.mxu0 %v2361
    %2668 = vmatprep.subr.mxu0 0.0
    %2669 = vmatpush1.msra.mxu0 %v2362
    %2670 = vmatprep.subr.mxu0 0.0
    %2671 = vmatpush1.msra.mxu0 %v2363
    %2672 = vmatprep.subr.mxu0 0.0
    %2673 = vmatpush1.msra.mxu0 0.0
    %2674 = vmatprep.subr.mxu0 0.0
    %2675 = vmatpush1.msra.mxu0 0.0
    %2676 = vmatprep.subr.mxu0 0.0
    %2677 = vmatpush1.msra.mxu0 0.0
    %2678 = vmatprep.subr.mxu0 0.0
    %2679 = vmatpush1.msra.mxu0 0.0
    %2680 = vmatprep.subr.mxu0 0.0
    %2681 = vmatpush1.msra.mxu0 0.0
    %2682 = vmatprep.subr.mxu0 0.0
    %2683 = vmatpush1.msra.mxu0 0.0
    %2684 = vmatprep.subr.mxu0 0.0
    %2685 = vmatpush1.msra.mxu0 0.0
    %2686 = vmatprep.subr.mxu0 0.0
    %2687 = vmatpush1.msra.mxu0 0.0
    %2688 = vmatprep.subr.mxu0 0.0
    %2689 = vmatpush1.msra.mxu0 0.0
    %2690 = vmatprep.subr.mxu0 0.0
    %2691 = vmatpush1.msra.mxu0 0.0
    %2692 = vmatprep.subr.mxu0 0.0
    %2693 = vmatpush1.msra.mxu0 0.0
    %2694 = vmatprep.subr.mxu0 0.0
    %2695 = vmatpush1.msra.mxu0 0.0
    %2696 = vmatprep.subr.mxu0 0.0
    %2697 = vmatpush1.msra.mxu0 0.0
    %2698 = vmatprep.subr.mxu0 0.0
    %2699 = vmatpush1.msra.mxu0 0.0
    %2700 = vmatprep.subr.mxu0 0.0
    %2701 = vmatpush1.msra.mxu0 0.0
    %2702 = vmatprep.subr.mxu0 0.0
    %2703 = vmatpush1.msra.mxu0 0.0
    %2704 = vmatprep.subr.mxu0 0.0
    %2705 = vmatpush1.msra.mxu0 0.0
    %2706 = vmatprep.subr.mxu0 0.0
    %2707 = vmatpush1.msra.mxu0 0.0
    %2708 = vmatprep.subr.mxu0 0.0
    %2709 = vmatpush1.msra.mxu0 0.0
    %2710 = vmatprep.subr.mxu0 0.0
    %2711 = vmatpush1.msra.mxu0 0.0
    %2712 = vmatprep.subr.mxu0 0.0
    %2713 = vmatpush1.msra.mxu0 0.0
    %2714 = vmatprep.subr.mxu0 0.0
    %2715 = vmatpush1.msra.mxu0 0.0
    %2716 = vmatprep.subr.mxu0 0.0
    %2717 = vmatpush1.msra.mxu0 0.0
    %2718 = vmatprep.subr.mxu0 0.0
    %2719 = vmatpush1.msra.mxu0 0.0
    %2720 = vmatprep.subr.mxu0 0.0
    %2721 = vmatpush1.msra.mxu0 0.0
    %2722 = vmatprep.subr.mxu0 0.0
    %2723 = vmatpush1.msra.mxu0 0.0
    %2724 = vmatprep.subr.mxu0 0.0
    %2725 = vmatpush1.msra.mxu0 0.0
    %2726 = vmatprep.subr.mxu0 0.0
    %2727 = vmatpush1.msra.mxu0 0.0
    %2728 = vmatprep.mubr.f32.mxu0 0.0
    %2729 = vmatmul.mubr.f32.gmra.mrb[0].mxu0 %v2662
    %v2730 = vpop.f32.mrb[0].mxu0
    %v2731 = vadd.f32 0.0, %v2730
    %v2732 = vpop.f32.mrb[0].mxu0
    %2733 = vdwg.mxu0
    %v2734 = vadd.f32 %v2357, %v2731
    %v2735 = vxor.u32 %v2734, 2147483648
    %v2736 = vmul.f32 %v2735, 1.442695
    %v2737 = vpow.pop %v2736
    %v2738 = vadd.f32 %v2737, 1.0
    %v2739 = vrcp.pop %v2738
    %v2740 = vmul.f32 1.0, %v2739
    %v2741 = vtanh.pop %v2734
    %v2742 = vmul.f32 %v2740, %v2652
    %2744 = vrot.lane.b32.xlu0 %v2741, 32
    %v2745 = vpop.permute.xlu0 %2744
    %v2747 = vmul.f32 %v2740, %v2745
    %2749 = vrot.lane.b32.xlu0 %v2747, 32
    %v2750 = vpop.permute.xlu0 %2749
    %v2752 = vadd.f32 %v2742, %v2750
    %v2753 = vtanh.pop %v2752
    %2755 = vrot.lane.b32.xlu0 %v2753, 32
    %v2756 = vpop.permute.xlu0 %2755
    %v2758 = vmul.f32 %v2740, %v2756
    %2760 = vrot.lane.b32.xlu0 %v2758, 64
    %v2761 = vpop.permute.xlu0 %2760
    %v2762 = vsel %vm273, %v2761, 0
    %2764 = vmatprep.subr.mxu0 0.0
    %2765 = vmatpush1.msra.mxu0 %v2360
    %2766 = vmatprep.subr.mxu0 0.0
    %2767 = vmatpush1.msra.mxu0 %v2361
    %2768 = vmatprep.subr.mxu0 0.0
    %2769 = vmatpush1.msra.mxu0 %v2362
    %2770 = vmatprep.subr.mxu0 0.0
    %2771 = vmatpush1.msra.mxu0 %v2363
    %2772 = vmatprep.subr.mxu0 0.0
    %2773 = vmatpush1.msra.mxu0 0.0
    %2774 = vmatprep.subr.mxu0 0.0
    %2775 = vmatpush1.msra.mxu0 0.0
    %2776 = vmatprep.subr.mxu0 0.0
    %2777 = vmatpush1.msra.mxu0 0.0
    %2778 = vmatprep.subr.mxu0 0.0
    %2779 = vmatpush1.msra.mxu0 0.0
    %2780 = vmatprep.subr.mxu0 0.0
    %2781 = vmatpush1.msra.mxu0 0.0
    %2782 = vmatprep.subr.mxu0 0.0
    %2783 = vmatpush1.msra.mxu0 0.0
    %2784 = vmatprep.subr.mxu0 0.0
    %2785 = vmatpush1.msra.mxu0 0.0
    %2786 = vmatprep.subr.mxu0 0.0
    %2787 = vmatpush1.msra.mxu0 0.0
    %2788 = vmatprep.subr.mxu0 0.0
    %2789 = vmatpush1.msra.mxu0 0.0
    %2790 = vmatprep.subr.mxu0 0.0
    %2791 = vmatpush1.msra.mxu0 0.0
    %2792 = vmatprep.subr.mxu0 0.0
    %2793 = vmatpush1.msra.mxu0 0.0
    %2794 = vmatprep.subr.mxu0 0.0
    %2795 = vmatpush1.msra.mxu0 0.0
    %2796 = vmatprep.subr.mxu0 0.0
    %2797 = vmatpush1.msra.mxu0 0.0
    %2798 = vmatprep.subr.mxu0 0.0
    %2799 = vmatpush1.msra.mxu0 0.0
    %2800 = vmatprep.subr.mxu0 0.0
    %2801 = vmatpush1.msra.mxu0 0.0
    %2802 = vmatprep.subr.mxu0 0.0
    %2803 = vmatpush1.msra.mxu0 0.0
    %2804 = vmatprep.subr.mxu0 0.0
    %2805 = vmatpush1.msra.mxu0 0.0
    %2806 = vmatprep.subr.mxu0 0.0
    %2807 = vmatpush1.msra.mxu0 0.0
    %2808 = vmatprep.subr.mxu0 0.0
    %2809 = vmatpush1.msra.mxu0 0.0
    %2810 = vmatprep.subr.mxu0 0.0
    %2811 = vmatpush1.msra.mxu0 0.0
    %2812 = vmatprep.subr.mxu0 0.0
    %2813 = vmatpush1.msra.mxu0 0.0
    %2814 = vmatprep.subr.mxu0 0.0
    %2815 = vmatpush1.msra.mxu0 0.0
    %2816 = vmatprep.subr.mxu0 0.0
    %2817 = vmatpush1.msra.mxu0 0.0
    %2818 = vmatprep.subr.mxu0 0.0
    %2819 = vmatpush1.msra.mxu0 0.0
    %2820 = vmatprep.subr.mxu0 0.0
    %2821 = vmatpush1.msra.mxu0 0.0
    %2822 = vmatprep.subr.mxu0 0.0
    %2823 = vmatpush1.msra.mxu0 0.0
    %2824 = vmatprep.subr.mxu0 0.0
    %2825 = vmatpush1.msra.mxu0 0.0
    %2826 = vmatprep.subr.mxu0 0.0
    %2827 = vmatpush1.msra.mxu0 0.0
    %2828 = vmatprep.mubr.f32.mxu0 0.0
    %2829 = vmatmul.mubr.f32.gmra.mrb[0].mxu0 %v2762
    %v2830 = vpop.f32.mrb[0].mxu0
    %v2831 = vadd.f32 0.0, %v2830
    %v2832 = vpop.f32.mrb[0].mxu0
    %2833 = vdwg.mxu0
    %v2834 = vadd.f32 %v2357, %v2831
    %v2835 = vxor.u32 %v2834, 2147483648
    %v2836 = vmul.f32 %v2835, 1.442695
    %v2837 = vpow.pop %v2836
    %v2838 = vadd.f32 %v2837, 1.0
    %v2839 = vrcp.pop %v2838
    %v2840 = vmul.f32 1.0, %v2839
    %v2841 = vtanh.pop %v2834
    %v2842 = vmul.f32 %v2840, %v2752
    %2844 = vrot.lane.b32.xlu0 %v2841, 32
    %v2845 = vpop.permute.xlu0 %2844
    %v2847 = vmul.f32 %v2840, %v2845
    %2849 = vrot.lane.b32.xlu0 %v2847, 32
    %v2850 = vpop.permute.xlu0 %2849
    %v2852 = vadd.f32 %v2842, %v2850
    %v2853 = vtanh.pop %v2852
    %2855 = vrot.lane.b32.xlu0 %v2853, 32
    %v2856 = vpop.permute.xlu0 %2855
    %v2858 = vmul.f32 %v2840, %v2856
    %2860 = vrot.lane.b32.xlu0 %v2858, 64
    %v2861 = vpop.permute.xlu0 %2860
    %v2862 = vsel %vm273, %v2861, 0
    %2864 = vmatprep.subr.mxu0 0.0
    %2865 = vmatpush1.msra.mxu0 %v2360
    %2866 = vmatprep.subr.mxu0 0.0
    %2867 = vmatpush1.msra.mxu0 %v2361
    %2868 = vmatprep.subr.mxu0 0.0
    %2869 = vmatpush1.msra.mxu0 %v2362
    %2870 = vmatprep.subr.mxu0 0.0
    %2871 = vmatpush1.msra.mxu0 %v2363
    %2872 = vmatprep.subr.mxu0 0.0
    %2873 = vmatpush1.msra.mxu0 0.0
    %2874 = vmatprep.subr.mxu0 0.0
    %2875 = vmatpush1.msra.mxu0 0.0
    %2876 = vmatprep.subr.mxu0 0.0
    %2877 = vmatpush1.msra.mxu0 0.0
    %2878 = vmatprep.subr.mxu0 0.0
    %2879 = vmatpush1.msra.mxu0 0.0
    %2880 = vmatprep.subr.mxu0 0.0
    %2881 = vmatpush1.msra.mxu0 0.0
    %2882 = vmatprep.subr.mxu0 0.0
    %2883 = vmatpush1.msra.mxu0 0.0
    %2884 = vmatprep.subr.mxu0 0.0
    %2885 = vmatpush1.msra.mxu0 0.0
    %2886 = vmatprep.subr.mxu0 0.0
    %2887 = vmatpush1.msra.mxu0 0.0
    %2888 = vmatprep.subr.mxu0 0.0
    %2889 = vmatpush1.msra.mxu0 0.0
    %2890 = vmatprep.subr.mxu0 0.0
    %2891 = vmatpush1.msra.mxu0 0.0
    %2892 = vmatprep.subr.mxu0 0.0
    %2893 = vmatpush1.msra.mxu0 0.0
    %2894 = vmatprep.subr.mxu0 0.0
    %2895 = vmatpush1.msra.mxu0 0.0
    %2896 = vmatprep.subr.mxu0 0.0
    %2897 = vmatpush1.msra.mxu0 0.0
    %2898 = vmatprep.subr.mxu0 0.0
    %2899 = vmatpush1.msra.mxu0 0.0
    %2900 = vmatprep.subr.mxu0 0.0
    %2901 = vmatpush1.msra.mxu0 0.0
    %2902 = vmatprep.subr.mxu0 0.0
    %2903 = vmatpush1.msra.mxu0 0.0
    %2904 = vmatprep.subr.mxu0 0.0
    %2905 = vmatpush1.msra.mxu0 0.0
    %2906 = vmatprep.subr.mxu0 0.0
    %2907 = vmatpush1.msra.mxu0 0.0
    %2908 = vmatprep.subr.mxu0 0.0
    %2909 = vmatpush1.msra.mxu0 0.0
    %2910 = vmatprep.subr.mxu0 0.0
    %2911 = vmatpush1.msra.mxu0 0.0
    %2912 = vmatprep.subr.mxu0 0.0
    %2913 = vmatpush1.msra.mxu0 0.0
    %2914 = vmatprep.subr.mxu0 0.0
    %2915 = vmatpush1.msra.mxu0 0.0
    %2916 = vmatprep.subr.mxu0 0.0
    %2917 = vmatpush1.msra.mxu0 0.0
    %2918 = vmatprep.subr.mxu0 0.0
    %2919 = vmatpush1.msra.mxu0 0.0
    %2920 = vmatprep.subr.mxu0 0.0
    %2921 = vmatpush1.msra.mxu0 0.0
    %2922 = vmatprep.subr.mxu0 0.0
    %2923 = vmatpush1.msra.mxu0 0.0
    %2924 = vmatprep.subr.mxu0 0.0
    %2925 = vmatpush1.msra.mxu0 0.0
    %2926 = vmatprep.subr.mxu0 0.0
    %2927 = vmatpush1.msra.mxu0 0.0
    %2928 = vmatprep.mubr.f32.mxu0 0.0
    %2929 = vmatmul.mubr.f32.gmra.mrb[0].mxu0 %v2862
    %v2930 = vpop.f32.mrb[0].mxu0
    %v2931 = vadd.f32 0.0, %v2930
    %v2932 = vpop.f32.mrb[0].mxu0
    %2933 = vdwg.mxu0
    %v2934 = vadd.f32 %v2357, %v2931
    %v2935 = vxor.u32 %v2934, 2147483648
    %v2936 = vmul.f32 %v2935, 1.442695
    %v2937 = vpow.pop %v2936
    %v2938 = vadd.f32 %v2937, 1.0
    %v2939 = vrcp.pop %v2938
    %v2940 = vmul.f32 1.0, %v2939
    %v2941 = vtanh.pop %v2934
    %v2942 = vmul.f32 %v2940, %v2852
    %2944 = vrot.lane.b32.xlu0 %v2941, 32
    %v2945 = vpop.permute.xlu0 %2944
    %v2947 = vmul.f32 %v2940, %v2945
    %2949 = vrot.lane.b32.xlu0 %v2947, 32
    %v2950 = vpop.permute.xlu0 %2949
    %v2952 = vadd.f32 %v2942, %v2950
    %v2953 = vtanh.pop %v2952
    %2955 = vrot.lane.b32.xlu0 %v2953, 32
    %v2956 = vpop.permute.xlu0 %2955
    %v2958 = vmul.f32 %v2940, %v2956
    %2960 = vrot.lane.b32.xlu0 %v2958, 64
    %v2961 = vpop.permute.xlu0 %2960
    %v2962 = vsel %vm273, %v2961, 0
    %2964 = vmatprep.subr.mxu0 0.0
    %2965 = vmatpush1.msra.mxu0 %v2360
    %2966 = vmatprep.subr.mxu0 0.0
    %2967 = vmatpush1.msra.mxu0 %v2361
    %2968 = vmatprep.subr.mxu0 0.0
    %2969 = vmatpush1.msra.mxu0 %v2362
    %2970 = vmatprep.subr.mxu0 0.0
    %2971 = vmatpush1.msra.mxu0 %v2363
    %2972 = vmatprep.subr.mxu0 0.0
    %2973 = vmatpush1.msra.mxu0 0.0
    %2974 = vmatprep.subr.mxu0 0.0
    %2975 = vmatpush1.msra.mxu0 0.0
    %2976 = vmatprep.subr.mxu0 0.0
    %2977 = vmatpush1.msra.mxu0 0.0
    %2978 = vmatprep.subr.mxu0 0.0
    %2979 = vmatpush1.msra.mxu0 0.0
    %2980 = vmatprep.subr.mxu0 0.0
    %2981 = vmatpush1.msra.mxu0 0.0
    %2982 = vmatprep.subr.mxu0 0.0
    %2983 = vmatpush1.msra.mxu0 0.0
    %2984 = vmatprep.subr.mxu0 0.0
    %2985 = vmatpush1.msra.mxu0 0.0
    %2986 = vmatprep.subr.mxu0 0.0
    %2987 = vmatpush1.msra.mxu0 0.0
    %2988 = vmatprep.subr.mxu0 0.0
    %2989 = vmatpush1.msra.mxu0 0.0
    %2990 = vmatprep.subr.mxu0 0.0
    %2991 = vmatpush1.msra.mxu0 0.0
    %2992 = vmatprep.subr.mxu0 0.0
    %2993 = vmatpush1.msra.mxu0 0.0
    %2994 = vmatprep.subr.mxu0 0.0
    %2995 = vmatpush1.msra.mxu0 0.0
    %2996 = vmatprep.subr.mxu0 0.0
    %2997 = vmatpush1.msra.mxu0 0.0
    %2998 = vmatprep.subr.mxu0 0.0
    %2999 = vmatpush1.msra.mxu0 0.0
    %3000 = vmatprep.subr.mxu0 0.0
    %3001 = vmatpush1.msra.mxu0 0.0
    %3002 = vmatprep.subr.mxu0 0.0
    %3003 = vmatpush1.msra.mxu0 0.0
    %3004 = vmatprep.subr.mxu0 0.0
    %3005 = vmatpush1.msra.mxu0 0.0
    %3006 = vmatprep.subr.mxu0 0.0
    %3007 = vmatpush1.msra.mxu0 0.0
    %3008 = vmatprep.subr.mxu0 0.0
    %3009 = vmatpush1.msra.mxu0 0.0
    %3010 = vmatprep.subr.mxu0 0.0
    %3011 = vmatpush1.msra.mxu0 0.0
    %3012 = vmatprep.subr.mxu0 0.0
    %3013 = vmatpush1.msra.mxu0 0.0
    %3014 = vmatprep.subr.mxu0 0.0
    %3015 = vmatpush1.msra.mxu0 0.0
    %3016 = vmatprep.subr.mxu0 0.0
    %3017 = vmatpush1.msra.mxu0 0.0
    %3018 = vmatprep.subr.mxu0 0.0
    %3019 = vmatpush1.msra.mxu0 0.0
    %3020 = vmatprep.subr.mxu0 0.0
    %3021 = vmatpush1.msra.mxu0 0.0
    %3022 = vmatprep.subr.mxu0 0.0
    %3023 = vmatpush1.msra.mxu0 0.0
    %3024 = vmatprep.subr.mxu0 0.0
    %3025 = vmatpush1.msra.mxu0 0.0
    %3026 = vmatprep.subr.mxu0 0.0
    %3027 = vmatpush1.msra.mxu0 0.0
    %3028 = vmatprep.mubr.f32.mxu0 0.0
    %3029 = vmatmul.mubr.f32.gmra.mrb[0].mxu0 %v2962
    %v3030 = vpop.f32.mrb[0].mxu0
    %v3031 = vadd.f32 0.0, %v3030
    %v3032 = vpop.f32.mrb[0].mxu0
    %3033 = vdwg.mxu0
    %v3034 = vadd.f32 %v2357, %v3031
    %v3035 = vxor.u32 %v3034, 2147483648
    %v3036 = vmul.f32 %v3035, 1.442695
    %v3037 = vpow.pop %v3036
    %v3038 = vadd.f32 %v3037, 1.0
    %v3039 = vrcp.pop %v3038
    %v3040 = vmul.f32 1.0, %v3039
    %v3041 = vtanh.pop %v3034
    %v3042 = vmul.f32 %v3040, %v2952
    %3044 = vrot.lane.b32.xlu0 %v3041, 32
    %v3045 = vpop.permute.xlu0 %3044
    %v3047 = vmul.f32 %v3040, %v3045
    %3049 = vrot.lane.b32.xlu0 %v3047, 32
    %v3050 = vpop.permute.xlu0 %3049
    %v3052 = vadd.f32 %v3042, %v3050
    %v3053 = vtanh.pop %v3052
    %3055 = vrot.lane.b32.xlu0 %v3053, 32
    %v3056 = vpop.permute.xlu0 %3055
    %v3058 = vmul.f32 %v3040, %v3056
    %3060 = vrot.lane.b32.xlu0 %v3058, 64
    %v3061 = vpop.permute.xlu0 %3060
    %v3062 = vsel %vm273, %v3061, 0
    %3064 = vmatprep.subr.mxu0 0.0
    %3065 = vmatpush1.msra.mxu0 %v2360
    %3066 = vmatprep.subr.mxu0 0.0
    %3067 = vmatpush1.msra.mxu0 %v2361
    %3068 = vmatprep.subr.mxu0 0.0
    %3069 = vmatpush1.msra.mxu0 %v2362
    %3070 = vmatprep.subr.mxu0 0.0
    %3071 = vmatpush1.msra.mxu0 %v2363
    %3072 = vmatprep.subr.mxu0 0.0
    %3073 = vmatpush1.msra.mxu0 0.0
    %3074 = vmatprep.subr.mxu0 0.0
    %3075 = vmatpush1.msra.mxu0 0.0
    %3076 = vmatprep.subr.mxu0 0.0
    %3077 = vmatpush1.msra.mxu0 0.0
    %3078 = vmatprep.subr.mxu0 0.0
    %3079 = vmatpush1.msra.mxu0 0.0
    %3080 = vmatprep.subr.mxu0 0.0
    %3081 = vmatpush1.msra.mxu0 0.0
    %3082 = vmatprep.subr.mxu0 0.0
    %3083 = vmatpush1.msra.mxu0 0.0
    %3084 = vmatprep.subr.mxu0 0.0
    %3085 = vmatpush1.msra.mxu0 0.0
    %3086 = vmatprep.subr.mxu0 0.0
    %3087 = vmatpush1.msra.mxu0 0.0
    %3088 = vmatprep.subr.mxu0 0.0
    %3089 = vmatpush1.msra.mxu0 0.0
    %3090 = vmatprep.subr.mxu0 0.0
    %3091 = vmatpush1.msra.mxu0 0.0
    %3092 = vmatprep.subr.mxu0 0.0
    %3093 = vmatpush1.msra.mxu0 0.0
    %3094 = vmatprep.subr.mxu0 0.0
    %3095 = vmatpush1.msra.mxu0 0.0
    %3096 = vmatprep.subr.mxu0 0.0
    %3097 = vmatpush1.msra.mxu0 0.0
    %3098 = vmatprep.subr.mxu0 0.0
    %3099 = vmatpush1.msra.mxu0 0.0
    %3100 = vmatprep.subr.mxu0 0.0
    %3101 = vmatpush1.msra.mxu0 0.0
    %3102 = vmatprep.subr.mxu0 0.0
    %3103 = vmatpush1.msra.mxu0 0.0
    %3104 = vmatprep.subr.mxu0 0.0
    %3105 = vmatpush1.msra.mxu0 0.0
    %3106 = vmatprep.subr.mxu0 0.0
    %3107 = vmatpush1.msra.mxu0 0.0
    %3108 = vmatprep.subr.mxu0 0.0
    %3109 = vmatpush1.msra.mxu0 0.0
    %3110 = vmatprep.subr.mxu0 0.0
    %3111 = vmatpush1.msra.mxu0 0.0
    %3112 = vmatprep.subr.mxu0 0.0
    %3113 = vmatpush1.msra.mxu0 0.0
    %3114 = vmatprep.subr.mxu0 0.0
    %3115 = vmatpush1.msra.mxu0 0.0
    %3116 = vmatprep.subr.mxu0 0.0
    %3117 = vmatpush1.msra.mxu0 0.0
    %3118 = vmatprep.subr.mxu0 0.0
    %3119 = vmatpush1.msra.mxu0 0.0
    %3120 = vmatprep.subr.mxu0 0.0
    %3121 = vmatpush1.msra.mxu0 0.0
    %3122 = vmatprep.subr.mxu0 0.0
    %3123 = vmatpush1.msra.mxu0 0.0
    %3124 = vmatprep.subr.mxu0 0.0
    %3125 = vmatpush1.msra.mxu0 0.0
    %3126 = vmatprep.subr.mxu0 0.0
    %3127 = vmatpush1.msra.mxu0 0.0
    %3128 = vmatprep.mubr.f32.mxu0 0.0
    %3129 = vmatmul.mubr.f32.gmra.mrb[0].mxu0 %v3062
    %v3130 = vpop.f32.mrb[0].mxu0
    %v3131 = vadd.f32 0.0, %v3130
    %v3132 = vpop.f32.mrb[0].mxu0
    %3133 = vdwg.mxu0
    %v3134 = vadd.f32 %v2357, %v3131
    %v3135 = vxor.u32 %v3134, 2147483648
    %v3136 = vmul.f32 %v3135, 1.442695
    %v3137 = vpow.pop %v3136
    %v3138 = vadd.f32 %v3137, 1.0
    %v3139 = vrcp.pop %v3138
    %v3140 = vmul.f32 1.0, %v3139
    %v3141 = vtanh.pop %v3134
    %v3142 = vmul.f32 %v3140, %v3052
    %3144 = vrot.lane.b32.xlu0 %v3141, 32
    %v3145 = vpop.permute.xlu0 %3144
    %v3147 = vmul.f32 %v3140, %v3145
    %3149 = vrot.lane.b32.xlu0 %v3147, 32
    %v3150 = vpop.permute.xlu0 %3149
    %v3152 = vadd.f32 %v3142, %v3150
    %v3153 = vtanh.pop %v3152
    %3155 = vrot.lane.b32.xlu0 %v3153, 32
    %v3156 = vpop.permute.xlu0 %3155
    %v3158 = vmul.f32 %v3140, %v3156
    %v3159 = vrot.slane %v2558, 6
    %v3161 = vrot.slane %v2658, 4
    %v3163 = vrot.slane %v2758, 2
    %v3165 = vrot.slane %v2958, 6
    %v3167 = vrot.slane %v3058, 4
    %v3170 = vrot.slane %v3158, 2
    %vm3172 = vcmask 1041408
    %v3173 = vsel %vm3172, %v2458, %v3159
    %v3174 = vsel %vm1251, %v3173, %v3161
    %vm3175 = vcmask 1045504
    %v3176 = vsel %vm3175, %v3174, %v3163
    %v3177 = vsel %vm3172, %v2858, %v3165
    %v3178 = vsel %vm1251, %v3177, %v3167
    %v3179 = vsel %vm3175, %v3178, %v3170
    %v3180 = vld [vmem:[%s21] sm:$0xff]
    %v3181 = vld [vmem:[%s21 + $0x8] sm:$0xff]
    %v3182 = vld [vmem:[%s21 + $0x10] sm:$0xff]
    %v3183 = vld [vmem:[%s21 + $0x18] sm:$0xff]
    %v3184 = vld [vmem:[%s22] sm:$0x1]
    %v3186 = vlaneseq
    %v3187 = vshrl.u32 %v3186, 7
    %v3188 = vsub.s32 0, %v3187
    %v3189 = vrot.slane %v3184, %v3188
    %3193 = vrot.lane.b32.xlu0 %v3176, 64
    %v3194 = vpop.permute.xlu0 %3193
    %3195 = vrot.lane.b32.xlu0 %v3179, 64
    %v3196 = vpop.permute.xlu0 %3195
    %v3197 = vsel %vm273, %v3194, 0
    %v3199 = vsel %vm273, %v3196, 0
    %3201 = vmatprep.subr.mxu0 0.0
    %3202 = vmatpush1.msra.mxu0 %v3180
    %3203 = vmatprep.subr.mxu0 0.0
    %3204 = vmatpush1.msra.mxu0 %v3181
    %3205 = vmatprep.subr.mxu0 0.0
    %3206 = vmatpush1.msra.mxu0 %v3182
    %3207 = vmatprep.subr.mxu0 0.0
    %3208 = vmatpush1.msra.mxu0 %v3183
    %3209 = vmatprep.subr.mxu0 0.0
    %3210 = vmatpush1.msra.mxu0 0.0
    %3211 = vmatprep.subr.mxu0 0.0
    %3212 = vmatpush1.msra.mxu0 0.0
    %3213 = vmatprep.subr.mxu0 0.0
    %3214 = vmatpush1.msra.mxu0 0.0
    %3215 = vmatprep.subr.mxu0 0.0
    %3216 = vmatpush1.msra.mxu0 0.0
    %3217 = vmatprep.subr.mxu0 0.0
    %3218 = vmatpush1.msra.mxu0 0.0
    %3219 = vmatprep.subr.mxu0 0.0
    %3220 = vmatpush1.msra.mxu0 0.0
    %3221 = vmatprep.subr.mxu0 0.0
    %3222 = vmatpush1.msra.mxu0 0.0
    %3223 = vmatprep.subr.mxu0 0.0
    %3224 = vmatpush1.msra.mxu0 0.0
    %3225 = vmatprep.subr.mxu0 0.0
    %3226 = vmatpush1.msra.mxu0 0.0
    %3227 = vmatprep.subr.mxu0 0.0
    %3228 = vmatpush1.msra.mxu0 0.0
    %3229 = vmatprep.subr.mxu0 0.0
    %3230 = vmatpush1.msra.mxu0 0.0
    %3231 = vmatprep.subr.mxu0 0.0
    %3232 = vmatpush1.msra.mxu0 0.0
    %3233 = vmatprep.subr.mxu0 0.0
    %3234 = vmatpush1.msra.mxu0 0.0
    %3235 = vmatprep.subr.mxu0 0.0
    %3236 = vmatpush1.msra.mxu0 0.0
    %3237 = vmatprep.subr.mxu0 0.0
    %3238 = vmatpush1.msra.mxu0 0.0
    %3239 = vmatprep.subr.mxu0 0.0
    %3240 = vmatpush1.msra.mxu0 0.0
    %3241 = vmatprep.subr.mxu0 0.0
    %3242 = vmatpush1.msra.mxu0 0.0
    %3243 = vmatprep.subr.mxu0 0.0
    %3244 = vmatpush1.msra.mxu0 0.0
    %3245 = vmatprep.subr.mxu0 0.0
    %3246 = vmatpush1.msra.mxu0 0.0
    %3247 = vmatprep.subr.mxu0 0.0
    %3248 = vmatpush1.msra.mxu0 0.0
    %3249 = vmatprep.subr.mxu0 0.0
    %3250 = vmatpush1.msra.mxu0 0.0
    %3251 = vmatprep.subr.mxu0 0.0
    %3252 = vmatpush1.msra.mxu0 0.0
    %3253 = vmatprep.subr.mxu0 0.0
    %3254 = vmatpush1.msra.mxu0 0.0
    %3255 = vmatprep.subr.mxu0 0.0
    %3256 = vmatpush1.msra.mxu0 0.0
    %3257 = vmatprep.subr.mxu0 0.0
    %3258 = vmatpush1.msra.mxu0 0.0
    %3259 = vmatprep.subr.mxu0 0.0
    %3260 = vmatpush1.msra.mxu0 0.0
    %3261 = vmatprep.subr.mxu0 0.0
    %3262 = vmatpush1.msra.mxu0 0.0
    %3263 = vmatprep.subr.mxu0 0.0
    %3264 = vmatpush1.msra.mxu0 0.0
    %3265 = vmatprep.mubr.f32.mxu0 0.0
    %3266 = vmatmul.mubr.f32.gmra.mrb[0].mxu0 %v3197
    %v3267 = vpop.f32.mrb[0].mxu0
    %v3268 = vadd.f32 %v3189, %v3267
    %v3269 = vpop.f32.mrb[0].mxu0
    %3270 = vmatprep.mubr.f32.mxu0 0.0
    %3271 = vmatmul.mubr.f32.gmra.mrb[0].mxu0 %v3199
    %v3272 = vpop.f32.mrb[0].mxu0
    %v3273 = vadd.f32 %v3189, %v3272
    %v3274 = vpop.f32.mrb[0].mxu0
    %3275 = vdwg.mxu0
    %3276 = vst.msk [vmem:[#allocation2] sm:$0xff] %vm97, %v3268
    %3277 = vst.msk [vmem:[#allocation2 + $0x8] sm:$0xff] %vm97, %v3273
    // Predicated region
    $region94: #{vrae_iaf_with_embedder_forward.1} parent=1 // pred_check
      _
    $region95: #{vrae_iaf_with_embedder_forward.1} parent=1 // pred_check_branch
      %3279 = sbr.rel (0) target = $region97
    $region96: #{vrae_iaf_with_embedder_forward.1} parent=1 // pred_region
      %s3281 = ssub.s32 256, 256
      %3282 = vsyncadd [#allocation3], %s3281
      %s3283 = sshll.u32 [#allocation2], 4
      %s3284 = int_to_ptr.vmem [resolvable:$true] %s3283
      %3289 = dma.vmem_to_hbm [thread:$0]  %s3284, 256, %s23, [#allocation3], 128, 128, 8
    $region97: #{vrae_iaf_with_embedder_forward.1} parent=1 // pred_fallthru
      _
    // Predicated region
    $region98: #{vrae_iaf_with_embedder_forward.1} parent=1 // pred_check
      _
    $region99: #{vrae_iaf_with_embedder_forward.1} parent=1 // pred_check_branch
      %3291 = sbr.rel (0) target = $region101
    $region100: #{vrae_iaf_with_embedder_forward.1} parent=1 // pred_region
      %s3293 = ssub.s32 32, 32
      %3294 = vsyncadd [#allocation5], %s3293
      %s3296 = sshll.u32 [#allocation4], 4
      %s3297 = int_to_ptr.vmem [resolvable:$true] %s3296
      %3299 = dma.vmem_to_hbm [thread:$0]  %s3297, 32, %s24, [#allocation5]
    $region101: #{vrae_iaf_with_embedder_forward.1} parent=1 // pred_fallthru
      _
    // Predicated region
    $region102: #{vrae_iaf_with_embedder_forward.1} parent=1 // pred_check
      _
    $region103: #{vrae_iaf_with_embedder_forward.1} parent=1 // pred_check_branch
      %3301 = sbr.rel (0) target = $region105
    $region104: #{vrae_iaf_with_embedder_forward.1} parent=1 // pred_region
      %s3303 = ssub.s32 16, 16
      %3304 = vsyncadd [#allocation5], %s3303
      %s3306 = sshll.u32 [#allocation6], 4
      %s3307 = int_to_ptr.vmem [resolvable:$true] %s3306
      %3309 = dma.vmem_to_hbm [thread:$0]  %s3307, 16, %s25, [#allocation5]
    $region105: #{vrae_iaf_with_embedder_forward.1} parent=1 // pred_fallthru
      _
    // Predicated region
    $region106: #{vrae_iaf_with_embedder_forward.1} parent=1 // pred_check
      _
    $region107: #{vrae_iaf_with_embedder_forward.1} parent=1 // pred_check_branch
      %3311 = sbr.rel (0) target = $region109
    $region108: #{vrae_iaf_with_embedder_forward.1} parent=1 // pred_region
      %3312 = dma.done [#allocation3], 256
    $region109: #{vrae_iaf_with_embedder_forward.1} parent=1 // pred_fallthru
      _
    // Predicated region
    $region110: #{vrae_iaf_with_embedder_forward.1} parent=1 // pred_check
      _
    $region111: #{vrae_iaf_with_embedder_forward.1} parent=1 // pred_check_branch
      %3314 = sbr.rel (0) target = $region113
    $region112: #{vrae_iaf_with_embedder_forward.1} parent=1 // pred_region
      %3315 = dma.done [#allocation5], 32
    $region113: #{vrae_iaf_with_embedder_forward.1} parent=1 // pred_fallthru
      _
    // Predicated region
    $region114: #{vrae_iaf_with_embedder_forward.1} parent=1 // pred_check
      _
    $region115: #{vrae_iaf_with_embedder_forward.1} parent=1 // pred_check_branch
      %3317 = sbr.rel (0) target = $region117
    $region116: #{vrae_iaf_with_embedder_forward.1} parent=1 // pred_region
      %3318 = dma.done [#allocation5], 16
    $region117: #{vrae_iaf_with_embedder_forward.1} parent=1 // pred_fallthru
      _
    %3319 = vsyncpa [#allocation3], 1
    %3320 = vsyncpa [#allocation5], 1

</llo_original>
